<compile_context>
chip_gen: v7x
topology: tpu7x:2x2x1
jax: 0.10.0
libtpu: 0.0.40
codegen_flags: <defaults>
</compile_context>

<pallas_src>
import jax
import jax.numpy as jnp
from jax.experimental import pallas as pl
from jax.experimental.pallas import tpu as pltpu

NUM_ITERS = 10  # the `for i in range(10)` loop in DPImageModel.forward


# ----------------------------------------------------------------------------
# Bilinear resize expressed as two matmuls per channel:
#     out[n, c] = A @ x[n, c] @ B     A: (Ho, Hi), B: (Wi, Wo)
# align_corners=False semantics.
# ----------------------------------------------------------------------------
def _bilinear_matrix(out_size, in_size):
    i = jnp.arange(out_size, dtype=jnp.float32)
    src = (i + 0.5) * (in_size / out_size) - 0.5
    src = jnp.clip(src, 0.0, in_size - 1)
    lo = jnp.floor(src).astype(jnp.int32)
    hi = jnp.minimum(lo + 1, in_size - 1)
    w_hi = src - lo.astype(jnp.float32)
    w_lo = 1.0 - w_hi
    rows = jnp.arange(out_size)
    m = jnp.zeros((out_size, in_size), jnp.float32)
    m = m.at[rows, lo].add(w_lo)
    m = m.at[rows, hi].add(w_hi)
    return m


# ----------------------------------------------------------------------------
# Fused kernel: resize one row-tile of one image (all channels) on the MXU,
# then run the 10 residual-net iterations on vreg-resident (8, Wo) sub-row
# chunks before the tile leaves VMEM.
# ----------------------------------------------------------------------------
def _fused_kernel(w1_ref, w2_ref, a_ref, bt_ref, x_ref, o_ref):
    # w1_ref: (HIDDEN, C)     SMEM  f32 -- read as scalars (broadcast FMAs)
    # w2_ref: (C, HIDDEN)     SMEM  f32
    # a_ref : (TH, Hi)        VMEM  bf16 -- row-interp tile of (Ho, Hi)
    # bt_ref: (Wi, Wo)        VMEM  bf16 -- column-interp matrix (transposed)
    # x_ref : (1, C, Hi, Wi)  VMEM  bf16 -- full input image
    # o_ref : (1, C, TH, Wo)  VMEM  f32
    hidden, num_c = w1_ref.shape
    th = a_ref.shape[0]

    # ---- Phase 1: bilinear resize, bf16 MXU matmuls, f32 accumulation -------
    a = a_ref[...]                                                   # bf16
    bt = bt_ref[...]                                                 # bf16
    rows = []
    for c in range(num_c):
        t = jnp.dot(a, x_ref[0, c], preferred_element_type=jnp.float32)
        rows.append(t.astype(jnp.bfloat16))                          # (TH, Wi)
    stacked = jnp.concatenate(rows, axis=0)                          # (C*TH, Wi)
    r = jnp.dot(stacked, bt, preferred_element_type=jnp.float32)     # (C*TH, Wo)
    for c in range(num_c):
        o_ref[0, c] = r[c * th:(c + 1) * th]   # stage resized tile in o_ref

    # ---- Phase 2: 10x  x <- x + W2 @ tanh(W1 @ x)  on (CH, Wo) chunks -------
    # Weight scalars read from SMEM exactly once per grid step (hoisted out of
    # both the chunk loop and the unrolled NUM_ITERS loop).
    w1s = [[w1_ref[j, c] for c in range(num_c)] for j in range(hidden)]
    w2s = [[w2_ref[c, j] for j in range(hidden)] for c in range(num_c)]

    ch_rows = 8 if th % 8 == 0 else th          # (8, Wo) chunks stay in vregs
    num_chunks = th // ch_rows

    @pl.loop(0, num_chunks)
    def _(k):
        r0 = pl.multiple_of(k * ch_rows, ch_rows)
        chans = [o_ref[0, c, pl.ds(r0, ch_rows), :] for c in range(num_c)]
        for _it in range(NUM_ITERS):            # fully unrolled
            acc = list(chans)                   # residual accumulators (f32)
            for j in range(hidden):             # streamed hidden units
                hj = w1s[j][0] * chans[0]
                for c in range(1, num_c):
                    hj = hj + w1s[j][c] * chans[c]
                hj = jnp.tanh(hj)               # EUP
                for c in range(num_c):
                    acc[c] = acc[c] + w2s[c][j] * hj
            chans = acc
        for c in range(num_c):
            o_ref[0, c, pl.ds(r0, ch_rows), :] = chans[c]


def _pick_row_tile(ho, n):
    # Largest row tile (multiple of 8) that still leaves >= 2 parallel grid
    # steps counting the batch axis (feeds both v7x TCs / megacore) while
    # keeping per-step VMEM small.
    for t in (256, 128, 64, 32, 16, 8):
        if ho % t == 0 and n * (ho // t) >= 2:
            return t
    return ho


def dp_image_model_forward(x, w1, w2, out_hw):
    """Resize to out_hw, then apply the stand-in net 10x — one fused kernel."""
    n, c, h, w = x.shape
    ho, wo = out_hw
    hidden = w1.shape[0]
    row_tile = _pick_row_tile(ho, n)
    n_row_tiles = ho // row_tile

    # Pre-cast resize matrices and the image to bf16 (halves HBM->VMEM bytes,
    # removes per-grid-step cast passes).  MXU accumulation stays f32.
    a = _bilinear_matrix(ho, h).astype(jnp.bfloat16)       # (Ho, Hi)
    bt = _bilinear_matrix(wo, w).T.astype(jnp.bfloat16)    # (Wi, Wo)
    xb = x.astype(jnp.bfloat16)

    resize_flops = 2 * n * c * ho * (h * w + w * wo)
    iter_flops = 4 * n * NUM_ITERS * c * hidden * ho * wo
    cost = pl.CostEstimate(
        flops=int(resize_flops + iter_flops),
        transcendentals=int(n * NUM_ITERS * hidden * ho * wo),
        bytes_accessed=int(
            n * n_row_tiles * (c * h * w * 2 + w * wo * 2)   # x + Bt per step
            + n * ho * h * 2                                  # A tiles
            + n * c * ho * wo * 4),                           # output
    )

    out = pl.pallas_call(
        _fused_kernel,
        out_shape=jax.ShapeDtypeStruct((n, c, ho, wo), jnp.float32),
        grid=(n, n_row_tiles),
        in_specs=[
            pl.BlockSpec(memory_space=pltpu.MemorySpace.SMEM),         # w1
            pl.BlockSpec(memory_space=pltpu.MemorySpace.SMEM),         # w2
            pl.BlockSpec((row_tile, h), lambda i, t: (t, 0)),          # A tile
            pl.BlockSpec((w, wo), lambda i, t: (0, 0)),                # Bt
            pl.BlockSpec((1, c, h, w), lambda i, t: (i, 0, 0, 0)),     # image
        ],
        out_specs=pl.BlockSpec((1, c, row_tile, wo),
                               lambda i, t: (i, 0, t, 0)),
        compiler_params=pltpu.CompilerParams(
            dimension_semantics=("parallel", "parallel"),
            vmem_limit_bytes=64 * 1024 * 1024),
        cost_estimate=cost,
    )(w1, w2, a, bt, xb)
    return out


# ----------------------------------------------------------------------------
# Pure-JAX reference (mirrors the kernel's bf16 resize numerics) for a sanity
# check of the fused Pallas kernel.
# ----------------------------------------------------------------------------
def _reference(x, w1, w2, out_hw):
    n, c, h, w = x.shape
    ho, wo = out_hw
    a = _bilinear_matrix(ho, h).astype(jnp.bfloat16)
    bt = _bilinear_matrix(wo, w).T.astype(jnp.bfloat16)
    xb = x.astype(jnp.bfloat16)
    t = jnp.einsum("oh,nchw->ncow", a, xb, preferred_element_type=jnp.float32)
    r = jnp.einsum("ncow,wq->ncoq", t.astype(jnp.bfloat16), bt,
                   preferred_element_type=jnp.float32)
    flat = r.reshape(n, c, ho * wo)
    for _ in range(NUM_ITERS):
        hmid = jnp.tanh(jnp.einsum("jc,ncp->njp", w1, flat))
        flat = flat + jnp.einsum("cj,njp->ncp", w2, hmid)
    return flat.reshape(n, c, ho, wo)


if __name__ == "__main__":
    key = jax.random.PRNGKey(0)
    k_x, k_w1, k_w2 = jax.random.split(key, 3)

    # Small shapes consistent with the forward: NCHW image input.
    N, C, H, W = 2, 4, 16, 16
    OUT_HW = (32, 32)      # small-scale analog of the (256, 256) Resize target
    HIDDEN = 8

    x = jax.random.normal(k_x, (N, C, H, W), dtype=jnp.float32)
    # Deterministic synthetic parameters (small so 10 iterations stay tame).
    w1 = 0.1 * jax.random.normal(k_w1, (HIDDEN, C), dtype=jnp.float32)
    w2 = 0.1 * jax.random.normal(k_w2, (C, HIDDEN), dtype=jnp.float32)

    y = dp_image_model_forward(x, w1, w2, OUT_HW)
    jax.block_until_ready(y)
    assert y.shape == (N, C, OUT_HW[0], OUT_HW[1])

    y_ref = _reference(x, w1, w2, OUT_HW)
    err = float(jnp.max(jnp.abs(y - y_ref)))
    assert err < 1e-2, f"max abs err {err}"
    print("KERNEL_OK")
</pallas_src>

<mosaic_0001>
module attributes {stable_mosaic.version = 11 : i64} {
  func.func @_fused_kernel(%arg0: i32, %arg1: i32, %arg2: memref<8x4xf32, #tpu.memory_space<smem>>, %arg3: memref<4x8xf32, #tpu.memory_space<smem>>, %arg4: memref<32x16xbf16, #tpu.memory_space<vmem>>, %arg5: memref<16x32xbf16, #tpu.memory_space<vmem>>, %arg6: memref<1x4x16x16xbf16, #tpu.memory_space<vmem>>, %arg7: memref<1x4x32x32xf32, #tpu.memory_space<vmem>>) attributes {dimension_semantics = [#tpu.dimension_semantics<parallel>, #tpu.dimension_semantics<parallel>], iteration_bounds = array<i64: 2, 1>, scalar_prefetch = 0 : i64, scratch_operands = 0 : i64, tpu.core_type = #tpu.core_type<tc>, window_params = [{transform_indices = @transform_0, window_bounds = array<i64: 8, 4>}, {transform_indices = @transform_1, window_bounds = array<i64: 4, 8>}, {transform_indices = @transform_2, window_bounds = array<i64: 32, 16>}, {pipeline_mode = #tpu.pipeline_mode<synchronous>, transform_indices = @transform_3, window_bounds = array<i64: 16, 32>}, {transform_indices = @transform_4, window_bounds = array<i64: 1, 4, 16, 16>}, {transform_indices = @transform_5, window_bounds = array<i64: 1, 4, 32, 32>}]} {
    %c0 = arith.constant 0 : index
    %c0_0 = arith.constant 0 : index
    %0 = vector.load %arg4[%c0, %c0_0] : memref<32x16xbf16, #tpu.memory_space<vmem>>, vector<32x16xbf16>
    %c0_1 = arith.constant 0 : index
    %c0_2 = arith.constant 0 : index
    %1 = vector.load %arg5[%c0_1, %c0_2] : memref<16x32xbf16, #tpu.memory_space<vmem>>, vector<16x32xbf16>
    %c0_3 = arith.constant 0 : index
    %c0_4 = arith.constant 0 : index
    %c0_5 = arith.constant 0 : index
    %c0_6 = arith.constant 0 : index
    %2 = vector.load %arg6[%c0_3, %c0_4, %c0_5, %c0_6] : memref<1x4x16x16xbf16, #tpu.memory_space<vmem>>, vector<1x1x16x16xbf16>
    %3 = vector.shape_cast %2 : vector<1x1x16x16xbf16> to vector<16x16xbf16>
    %cst = arith.constant dense<0.000000e+00> : vector<32x16xf32>
    %4 = tpu.matmul %0, %3, %cst {dimension_numbers = #tpu.dot_dimension_numbers<[1], [0], [0], [1], [0, 0, 1, 1], [], []>} : vector<32x16xbf16>, vector<16x16xbf16>, vector<32x16xf32> -> vector<32x16xf32>
    %5 = arith.truncf %4 : vector<32x16xf32> to vector<32x16xbf16>
    %c0_7 = arith.constant 0 : index
    %c1 = arith.constant 1 : index
    %c0_8 = arith.constant 0 : index
    %c0_9 = arith.constant 0 : index
    %6 = vector.load %arg6[%c0_7, %c1, %c0_8, %c0_9] : memref<1x4x16x16xbf16, #tpu.memory_space<vmem>>, vector<1x1x16x16xbf16>
    %7 = vector.shape_cast %6 : vector<1x1x16x16xbf16> to vector<16x16xbf16>
    %cst_10 = arith.constant dense<0.000000e+00> : vector<32x16xf32>
    %8 = tpu.matmul %0, %7, %cst_10 {dimension_numbers = #tpu.dot_dimension_numbers<[1], [0], [0], [1], [0, 0, 1, 1], [], []>} : vector<32x16xbf16>, vector<16x16xbf16>, vector<32x16xf32> -> vector<32x16xf32>
    %9 = arith.truncf %8 : vector<32x16xf32> to vector<32x16xbf16>
    %c0_11 = arith.constant 0 : index
    %c2 = arith.constant 2 : index
    %c0_12 = arith.constant 0 : index
    %c0_13 = arith.constant 0 : index
    %10 = vector.load %arg6[%c0_11, %c2, %c0_12, %c0_13] : memref<1x4x16x16xbf16, #tpu.memory_space<vmem>>, vector<1x1x16x16xbf16>
    %11 = vector.shape_cast %10 : vector<1x1x16x16xbf16> to vector<16x16xbf16>
    %cst_14 = arith.constant dense<0.000000e+00> : vector<32x16xf32>
    %12 = tpu.matmul %0, %11, %cst_14 {dimension_numbers = #tpu.dot_dimension_numbers<[1], [0], [0], [1], [0, 0, 1, 1], [], []>} : vector<32x16xbf16>, vector<16x16xbf16>, vector<32x16xf32> -> vector<32x16xf32>
    %13 = arith.truncf %12 : vector<32x16xf32> to vector<32x16xbf16>
    %c0_15 = arith.constant 0 : index
    %c3 = arith.constant 3 : index
    %c0_16 = arith.constant 0 : index
    %c0_17 = arith.constant 0 : index
    %14 = vector.load %arg6[%c0_15, %c3, %c0_16, %c0_17] : memref<1x4x16x16xbf16, #tpu.memory_space<vmem>>, vector<1x1x16x16xbf16>
    %15 = vector.shape_cast %14 : vector<1x1x16x16xbf16> to vector<16x16xbf16>
    %cst_18 = arith.constant dense<0.000000e+00> : vector<32x16xf32>
    %16 = tpu.matmul %0, %15, %cst_18 {dimension_numbers = #tpu.dot_dimension_numbers<[1], [0], [0], [1], [0, 0, 1, 1], [], []>} : vector<32x16xbf16>, vector<16x16xbf16>, vector<32x16xf32> -> vector<32x16xf32>
    %17 = arith.truncf %16 : vector<32x16xf32> to vector<32x16xbf16>
    %18 = tpu.concatenate %5, %9, %13, %17 in 0 : vector<32x16xbf16>, vector<32x16xbf16>, vector<32x16xbf16>, vector<32x16xbf16> -> vector<128x16xbf16>
    %cst_19 = arith.constant dense<0.000000e+00> : vector<128x32xf32>
    %19 = tpu.matmul %18, %1, %cst_19 {dimension_numbers = #tpu.dot_dimension_numbers<[1], [0], [0], [1], [0, 0, 1, 1], [], []>} : vector<128x16xbf16>, vector<16x32xbf16>, vector<128x32xf32> -> vector<128x32xf32>
    %20 = vector.extract_strided_slice %19 {offsets = [0, 0], sizes = [32, 32], strides = [1, 1]} : vector<128x32xf32> to vector<32x32xf32>
    %c0_20 = arith.constant 0 : index
    %c0_21 = arith.constant 0 : index
    %c0_22 = arith.constant 0 : index
    %c0_23 = arith.constant 0 : index
    %21 = vector.load %arg7[%c0_20, %c0_21, %c0_22, %c0_23] : memref<1x4x32x32xf32, #tpu.memory_space<vmem>>, vector<1x1x32x32xf32>
    %22 = vector.shape_cast %21 : vector<1x1x32x32xf32> to vector<32x32xf32>
    %23 = vector.shape_cast %20 : vector<32x32xf32> to vector<1x1x32x32xf32>
    tpu.vector_store %arg7[%c0_20, %c0_21, %c0_22, %c0_23], %23 {strides = array<i32>} : memref<1x4x32x32xf32, #tpu.memory_space<vmem>>, vector<1x1x32x32xf32>,
    %24 = vector.extract_strided_slice %19 {offsets = [32, 0], sizes = [32, 32], strides = [1, 1]} : vector<128x32xf32> to vector<32x32xf32>
    %c0_24 = arith.constant 0 : index
    %c1_25 = arith.constant 1 : index
    %c0_26 = arith.constant 0 : index
    %c0_27 = arith.constant 0 : index
    %25 = vector.load %arg7[%c0_24, %c1_25, %c0_26, %c0_27] : memref<1x4x32x32xf32, #tpu.memory_space<vmem>>, vector<1x1x32x32xf32>
    %26 = vector.shape_cast %25 : vector<1x1x32x32xf32> to vector<32x32xf32>
    %27 = vector.shape_cast %24 : vector<32x32xf32> to vector<1x1x32x32xf32>
    tpu.vector_store %arg7[%c0_24, %c1_25, %c0_26, %c0_27], %27 {strides = array<i32>} : memref<1x4x32x32xf32, #tpu.memory_space<vmem>>, vector<1x1x32x32xf32>,
    %28 = vector.extract_strided_slice %19 {offsets = [64, 0], sizes = [32, 32], strides = [1, 1]} : vector<128x32xf32> to vector<32x32xf32>
    %c0_28 = arith.constant 0 : index
    %c2_29 = arith.constant 2 : index
    %c0_30 = arith.constant 0 : index
    %c0_31 = arith.constant 0 : index
    %29 = vector.load %arg7[%c0_28, %c2_29, %c0_30, %c0_31] : memref<1x4x32x32xf32, #tpu.memory_space<vmem>>, vector<1x1x32x32xf32>
    %30 = vector.shape_cast %29 : vector<1x1x32x32xf32> to vector<32x32xf32>
    %31 = vector.shape_cast %28 : vector<32x32xf32> to vector<1x1x32x32xf32>
    tpu.vector_store %arg7[%c0_28, %c2_29, %c0_30, %c0_31], %31 {strides = array<i32>} : memref<1x4x32x32xf32, #tpu.memory_space<vmem>>, vector<1x1x32x32xf32>,
    %32 = vector.extract_strided_slice %19 {offsets = [96, 0], sizes = [32, 32], strides = [1, 1]} : vector<128x32xf32> to vector<32x32xf32>
    %c0_32 = arith.constant 0 : index
    %c3_33 = arith.constant 3 : index
    %c0_34 = arith.constant 0 : index
    %c0_35 = arith.constant 0 : index
    %33 = vector.load %arg7[%c0_32, %c3_33, %c0_34, %c0_35] : memref<1x4x32x32xf32, #tpu.memory_space<vmem>>, vector<1x1x32x32xf32>
    %34 = vector.shape_cast %33 : vector<1x1x32x32xf32> to vector<32x32xf32>
    %35 = vector.shape_cast %32 : vector<32x32xf32> to vector<1x1x32x32xf32>
    tpu.vector_store %arg7[%c0_32, %c3_33, %c0_34, %c0_35], %35 {strides = array<i32>} : memref<1x4x32x32xf32, #tpu.memory_space<vmem>>, vector<1x1x32x32xf32>,
    %c0_36 = arith.constant 0 : index
    %c0_37 = arith.constant 0 : index
    %36 = memref.load %arg2[%c0_36, %c0_37] : memref<8x4xf32, #tpu.memory_space<smem>>
    %c0_38 = arith.constant 0 : index
    %c1_39 = arith.constant 1 : index
    %37 = memref.load %arg2[%c0_38, %c1_39] : memref<8x4xf32, #tpu.memory_space<smem>>
    %c0_40 = arith.constant 0 : index
    %c2_41 = arith.constant 2 : index
    %38 = memref.load %arg2[%c0_40, %c2_41] : memref<8x4xf32, #tpu.memory_space<smem>>
    %c0_42 = arith.constant 0 : index
    %c3_43 = arith.constant 3 : index
    %39 = memref.load %arg2[%c0_42, %c3_43] : memref<8x4xf32, #tpu.memory_space<smem>>
    %c1_44 = arith.constant 1 : index
    %c0_45 = arith.constant 0 : index
    %40 = memref.load %arg2[%c1_44, %c0_45] : memref<8x4xf32, #tpu.memory_space<smem>>
    %c1_46 = arith.constant 1 : index
    %c1_47 = arith.constant 1 : index
    %41 = memref.load %arg2[%c1_46, %c1_47] : memref<8x4xf32, #tpu.memory_space<smem>>
    %c1_48 = arith.constant 1 : index
    %c2_49 = arith.constant 2 : index
    %42 = memref.load %arg2[%c1_48, %c2_49] : memref<8x4xf32, #tpu.memory_space<smem>>
    %c1_50 = arith.constant 1 : index
    %c3_51 = arith.constant 3 : index
    %43 = memref.load %arg2[%c1_50, %c3_51] : memref<8x4xf32, #tpu.memory_space<smem>>
    %c2_52 = arith.constant 2 : index
    %c0_53 = arith.constant 0 : index
    %44 = memref.load %arg2[%c2_52, %c0_53] : memref<8x4xf32, #tpu.memory_space<smem>>
    %c2_54 = arith.constant 2 : index
    %c1_55 = arith.constant 1 : index
    %45 = memref.load %arg2[%c2_54, %c1_55] : memref<8x4xf32, #tpu.memory_space<smem>>
    %c2_56 = arith.constant 2 : index
    %c2_57 = arith.constant 2 : index
    %46 = memref.load %arg2[%c2_56, %c2_57] : memref<8x4xf32, #tpu.memory_space<smem>>
    %c2_58 = arith.constant 2 : index
    %c3_59 = arith.constant 3 : index
    %47 = memref.load %arg2[%c2_58, %c3_59] : memref<8x4xf32, #tpu.memory_space<smem>>
    %c3_60 = arith.constant 3 : index
    %c0_61 = arith.constant 0 : index
    %48 = memref.load %arg2[%c3_60, %c0_61] : memref<8x4xf32, #tpu.memory_space<smem>>
    %c3_62 = arith.constant 3 : index
    %c1_63 = arith.constant 1 : index
    %49 = memref.load %arg2[%c3_62, %c1_63] : memref<8x4xf32, #tpu.memory_space<smem>>
    %c3_64 = arith.constant 3 : index
    %c2_65 = arith.constant 2 : index
    %50 = memref.load %arg2[%c3_64, %c2_65] : memref<8x4xf32, #tpu.memory_space<smem>>
    %c3_66 = arith.constant 3 : index
    %c3_67 = arith.constant 3 : index
    %51 = memref.load %arg2[%c3_66, %c3_67] : memref<8x4xf32, #tpu.memory_space<smem>>
    %c4 = arith.constant 4 : index
    %c0_68 = arith.constant 0 : index
    %52 = memref.load %arg2[%c4, %c0_68] : memref<8x4xf32, #tpu.memory_space<smem>>
    %c4_69 = arith.constant 4 : index
    %c1_70 = arith.constant 1 : index
    %53 = memref.load %arg2[%c4_69, %c1_70] : memref<8x4xf32, #tpu.memory_space<smem>>
    %c4_71 = arith.constant 4 : index
    %c2_72 = arith.constant 2 : index
    %54 = memref.load %arg2[%c4_71, %c2_72] : memref<8x4xf32, #tpu.memory_space<smem>>
    %c4_73 = arith.constant 4 : index
    %c3_74 = arith.constant 3 : index
    %55 = memref.load %arg2[%c4_73, %c3_74] : memref<8x4xf32, #tpu.memory_space<smem>>
    %c5 = arith.constant 5 : index
    %c0_75 = arith.constant 0 : index
    %56 = memref.load %arg2[%c5, %c0_75] : memref<8x4xf32, #tpu.memory_space<smem>>
    %c5_76 = arith.constant 5 : index
    %c1_77 = arith.constant 1 : index
    %57 = memref.load %arg2[%c5_76, %c1_77] : memref<8x4xf32, #tpu.memory_space<smem>>
    %c5_78 = arith.constant 5 : index
    %c2_79 = arith.constant 2 : index
    %58 = memref.load %arg2[%c5_78, %c2_79] : memref<8x4xf32, #tpu.memory_space<smem>>
    %c5_80 = arith.constant 5 : index
    %c3_81 = arith.constant 3 : index
    %59 = memref.load %arg2[%c5_80, %c3_81] : memref<8x4xf32, #tpu.memory_space<smem>>
    %c6 = arith.constant 6 : index
    %c0_82 = arith.constant 0 : index
    %60 = memref.load %arg2[%c6, %c0_82] : memref<8x4xf32, #tpu.memory_space<smem>>
    %c6_83 = arith.constant 6 : index
    %c1_84 = arith.constant 1 : index
    %61 = memref.load %arg2[%c6_83, %c1_84] : memref<8x4xf32, #tpu.memory_space<smem>>
    %c6_85 = arith.constant 6 : index
    %c2_86 = arith.constant 2 : index
    %62 = memref.load %arg2[%c6_85, %c2_86] : memref<8x4xf32, #tpu.memory_space<smem>>
    %c6_87 = arith.constant 6 : index
    %c3_88 = arith.constant 3 : index
    %63 = memref.load %arg2[%c6_87, %c3_88] : memref<8x4xf32, #tpu.memory_space<smem>>
    %c7 = arith.constant 7 : index
    %c0_89 = arith.constant 0 : index
    %64 = memref.load %arg2[%c7, %c0_89] : memref<8x4xf32, #tpu.memory_space<smem>>
    %c7_90 = arith.constant 7 : index
    %c1_91 = arith.constant 1 : index
    %65 = memref.load %arg2[%c7_90, %c1_91] : memref<8x4xf32, #tpu.memory_space<smem>>
    %c7_92 = arith.constant 7 : index
    %c2_93 = arith.constant 2 : index
    %66 = memref.load %arg2[%c7_92, %c2_93] : memref<8x4xf32, #tpu.memory_space<smem>>
    %c7_94 = arith.constant 7 : index
    %c3_95 = arith.constant 3 : index
    %67 = memref.load %arg2[%c7_94, %c3_95] : memref<8x4xf32, #tpu.memory_space<smem>>
    %c0_96 = arith.constant 0 : index
    %c0_97 = arith.constant 0 : index
    %68 = memref.load %arg3[%c0_96, %c0_97] : memref<4x8xf32, #tpu.memory_space<smem>>
    %c0_98 = arith.constant 0 : index
    %c1_99 = arith.constant 1 : index
    %69 = memref.load %arg3[%c0_98, %c1_99] : memref<4x8xf32, #tpu.memory_space<smem>>
    %c0_100 = arith.constant 0 : index
    %c2_101 = arith.constant 2 : index
    %70 = memref.load %arg3[%c0_100, %c2_101] : memref<4x8xf32, #tpu.memory_space<smem>>
    %c0_102 = arith.constant 0 : index
    %c3_103 = arith.constant 3 : index
    %71 = memref.load %arg3[%c0_102, %c3_103] : memref<4x8xf32, #tpu.memory_space<smem>>
    %c0_104 = arith.constant 0 : index
    %c4_105 = arith.constant 4 : index
    %72 = memref.load %arg3[%c0_104, %c4_105] : memref<4x8xf32, #tpu.memory_space<smem>>
    %c0_106 = arith.constant 0 : index
    %c5_107 = arith.constant 5 : index
    %73 = memref.load %arg3[%c0_106, %c5_107] : memref<4x8xf32, #tpu.memory_space<smem>>
    %c0_108 = arith.constant 0 : index
    %c6_109 = arith.constant 6 : index
    %74 = memref.load %arg3[%c0_108, %c6_109] : memref<4x8xf32, #tpu.memory_space<smem>>
    %c0_110 = arith.constant 0 : index
    %c7_111 = arith.constant 7 : index
    %75 = memref.load %arg3[%c0_110, %c7_111] : memref<4x8xf32, #tpu.memory_space<smem>>
    %c1_112 = arith.constant 1 : index
    %c0_113 = arith.constant 0 : index
    %76 = memref.load %arg3[%c1_112, %c0_113] : memref<4x8xf32, #tpu.memory_space<smem>>
    %c1_114 = arith.constant 1 : index
    %c1_115 = arith.constant 1 : index
    %77 = memref.load %arg3[%c1_114, %c1_115] : memref<4x8xf32, #tpu.memory_space<smem>>
    %c1_116 = arith.constant 1 : index
    %c2_117 = arith.constant 2 : index
    %78 = memref.load %arg3[%c1_116, %c2_117] : memref<4x8xf32, #tpu.memory_space<smem>>
    %c1_118 = arith.constant 1 : index
    %c3_119 = arith.constant 3 : index
    %79 = memref.load %arg3[%c1_118, %c3_119] : memref<4x8xf32, #tpu.memory_space<smem>>
    %c1_120 = arith.constant 1 : index
    %c4_121 = arith.constant 4 : index
    %80 = memref.load %arg3[%c1_120, %c4_121] : memref<4x8xf32, #tpu.memory_space<smem>>
    %c1_122 = arith.constant 1 : index
    %c5_123 = arith.constant 5 : index
    %81 = memref.load %arg3[%c1_122, %c5_123] : memref<4x8xf32, #tpu.memory_space<smem>>
    %c1_124 = arith.constant 1 : index
    %c6_125 = arith.constant 6 : index
    %82 = memref.load %arg3[%c1_124, %c6_125] : memref<4x8xf32, #tpu.memory_space<smem>>
    %c1_126 = arith.constant 1 : index
    %c7_127 = arith.constant 7 : index
    %83 = memref.load %arg3[%c1_126, %c7_127] : memref<4x8xf32, #tpu.memory_space<smem>>
    %c2_128 = arith.constant 2 : index
    %c0_129 = arith.constant 0 : index
    %84 = memref.load %arg3[%c2_128, %c0_129] : memref<4x8xf32, #tpu.memory_space<smem>>
    %c2_130 = arith.constant 2 : index
    %c1_131 = arith.constant 1 : index
    %85 = memref.load %arg3[%c2_130, %c1_131] : memref<4x8xf32, #tpu.memory_space<smem>>
    %c2_132 = arith.constant 2 : index
    %c2_133 = arith.constant 2 : index
    %86 = memref.load %arg3[%c2_132, %c2_133] : memref<4x8xf32, #tpu.memory_space<smem>>
    %c2_134 = arith.constant 2 : index
    %c3_135 = arith.constant 3 : index
    %87 = memref.load %arg3[%c2_134, %c3_135] : memref<4x8xf32, #tpu.memory_space<smem>>
    %c2_136 = arith.constant 2 : index
    %c4_137 = arith.constant 4 : index
    %88 = memref.load %arg3[%c2_136, %c4_137] : memref<4x8xf32, #tpu.memory_space<smem>>
    %c2_138 = arith.constant 2 : index
    %c5_139 = arith.constant 5 : index
    %89 = memref.load %arg3[%c2_138, %c5_139] : memref<4x8xf32, #tpu.memory_space<smem>>
    %c2_140 = arith.constant 2 : index
    %c6_141 = arith.constant 6 : index
    %90 = memref.load %arg3[%c2_140, %c6_141] : memref<4x8xf32, #tpu.memory_space<smem>>
    %c2_142 = arith.constant 2 : index
    %c7_143 = arith.constant 7 : index
    %91 = memref.load %arg3[%c2_142, %c7_143] : memref<4x8xf32, #tpu.memory_space<smem>>
    %c3_144 = arith.constant 3 : index
    %c0_145 = arith.constant 0 : index
    %92 = memref.load %arg3[%c3_144, %c0_145] : memref<4x8xf32, #tpu.memory_space<smem>>
    %c3_146 = arith.constant 3 : index
    %c1_147 = arith.constant 1 : index
    %93 = memref.load %arg3[%c3_146, %c1_147] : memref<4x8xf32, #tpu.memory_space<smem>>
    %c3_148 = arith.constant 3 : index
    %c2_149 = arith.constant 2 : index
    %94 = memref.load %arg3[%c3_148, %c2_149] : memref<4x8xf32, #tpu.memory_space<smem>>
    %c3_150 = arith.constant 3 : index
    %c3_151 = arith.constant 3 : index
    %95 = memref.load %arg3[%c3_150, %c3_151] : memref<4x8xf32, #tpu.memory_space<smem>>
    %c3_152 = arith.constant 3 : index
    %c4_153 = arith.constant 4 : index
    %96 = memref.load %arg3[%c3_152, %c4_153] : memref<4x8xf32, #tpu.memory_space<smem>>
    %c3_154 = arith.constant 3 : index
    %c5_155 = arith.constant 5 : index
    %97 = memref.load %arg3[%c3_154, %c5_155] : memref<4x8xf32, #tpu.memory_space<smem>>
    %c3_156 = arith.constant 3 : index
    %c6_157 = arith.constant 6 : index
    %98 = memref.load %arg3[%c3_156, %c6_157] : memref<4x8xf32, #tpu.memory_space<smem>>
    %c3_158 = arith.constant 3 : index
    %c7_159 = arith.constant 7 : index
    %99 = memref.load %arg3[%c3_158, %c7_159] : memref<4x8xf32, #tpu.memory_space<smem>>
    %c0_i32 = arith.constant 0 : i32
    %c4_i32 = arith.constant 4 : i32
    %100 = arith.addi %c0_i32, %c4_i32 : i32
    %c1_i32 = arith.constant 1 : i32
    scf.for %arg8 = %c0_i32 to %100 step %c1_i32  : i32 {
      %c1_i32_161 = arith.constant 1 : i32
      %101 = arith.muli %arg8, %c1_i32_161 : i32
      %c0_i32_162 = arith.constant 0 : i32
      %102 = arith.addi %c0_i32_162, %101 : i32
      %c8_i32 = arith.constant 8 : i32
      %103 = arith.muli %102, %c8_i32 : i32
      %104 = tpu.assume_multiple %103, 8 : i32
      %c0_163 = arith.constant 0 : index
      %c0_164 = arith.constant 0 : index
      %105 = arith.index_cast %104 : i32 to index
      %c0_165 = arith.constant 0 : index
      %106 = vector.load %arg7[%c0_163, %c0_164, %105, %c0_165] : memref<1x4x32x32xf32, #tpu.memory_space<vmem>>, vector<1x1x8x32xf32>
      %107 = vector.shape_cast %106 : vector<1x1x8x32xf32> to vector<8x32xf32>
      %c0_166 = arith.constant 0 : index
      %c1_167 = arith.constant 1 : index
      %108 = arith.index_cast %104 : i32 to index
      %c0_168 = arith.constant 0 : index
      %109 = vector.load %arg7[%c0_166, %c1_167, %108, %c0_168] : memref<1x4x32x32xf32, #tpu.memory_space<vmem>>, vector<1x1x8x32xf32>
      %110 = vector.shape_cast %109 : vector<1x1x8x32xf32> to vector<8x32xf32>
      %c0_169 = arith.constant 0 : index
      %c2_170 = arith.constant 2 : index
      %111 = arith.index_cast %104 : i32 to index
      %c0_171 = arith.constant 0 : index
      %112 = vector.load %arg7[%c0_169, %c2_170, %111, %c0_171] : memref<1x4x32x32xf32, #tpu.memory_space<vmem>>, vector<1x1x8x32xf32>
      %113 = vector.shape_cast %112 : vector<1x1x8x32xf32> to vector<8x32xf32>
      %c0_172 = arith.constant 0 : index
      %c3_173 = arith.constant 3 : index
      %114 = arith.index_cast %104 : i32 to index
      %c0_174 = arith.constant 0 : index
      %115 = vector.load %arg7[%c0_172, %c3_173, %114, %c0_174] : memref<1x4x32x32xf32, #tpu.memory_space<vmem>>, vector<1x1x8x32xf32>
      %116 = vector.shape_cast %115 : vector<1x1x8x32xf32> to vector<8x32xf32>
      %117 = vector.broadcast %36 : f32 to vector<8x32xf32>
      %118 = arith.mulf %117, %107 : vector<8x32xf32>
      %119 = vector.broadcast %37 : f32 to vector<8x32xf32>
      %120 = arith.mulf %119, %110 : vector<8x32xf32>
      %121 = arith.addf %118, %120 : vector<8x32xf32>
      %122 = vector.broadcast %38 : f32 to vector<8x32xf32>
      %123 = arith.mulf %122, %113 : vector<8x32xf32>
      %124 = arith.addf %121, %123 : vector<8x32xf32>
      %125 = vector.broadcast %39 : f32 to vector<8x32xf32>
      %126 = arith.mulf %125, %116 : vector<8x32xf32>
      %127 = arith.addf %124, %126 : vector<8x32xf32>
      %128 = math.tanh %127 : vector<8x32xf32>
      %129 = vector.broadcast %68 : f32 to vector<8x32xf32>
      %130 = arith.mulf %129, %128 : vector<8x32xf32>
      %131 = arith.addf %107, %130 : vector<8x32xf32>
      %132 = vector.broadcast %76 : f32 to vector<8x32xf32>
      %133 = arith.mulf %132, %128 : vector<8x32xf32>
      %134 = arith.addf %110, %133 : vector<8x32xf32>
      %135 = vector.broadcast %84 : f32 to vector<8x32xf32>
      %136 = arith.mulf %135, %128 : vector<8x32xf32>
      %137 = arith.addf %113, %136 : vector<8x32xf32>
      %138 = vector.broadcast %92 : f32 to vector<8x32xf32>
      %139 = arith.mulf %138, %128 : vector<8x32xf32>
      %140 = arith.addf %116, %139 : vector<8x32xf32>
      %141 = vector.broadcast %40 : f32 to vector<8x32xf32>
      %142 = arith.mulf %141, %107 : vector<8x32xf32>
      %143 = vector.broadcast %41 : f32 to vector<8x32xf32>
      %144 = arith.mulf %143, %110 : vector<8x32xf32>
      %145 = arith.addf %142, %144 : vector<8x32xf32>
      %146 = vector.broadcast %42 : f32 to vector<8x32xf32>
      %147 = arith.mulf %146, %113 : vector<8x32xf32>
      %148 = arith.addf %145, %147 : vector<8x32xf32>
      %149 = vector.broadcast %43 : f32 to vector<8x32xf32>
      %150 = arith.mulf %149, %116 : vector<8x32xf32>
      %151 = arith.addf %148, %150 : vector<8x32xf32>
      %152 = math.tanh %151 : vector<8x32xf32>
      %153 = vector.broadcast %69 : f32 to vector<8x32xf32>
      %154 = arith.mulf %153, %152 : vector<8x32xf32>
      %155 = arith.addf %131, %154 : vector<8x32xf32>
      %156 = vector.broadcast %77 : f32 to vector<8x32xf32>
      %157 = arith.mulf %156, %152 : vector<8x32xf32>
      %158 = arith.addf %134, %157 : vector<8x32xf32>
      %159 = vector.broadcast %85 : f32 to vector<8x32xf32>
      %160 = arith.mulf %159, %152 : vector<8x32xf32>
      %161 = arith.addf %137, %160 : vector<8x32xf32>
      %162 = vector.broadcast %93 : f32 to vector<8x32xf32>
      %163 = arith.mulf %162, %152 : vector<8x32xf32>
      %164 = arith.addf %140, %163 : vector<8x32xf32>
      %165 = vector.broadcast %44 : f32 to vector<8x32xf32>
      %166 = arith.mulf %165, %107 : vector<8x32xf32>
      %167 = vector.broadcast %45 : f32 to vector<8x32xf32>
      %168 = arith.mulf %167, %110 : vector<8x32xf32>
      %169 = arith.addf %166, %168 : vector<8x32xf32>
      %170 = vector.broadcast %46 : f32 to vector<8x32xf32>
      %171 = arith.mulf %170, %113 : vector<8x32xf32>
      %172 = arith.addf %169, %171 : vector<8x32xf32>
      %173 = vector.broadcast %47 : f32 to vector<8x32xf32>
      %174 = arith.mulf %173, %116 : vector<8x32xf32>
      %175 = arith.addf %172, %174 : vector<8x32xf32>
      %176 = math.tanh %175 : vector<8x32xf32>
      %177 = vector.broadcast %70 : f32 to vector<8x32xf32>
      %178 = arith.mulf %177, %176 : vector<8x32xf32>
      %179 = arith.addf %155, %178 : vector<8x32xf32>
      %180 = vector.broadcast %78 : f32 to vector<8x32xf32>
      %181 = arith.mulf %180, %176 : vector<8x32xf32>
      %182 = arith.addf %158, %181 : vector<8x32xf32>
      %183 = vector.broadcast %86 : f32 to vector<8x32xf32>
      %184 = arith.mulf %183, %176 : vector<8x32xf32>
      %185 = arith.addf %161, %184 : vector<8x32xf32>
      %186 = vector.broadcast %94 : f32 to vector<8x32xf32>
      %187 = arith.mulf %186, %176 : vector<8x32xf32>
      %188 = arith.addf %164, %187 : vector<8x32xf32>
      %189 = vector.broadcast %48 : f32 to vector<8x32xf32>
      %190 = arith.mulf %189, %107 : vector<8x32xf32>
      %191 = vector.broadcast %49 : f32 to vector<8x32xf32>
      %192 = arith.mulf %191, %110 : vector<8x32xf32>
      %193 = arith.addf %190, %192 : vector<8x32xf32>
      %194 = vector.broadcast %50 : f32 to vector<8x32xf32>
      %195 = arith.mulf %194, %113 : vector<8x32xf32>
      %196 = arith.addf %193, %195 : vector<8x32xf32>
      %197 = vector.broadcast %51 : f32 to vector<8x32xf32>
      %198 = arith.mulf %197, %116 : vector<8x32xf32>
      %199 = arith.addf %196, %198 : vector<8x32xf32>
      %200 = math.tanh %199 : vector<8x32xf32>
      %201 = vector.broadcast %71 : f32 to vector<8x32xf32>
      %202 = arith.mulf %201, %200 : vector<8x32xf32>
      %203 = arith.addf %179, %202 : vector<8x32xf32>
      %204 = vector.broadcast %79 : f32 to vector<8x32xf32>
      %205 = arith.mulf %204, %200 : vector<8x32xf32>
      %206 = arith.addf %182, %205 : vector<8x32xf32>
      %207 = vector.broadcast %87 : f32 to vector<8x32xf32>
      %208 = arith.mulf %207, %200 : vector<8x32xf32>
      %209 = arith.addf %185, %208 : vector<8x32xf32>
      %210 = vector.broadcast %95 : f32 to vector<8x32xf32>
      %211 = arith.mulf %210, %200 : vector<8x32xf32>
      %212 = arith.addf %188, %211 : vector<8x32xf32>
      %213 = vector.broadcast %52 : f32 to vector<8x32xf32>
      %214 = arith.mulf %213, %107 : vector<8x32xf32>
      %215 = vector.broadcast %53 : f32 to vector<8x32xf32>
      %216 = arith.mulf %215, %110 : vector<8x32xf32>
      %217 = arith.addf %214, %216 : vector<8x32xf32>
      %218 = vector.broadcast %54 : f32 to vector<8x32xf32>
      %219 = arith.mulf %218, %113 : vector<8x32xf32>
      %220 = arith.addf %217, %219 : vector<8x32xf32>
      %221 = vector.broadcast %55 : f32 to vector<8x32xf32>
      %222 = arith.mulf %221, %116 : vector<8x32xf32>
      %223 = arith.addf %220, %222 : vector<8x32xf32>
      %224 = math.tanh %223 : vector<8x32xf32>
      %225 = vector.broadcast %72 : f32 to vector<8x32xf32>
      %226 = arith.mulf %225, %224 : vector<8x32xf32>
      %227 = arith.addf %203, %226 : vector<8x32xf32>
      %228 = vector.broadcast %80 : f32 to vector<8x32xf32>
      %229 = arith.mulf %228, %224 : vector<8x32xf32>
      %230 = arith.addf %206, %229 : vector<8x32xf32>
      %231 = vector.broadcast %88 : f32 to vector<8x32xf32>
      %232 = arith.mulf %231, %224 : vector<8x32xf32>
      %233 = arith.addf %209, %232 : vector<8x32xf32>
      %234 = vector.broadcast %96 : f32 to vector<8x32xf32>
      %235 = arith.mulf %234, %224 : vector<8x32xf32>
      %236 = arith.addf %212, %235 : vector<8x32xf32>
      %237 = vector.broadcast %56 : f32 to vector<8x32xf32>
      %238 = arith.mulf %237, %107 : vector<8x32xf32>
      %239 = vector.broadcast %57 : f32 to vector<8x32xf32>
      %240 = arith.mulf %239, %110 : vector<8x32xf32>
      %241 = arith.addf %238, %240 : vector<8x32xf32>
      %242 = vector.broadcast %58 : f32 to vector<8x32xf32>
      %243 = arith.mulf %242, %113 : vector<8x32xf32>
      %244 = arith.addf %241, %243 : vector<8x32xf32>
      %245 = vector.broadcast %59 : f32 to vector<8x32xf32>
      %246 = arith.mulf %245, %116 : vector<8x32xf32>
      %247 = arith.addf %244, %246 : vector<8x32xf32>
      %248 = math.tanh %247 : vector<8x32xf32>
      %249 = vector.broadcast %73 : f32 to vector<8x32xf32>
      %250 = arith.mulf %249, %248 : vector<8x32xf32>
      %251 = arith.addf %227, %250 : vector<8x32xf32>
      %252 = vector.broadcast %81 : f32 to vector<8x32xf32>
      %253 = arith.mulf %252, %248 : vector<8x32xf32>
      %254 = arith.addf %230, %253 : vector<8x32xf32>
      %255 = vector.broadcast %89 : f32 to vector<8x32xf32>
      %256 = arith.mulf %255, %248 : vector<8x32xf32>
      %257 = arith.addf %233, %256 : vector<8x32xf32>
      %258 = vector.broadcast %97 : f32 to vector<8x32xf32>
      %259 = arith.mulf %258, %248 : vector<8x32xf32>
      %260 = arith.addf %236, %259 : vector<8x32xf32>
      %261 = vector.broadcast %60 : f32 to vector<8x32xf32>
      %262 = arith.mulf %261, %107 : vector<8x32xf32>
      %263 = vector.broadcast %61 : f32 to vector<8x32xf32>
      %264 = arith.mulf %263, %110 : vector<8x32xf32>
      %265 = arith.addf %262, %264 : vector<8x32xf32>
      %266 = vector.broadcast %62 : f32 to vector<8x32xf32>
      %267 = arith.mulf %266, %113 : vector<8x32xf32>
      %268 = arith.addf %265, %267 : vector<8x32xf32>
      %269 = vector.broadcast %63 : f32 to vector<8x32xf32>
      %270 = arith.mulf %269, %116 : vector<8x32xf32>
      %271 = arith.addf %268, %270 : vector<8x32xf32>
      %272 = math.tanh %271 : vector<8x32xf32>
      %273 = vector.broadcast %74 : f32 to vector<8x32xf32>
      %274 = arith.mulf %273, %272 : vector<8x32xf32>
      %275 = arith.addf %251, %274 : vector<8x32xf32>
      %276 = vector.broadcast %82 : f32 to vector<8x32xf32>
      %277 = arith.mulf %276, %272 : vector<8x32xf32>
      %278 = arith.addf %254, %277 : vector<8x32xf32>
      %279 = vector.broadcast %90 : f32 to vector<8x32xf32>
      %280 = arith.mulf %279, %272 : vector<8x32xf32>
      %281 = arith.addf %257, %280 : vector<8x32xf32>
      %282 = vector.broadcast %98 : f32 to vector<8x32xf32>
      %283 = arith.mulf %282, %272 : vector<8x32xf32>
      %284 = arith.addf %260, %283 : vector<8x32xf32>
      %285 = vector.broadcast %64 : f32 to vector<8x32xf32>
      %286 = arith.mulf %285, %107 : vector<8x32xf32>
      %287 = vector.broadcast %65 : f32 to vector<8x32xf32>
      %288 = arith.mulf %287, %110 : vector<8x32xf32>
      %289 = arith.addf %286, %288 : vector<8x32xf32>
      %290 = vector.broadcast %66 : f32 to vector<8x32xf32>
      %291 = arith.mulf %290, %113 : vector<8x32xf32>
      %292 = arith.addf %289, %291 : vector<8x32xf32>
      %293 = vector.broadcast %67 : f32 to vector<8x32xf32>
      %294 = arith.mulf %293, %116 : vector<8x32xf32>
      %295 = arith.addf %292, %294 : vector<8x32xf32>
      %296 = math.tanh %295 : vector<8x32xf32>
      %297 = vector.broadcast %75 : f32 to vector<8x32xf32>
      %298 = arith.mulf %297, %296 : vector<8x32xf32>
      %299 = arith.addf %275, %298 : vector<8x32xf32>
      %300 = vector.broadcast %83 : f32 to vector<8x32xf32>
      %301 = arith.mulf %300, %296 : vector<8x32xf32>
      %302 = arith.addf %278, %301 : vector<8x32xf32>
      %303 = vector.broadcast %91 : f32 to vector<8x32xf32>
      %304 = arith.mulf %303, %296 : vector<8x32xf32>
      %305 = arith.addf %281, %304 : vector<8x32xf32>
      %306 = vector.broadcast %99 : f32 to vector<8x32xf32>
      %307 = arith.mulf %306, %296 : vector<8x32xf32>
      %308 = arith.addf %284, %307 : vector<8x32xf32>
      %309 = vector.broadcast %36 : f32 to vector<8x32xf32>
      %310 = arith.mulf %309, %299 : vector<8x32xf32>
      %311 = vector.broadcast %37 : f32 to vector<8x32xf32>
      %312 = arith.mulf %311, %302 : vector<8x32xf32>
      %313 = arith.addf %310, %312 : vector<8x32xf32>
      %314 = vector.broadcast %38 : f32 to vector<8x32xf32>
      %315 = arith.mulf %314, %305 : vector<8x32xf32>
      %316 = arith.addf %313, %315 : vector<8x32xf32>
      %317 = vector.broadcast %39 : f32 to vector<8x32xf32>
      %318 = arith.mulf %317, %308 : vector<8x32xf32>
      %319 = arith.addf %316, %318 : vector<8x32xf32>
      %320 = math.tanh %319 : vector<8x32xf32>
      %321 = vector.broadcast %68 : f32 to vector<8x32xf32>
      %322 = arith.mulf %321, %320 : vector<8x32xf32>
      %323 = arith.addf %299, %322 : vector<8x32xf32>
      %324 = vector.broadcast %76 : f32 to vector<8x32xf32>
      %325 = arith.mulf %324, %320 : vector<8x32xf32>
      %326 = arith.addf %302, %325 : vector<8x32xf32>
      %327 = vector.broadcast %84 : f32 to vector<8x32xf32>
      %328 = arith.mulf %327, %320 : vector<8x32xf32>
      %329 = arith.addf %305, %328 : vector<8x32xf32>
      %330 = vector.broadcast %92 : f32 to vector<8x32xf32>
      %331 = arith.mulf %330, %320 : vector<8x32xf32>
      %332 = arith.addf %308, %331 : vector<8x32xf32>
      %333 = vector.broadcast %40 : f32 to vector<8x32xf32>
      %334 = arith.mulf %333, %299 : vector<8x32xf32>
      %335 = vector.broadcast %41 : f32 to vector<8x32xf32>
      %336 = arith.mulf %335, %302 : vector<8x32xf32>
      %337 = arith.addf %334, %336 : vector<8x32xf32>
      %338 = vector.broadcast %42 : f32 to vector<8x32xf32>
      %339 = arith.mulf %338, %305 : vector<8x32xf32>
      %340 = arith.addf %337, %339 : vector<8x32xf32>
      %341 = vector.broadcast %43 : f32 to vector<8x32xf32>
      %342 = arith.mulf %341, %308 : vector<8x32xf32>
      %343 = arith.addf %340, %342 : vector<8x32xf32>
      %344 = math.tanh %343 : vector<8x32xf32>
      %345 = vector.broadcast %69 : f32 to vector<8x32xf32>
      %346 = arith.mulf %345, %344 : vector<8x32xf32>
      %347 = arith.addf %323, %346 : vector<8x32xf32>
      %348 = vector.broadcast %77 : f32 to vector<8x32xf32>
      %349 = arith.mulf %348, %344 : vector<8x32xf32>
      %350 = arith.addf %326, %349 : vector<8x32xf32>
      %351 = vector.broadcast %85 : f32 to vector<8x32xf32>
      %352 = arith.mulf %351, %344 : vector<8x32xf32>
      %353 = arith.addf %329, %352 : vector<8x32xf32>
      %354 = vector.broadcast %93 : f32 to vector<8x32xf32>
      %355 = arith.mulf %354, %344 : vector<8x32xf32>
      %356 = arith.addf %332, %355 : vector<8x32xf32>
      %357 = vector.broadcast %44 : f32 to vector<8x32xf32>
      %358 = arith.mulf %357, %299 : vector<8x32xf32>
      %359 = vector.broadcast %45 : f32 to vector<8x32xf32>
      %360 = arith.mulf %359, %302 : vector<8x32xf32>
      %361 = arith.addf %358, %360 : vector<8x32xf32>
      %362 = vector.broadcast %46 : f32 to vector<8x32xf32>
      %363 = arith.mulf %362, %305 : vector<8x32xf32>
      %364 = arith.addf %361, %363 : vector<8x32xf32>
      %365 = vector.broadcast %47 : f32 to vector<8x32xf32>
      %366 = arith.mulf %365, %308 : vector<8x32xf32>
      %367 = arith.addf %364, %366 : vector<8x32xf32>
      %368 = math.tanh %367 : vector<8x32xf32>
      %369 = vector.broadcast %70 : f32 to vector<8x32xf32>
      %370 = arith.mulf %369, %368 : vector<8x32xf32>
      %371 = arith.addf %347, %370 : vector<8x32xf32>
      %372 = vector.broadcast %78 : f32 to vector<8x32xf32>
      %373 = arith.mulf %372, %368 : vector<8x32xf32>
      %374 = arith.addf %350, %373 : vector<8x32xf32>
      %375 = vector.broadcast %86 : f32 to vector<8x32xf32>
      %376 = arith.mulf %375, %368 : vector<8x32xf32>
      %377 = arith.addf %353, %376 : vector<8x32xf32>
      %378 = vector.broadcast %94 : f32 to vector<8x32xf32>
      %379 = arith.mulf %378, %368 : vector<8x32xf32>
      %380 = arith.addf %356, %379 : vector<8x32xf32>
      %381 = vector.broadcast %48 : f32 to vector<8x32xf32>
      %382 = arith.mulf %381, %299 : vector<8x32xf32>
      %383 = vector.broadcast %49 : f32 to vector<8x32xf32>
      %384 = arith.mulf %383, %302 : vector<8x32xf32>
      %385 = arith.addf %382, %384 : vector<8x32xf32>
      %386 = vector.broadcast %50 : f32 to vector<8x32xf32>
      %387 = arith.mulf %386, %305 : vector<8x32xf32>
      %388 = arith.addf %385, %387 : vector<8x32xf32>
      %389 = vector.broadcast %51 : f32 to vector<8x32xf32>
      %390 = arith.mulf %389, %308 : vector<8x32xf32>
      %391 = arith.addf %388, %390 : vector<8x32xf32>
      %392 = math.tanh %391 : vector<8x32xf32>
      %393 = vector.broadcast %71 : f32 to vector<8x32xf32>
      %394 = arith.mulf %393, %392 : vector<8x32xf32>
      %395 = arith.addf %371, %394 : vector<8x32xf32>
      %396 = vector.broadcast %79 : f32 to vector<8x32xf32>
      %397 = arith.mulf %396, %392 : vector<8x32xf32>
      %398 = arith.addf %374, %397 : vector<8x32xf32>
      %399 = vector.broadcast %87 : f32 to vector<8x32xf32>
      %400 = arith.mulf %399, %392 : vector<8x32xf32>
      %401 = arith.addf %377, %400 : vector<8x32xf32>
      %402 = vector.broadcast %95 : f32 to vector<8x32xf32>
      %403 = arith.mulf %402, %392 : vector<8x32xf32>
      %404 = arith.addf %380, %403 : vector<8x32xf32>
      %405 = vector.broadcast %52 : f32 to vector<8x32xf32>
      %406 = arith.mulf %405, %299 : vector<8x32xf32>
      %407 = vector.broadcast %53 : f32 to vector<8x32xf32>
      %408 = arith.mulf %407, %302 : vector<8x32xf32>
      %409 = arith.addf %406, %408 : vector<8x32xf32>
      %410 = vector.broadcast %54 : f32 to vector<8x32xf32>
      %411 = arith.mulf %410, %305 : vector<8x32xf32>
      %412 = arith.addf %409, %411 : vector<8x32xf32>
      %413 = vector.broadcast %55 : f32 to vector<8x32xf32>
      %414 = arith.mulf %413, %308 : vector<8x32xf32>
      %415 = arith.addf %412, %414 : vector<8x32xf32>
      %416 = math.tanh %415 : vector<8x32xf32>
      %417 = vector.broadcast %72 : f32 to vector<8x32xf32>
      %418 = arith.mulf %417, %416 : vector<8x32xf32>
      %419 = arith.addf %395, %418 : vector<8x32xf32>
      %420 = vector.broadcast %80 : f32 to vector<8x32xf32>
      %421 = arith.mulf %420, %416 : vector<8x32xf32>
      %422 = arith.addf %398, %421 : vector<8x32xf32>
      %423 = vector.broadcast %88 : f32 to vector<8x32xf32>
      %424 = arith.mulf %423, %416 : vector<8x32xf32>
      %425 = arith.addf %401, %424 : vector<8x32xf32>
      %426 = vector.broadcast %96 : f32 to vector<8x32xf32>
      %427 = arith.mulf %426, %416 : vector<8x32xf32>
      %428 = arith.addf %404, %427 : vector<8x32xf32>
      %429 = vector.broadcast %56 : f32 to vector<8x32xf32>
      %430 = arith.mulf %429, %299 : vector<8x32xf32>
      %431 = vector.broadcast %57 : f32 to vector<8x32xf32>
      %432 = arith.mulf %431, %302 : vector<8x32xf32>
      %433 = arith.addf %430, %432 : vector<8x32xf32>
      %434 = vector.broadcast %58 : f32 to vector<8x32xf32>
      %435 = arith.mulf %434, %305 : vector<8x32xf32>
      %436 = arith.addf %433, %435 : vector<8x32xf32>
      %437 = vector.broadcast %59 : f32 to vector<8x32xf32>
      %438 = arith.mulf %437, %308 : vector<8x32xf32>
      %439 = arith.addf %436, %438 : vector<8x32xf32>
      %440 = math.tanh %439 : vector<8x32xf32>
      %441 = vector.broadcast %73 : f32 to vector<8x32xf32>
      %442 = arith.mulf %441, %440 : vector<8x32xf32>
      %443 = arith.addf %419, %442 : vector<8x32xf32>
      %444 = vector.broadcast %81 : f32 to vector<8x32xf32>
      %445 = arith.mulf %444, %440 : vector<8x32xf32>
      %446 = arith.addf %422, %445 : vector<8x32xf32>
      %447 = vector.broadcast %89 : f32 to vector<8x32xf32>
      %448 = arith.mulf %447, %440 : vector<8x32xf32>
      %449 = arith.addf %425, %448 : vector<8x32xf32>
      %450 = vector.broadcast %97 : f32 to vector<8x32xf32>
      %451 = arith.mulf %450, %440 : vector<8x32xf32>
      %452 = arith.addf %428, %451 : vector<8x32xf32>
      %453 = vector.broadcast %60 : f32 to vector<8x32xf32>
      %454 = arith.mulf %453, %299 : vector<8x32xf32>
      %455 = vector.broadcast %61 : f32 to vector<8x32xf32>
      %456 = arith.mulf %455, %302 : vector<8x32xf32>
      %457 = arith.addf %454, %456 : vector<8x32xf32>
      %458 = vector.broadcast %62 : f32 to vector<8x32xf32>
      %459 = arith.mulf %458, %305 : vector<8x32xf32>
      %460 = arith.addf %457, %459 : vector<8x32xf32>
      %461 = vector.broadcast %63 : f32 to vector<8x32xf32>
      %462 = arith.mulf %461, %308 : vector<8x32xf32>
      %463 = arith.addf %460, %462 : vector<8x32xf32>
      %464 = math.tanh %463 : vector<8x32xf32>
      %465 = vector.broadcast %74 : f32 to vector<8x32xf32>
      %466 = arith.mulf %465, %464 : vector<8x32xf32>
      %467 = arith.addf %443, %466 : vector<8x32xf32>
      %468 = vector.broadcast %82 : f32 to vector<8x32xf32>
      %469 = arith.mulf %468, %464 : vector<8x32xf32>
      %470 = arith.addf %446, %469 : vector<8x32xf32>
      %471 = vector.broadcast %90 : f32 to vector<8x32xf32>
      %472 = arith.mulf %471, %464 : vector<8x32xf32>
      %473 = arith.addf %449, %472 : vector<8x32xf32>
      %474 = vector.broadcast %98 : f32 to vector<8x32xf32>
      %475 = arith.mulf %474, %464 : vector<8x32xf32>
      %476 = arith.addf %452, %475 : vector<8x32xf32>
      %477 = vector.broadcast %64 : f32 to vector<8x32xf32>
      %478 = arith.mulf %477, %299 : vector<8x32xf32>
      %479 = vector.broadcast %65 : f32 to vector<8x32xf32>
      %480 = arith.mulf %479, %302 : vector<8x32xf32>
      %481 = arith.addf %478, %480 : vector<8x32xf32>
      %482 = vector.broadcast %66 : f32 to vector<8x32xf32>
      %483 = arith.mulf %482, %305 : vector<8x32xf32>
      %484 = arith.addf %481, %483 : vector<8x32xf32>
      %485 = vector.broadcast %67 : f32 to vector<8x32xf32>
      %486 = arith.mulf %485, %308 : vector<8x32xf32>
      %487 = arith.addf %484, %486 : vector<8x32xf32>
      %488 = math.tanh %487 : vector<8x32xf32>
      %489 = vector.broadcast %75 : f32 to vector<8x32xf32>
      %490 = arith.mulf %489, %488 : vector<8x32xf32>
      %491 = arith.addf %467, %490 : vector<8x32xf32>
      %492 = vector.broadcast %83 : f32 to vector<8x32xf32>
      %493 = arith.mulf %492, %488 : vector<8x32xf32>
      %494 = arith.addf %470, %493 : vector<8x32xf32>
      %495 = vector.broadcast %91 : f32 to vector<8x32xf32>
      %496 = arith.mulf %495, %488 : vector<8x32xf32>
      %497 = arith.addf %473, %496 : vector<8x32xf32>
      %498 = vector.broadcast %99 : f32 to vector<8x32xf32>
      %499 = arith.mulf %498, %488 : vector<8x32xf32>
      %500 = arith.addf %476, %499 : vector<8x32xf32>
      %501 = vector.broadcast %36 : f32 to vector<8x32xf32>
      %502 = arith.mulf %501, %491 : vector<8x32xf32>
      %503 = vector.broadcast %37 : f32 to vector<8x32xf32>
      %504 = arith.mulf %503, %494 : vector<8x32xf32>
      %505 = arith.addf %502, %504 : vector<8x32xf32>
      %506 = vector.broadcast %38 : f32 to vector<8x32xf32>
      %507 = arith.mulf %506, %497 : vector<8x32xf32>
      %508 = arith.addf %505, %507 : vector<8x32xf32>
      %509 = vector.broadcast %39 : f32 to vector<8x32xf32>
      %510 = arith.mulf %509, %500 : vector<8x32xf32>
      %511 = arith.addf %508, %510 : vector<8x32xf32>
      %512 = math.tanh %511 : vector<8x32xf32>
      %513 = vector.broadcast %68 : f32 to vector<8x32xf32>
      %514 = arith.mulf %513, %512 : vector<8x32xf32>
      %515 = arith.addf %491, %514 : vector<8x32xf32>
      %516 = vector.broadcast %76 : f32 to vector<8x32xf32>
      %517 = arith.mulf %516, %512 : vector<8x32xf32>
      %518 = arith.addf %494, %517 : vector<8x32xf32>
      %519 = vector.broadcast %84 : f32 to vector<8x32xf32>
      %520 = arith.mulf %519, %512 : vector<8x32xf32>
      %521 = arith.addf %497, %520 : vector<8x32xf32>
      %522 = vector.broadcast %92 : f32 to vector<8x32xf32>
      %523 = arith.mulf %522, %512 : vector<8x32xf32>
      %524 = arith.addf %500, %523 : vector<8x32xf32>
      %525 = vector.broadcast %40 : f32 to vector<8x32xf32>
      %526 = arith.mulf %525, %491 : vector<8x32xf32>
      %527 = vector.broadcast %41 : f32 to vector<8x32xf32>
      %528 = arith.mulf %527, %494 : vector<8x32xf32>
      %529 = arith.addf %526, %528 : vector<8x32xf32>
      %530 = vector.broadcast %42 : f32 to vector<8x32xf32>
      %531 = arith.mulf %530, %497 : vector<8x32xf32>
      %532 = arith.addf %529, %531 : vector<8x32xf32>
      %533 = vector.broadcast %43 : f32 to vector<8x32xf32>
      %534 = arith.mulf %533, %500 : vector<8x32xf32>
      %535 = arith.addf %532, %534 : vector<8x32xf32>
      %536 = math.tanh %535 : vector<8x32xf32>
      %537 = vector.broadcast %69 : f32 to vector<8x32xf32>
      %538 = arith.mulf %537, %536 : vector<8x32xf32>
      %539 = arith.addf %515, %538 : vector<8x32xf32>
      %540 = vector.broadcast %77 : f32 to vector<8x32xf32>
      %541 = arith.mulf %540, %536 : vector<8x32xf32>
      %542 = arith.addf %518, %541 : vector<8x32xf32>
      %543 = vector.broadcast %85 : f32 to vector<8x32xf32>
      %544 = arith.mulf %543, %536 : vector<8x32xf32>
      %545 = arith.addf %521, %544 : vector<8x32xf32>
      %546 = vector.broadcast %93 : f32 to vector<8x32xf32>
      %547 = arith.mulf %546, %536 : vector<8x32xf32>
      %548 = arith.addf %524, %547 : vector<8x32xf32>
      %549 = vector.broadcast %44 : f32 to vector<8x32xf32>
      %550 = arith.mulf %549, %491 : vector<8x32xf32>
      %551 = vector.broadcast %45 : f32 to vector<8x32xf32>
      %552 = arith.mulf %551, %494 : vector<8x32xf32>
      %553 = arith.addf %550, %552 : vector<8x32xf32>
      %554 = vector.broadcast %46 : f32 to vector<8x32xf32>
      %555 = arith.mulf %554, %497 : vector<8x32xf32>
      %556 = arith.addf %553, %555 : vector<8x32xf32>
      %557 = vector.broadcast %47 : f32 to vector<8x32xf32>
      %558 = arith.mulf %557, %500 : vector<8x32xf32>
      %559 = arith.addf %556, %558 : vector<8x32xf32>
      %560 = math.tanh %559 : vector<8x32xf32>
      %561 = vector.broadcast %70 : f32 to vector<8x32xf32>
      %562 = arith.mulf %561, %560 : vector<8x32xf32>
      %563 = arith.addf %539, %562 : vector<8x32xf32>
      %564 = vector.broadcast %78 : f32 to vector<8x32xf32>
      %565 = arith.mulf %564, %560 : vector<8x32xf32>
      %566 = arith.addf %542, %565 : vector<8x32xf32>
      %567 = vector.broadcast %86 : f32 to vector<8x32xf32>
      %568 = arith.mulf %567, %560 : vector<8x32xf32>
      %569 = arith.addf %545, %568 : vector<8x32xf32>
      %570 = vector.broadcast %94 : f32 to vector<8x32xf32>
      %571 = arith.mulf %570, %560 : vector<8x32xf32>
      %572 = arith.addf %548, %571 : vector<8x32xf32>
      %573 = vector.broadcast %48 : f32 to vector<8x32xf32>
      %574 = arith.mulf %573, %491 : vector<8x32xf32>
      %575 = vector.broadcast %49 : f32 to vector<8x32xf32>
      %576 = arith.mulf %575, %494 : vector<8x32xf32>
      %577 = arith.addf %574, %576 : vector<8x32xf32>
      %578 = vector.broadcast %50 : f32 to vector<8x32xf32>
      %579 = arith.mulf %578, %497 : vector<8x32xf32>
      %580 = arith.addf %577, %579 : vector<8x32xf32>
      %581 = vector.broadcast %51 : f32 to vector<8x32xf32>
      %582 = arith.mulf %581, %500 : vector<8x32xf32>
      %583 = arith.addf %580, %582 : vector<8x32xf32>
      %584 = math.tanh %583 : vector<8x32xf32>
      %585 = vector.broadcast %71 : f32 to vector<8x32xf32>
      %586 = arith.mulf %585, %584 : vector<8x32xf32>
      %587 = arith.addf %563, %586 : vector<8x32xf32>
      %588 = vector.broadcast %79 : f32 to vector<8x32xf32>
      %589 = arith.mulf %588, %584 : vector<8x32xf32>
      %590 = arith.addf %566, %589 : vector<8x32xf32>
      %591 = vector.broadcast %87 : f32 to vector<8x32xf32>
      %592 = arith.mulf %591, %584 : vector<8x32xf32>
      %593 = arith.addf %569, %592 : vector<8x32xf32>
      %594 = vector.broadcast %95 : f32 to vector<8x32xf32>
      %595 = arith.mulf %594, %584 : vector<8x32xf32>
      %596 = arith.addf %572, %595 : vector<8x32xf32>
      %597 = vector.broadcast %52 : f32 to vector<8x32xf32>
      %598 = arith.mulf %597, %491 : vector<8x32xf32>
      %599 = vector.broadcast %53 : f32 to vector<8x32xf32>
      %600 = arith.mulf %599, %494 : vector<8x32xf32>
      %601 = arith.addf %598, %600 : vector<8x32xf32>
      %602 = vector.broadcast %54 : f32 to vector<8x32xf32>
      %603 = arith.mulf %602, %497 : vector<8x32xf32>
      %604 = arith.addf %601, %603 : vector<8x32xf32>
      %605 = vector.broadcast %55 : f32 to vector<8x32xf32>
      %606 = arith.mulf %605, %500 : vector<8x32xf32>
      %607 = arith.addf %604, %606 : vector<8x32xf32>
      %608 = math.tanh %607 : vector<8x32xf32>
      %609 = vector.broadcast %72 : f32 to vector<8x32xf32>
      %610 = arith.mulf %609, %608 : vector<8x32xf32>
      %611 = arith.addf %587, %610 : vector<8x32xf32>
      %612 = vector.broadcast %80 : f32 to vector<8x32xf32>
      %613 = arith.mulf %612, %608 : vector<8x32xf32>
      %614 = arith.addf %590, %613 : vector<8x32xf32>
      %615 = vector.broadcast %88 : f32 to vector<8x32xf32>
      %616 = arith.mulf %615, %608 : vector<8x32xf32>
      %617 = arith.addf %593, %616 : vector<8x32xf32>
      %618 = vector.broadcast %96 : f32 to vector<8x32xf32>
      %619 = arith.mulf %618, %608 : vector<8x32xf32>
      %620 = arith.addf %596, %619 : vector<8x32xf32>
      %621 = vector.broadcast %56 : f32 to vector<8x32xf32>
      %622 = arith.mulf %621, %491 : vector<8x32xf32>
      %623 = vector.broadcast %57 : f32 to vector<8x32xf32>
      %624 = arith.mulf %623, %494 : vector<8x32xf32>
      %625 = arith.addf %622, %624 : vector<8x32xf32>
      %626 = vector.broadcast %58 : f32 to vector<8x32xf32>
      %627 = arith.mulf %626, %497 : vector<8x32xf32>
      %628 = arith.addf %625, %627 : vector<8x32xf32>
      %629 = vector.broadcast %59 : f32 to vector<8x32xf32>
      %630 = arith.mulf %629, %500 : vector<8x32xf32>
      %631 = arith.addf %628, %630 : vector<8x32xf32>
      %632 = math.tanh %631 : vector<8x32xf32>
      %633 = vector.broadcast %73 : f32 to vector<8x32xf32>
      %634 = arith.mulf %633, %632 : vector<8x32xf32>
      %635 = arith.addf %611, %634 : vector<8x32xf32>
      %636 = vector.broadcast %81 : f32 to vector<8x32xf32>
      %637 = arith.mulf %636, %632 : vector<8x32xf32>
      %638 = arith.addf %614, %637 : vector<8x32xf32>
      %639 = vector.broadcast %89 : f32 to vector<8x32xf32>
      %640 = arith.mulf %639, %632 : vector<8x32xf32>
      %641 = arith.addf %617, %640 : vector<8x32xf32>
      %642 = vector.broadcast %97 : f32 to vector<8x32xf32>
      %643 = arith.mulf %642, %632 : vector<8x32xf32>
      %644 = arith.addf %620, %643 : vector<8x32xf32>
      %645 = vector.broadcast %60 : f32 to vector<8x32xf32>
      %646 = arith.mulf %645, %491 : vector<8x32xf32>
      %647 = vector.broadcast %61 : f32 to vector<8x32xf32>
      %648 = arith.mulf %647, %494 : vector<8x32xf32>
      %649 = arith.addf %646, %648 : vector<8x32xf32>
      %650 = vector.broadcast %62 : f32 to vector<8x32xf32>
      %651 = arith.mulf %650, %497 : vector<8x32xf32>
      %652 = arith.addf %649, %651 : vector<8x32xf32>
      %653 = vector.broadcast %63 : f32 to vector<8x32xf32>
      %654 = arith.mulf %653, %500 : vector<8x32xf32>
      %655 = arith.addf %652, %654 : vector<8x32xf32>
      %656 = math.tanh %655 : vector<8x32xf32>
      %657 = vector.broadcast %74 : f32 to vector<8x32xf32>
      %658 = arith.mulf %657, %656 : vector<8x32xf32>
      %659 = arith.addf %635, %658 : vector<8x32xf32>
      %660 = vector.broadcast %82 : f32 to vector<8x32xf32>
      %661 = arith.mulf %660, %656 : vector<8x32xf32>
      %662 = arith.addf %638, %661 : vector<8x32xf32>
      %663 = vector.broadcast %90 : f32 to vector<8x32xf32>
      %664 = arith.mulf %663, %656 : vector<8x32xf32>
      %665 = arith.addf %641, %664 : vector<8x32xf32>
      %666 = vector.broadcast %98 : f32 to vector<8x32xf32>
      %667 = arith.mulf %666, %656 : vector<8x32xf32>
      %668 = arith.addf %644, %667 : vector<8x32xf32>
      %669 = vector.broadcast %64 : f32 to vector<8x32xf32>
      %670 = arith.mulf %669, %491 : vector<8x32xf32>
      %671 = vector.broadcast %65 : f32 to vector<8x32xf32>
      %672 = arith.mulf %671, %494 : vector<8x32xf32>
      %673 = arith.addf %670, %672 : vector<8x32xf32>
      %674 = vector.broadcast %66 : f32 to vector<8x32xf32>
      %675 = arith.mulf %674, %497 : vector<8x32xf32>
      %676 = arith.addf %673, %675 : vector<8x32xf32>
      %677 = vector.broadcast %67 : f32 to vector<8x32xf32>
      %678 = arith.mulf %677, %500 : vector<8x32xf32>
      %679 = arith.addf %676, %678 : vector<8x32xf32>
      %680 = math.tanh %679 : vector<8x32xf32>
      %681 = vector.broadcast %75 : f32 to vector<8x32xf32>
      %682 = arith.mulf %681, %680 : vector<8x32xf32>
      %683 = arith.addf %659, %682 : vector<8x32xf32>
      %684 = vector.broadcast %83 : f32 to vector<8x32xf32>
      %685 = arith.mulf %684, %680 : vector<8x32xf32>
      %686 = arith.addf %662, %685 : vector<8x32xf32>
      %687 = vector.broadcast %91 : f32 to vector<8x32xf32>
      %688 = arith.mulf %687, %680 : vector<8x32xf32>
      %689 = arith.addf %665, %688 : vector<8x32xf32>
      %690 = vector.broadcast %99 : f32 to vector<8x32xf32>
      %691 = arith.mulf %690, %680 : vector<8x32xf32>
      %692 = arith.addf %668, %691 : vector<8x32xf32>
      %693 = vector.broadcast %36 : f32 to vector<8x32xf32>
      %694 = arith.mulf %693, %683 : vector<8x32xf32>
      %695 = vector.broadcast %37 : f32 to vector<8x32xf32>
      %696 = arith.mulf %695, %686 : vector<8x32xf32>
      %697 = arith.addf %694, %696 : vector<8x32xf32>
      %698 = vector.broadcast %38 : f32 to vector<8x32xf32>
      %699 = arith.mulf %698, %689 : vector<8x32xf32>
      %700 = arith.addf %697, %699 : vector<8x32xf32>
      %701 = vector.broadcast %39 : f32 to vector<8x32xf32>
      %702 = arith.mulf %701, %692 : vector<8x32xf32>
      %703 = arith.addf %700, %702 : vector<8x32xf32>
      %704 = math.tanh %703 : vector<8x32xf32>
      %705 = vector.broadcast %68 : f32 to vector<8x32xf32>
      %706 = arith.mulf %705, %704 : vector<8x32xf32>
      %707 = arith.addf %683, %706 : vector<8x32xf32>
      %708 = vector.broadcast %76 : f32 to vector<8x32xf32>
      %709 = arith.mulf %708, %704 : vector<8x32xf32>
      %710 = arith.addf %686, %709 : vector<8x32xf32>
      %711 = vector.broadcast %84 : f32 to vector<8x32xf32>
      %712 = arith.mulf %711, %704 : vector<8x32xf32>
      %713 = arith.addf %689, %712 : vector<8x32xf32>
      %714 = vector.broadcast %92 : f32 to vector<8x32xf32>
      %715 = arith.mulf %714, %704 : vector<8x32xf32>
      %716 = arith.addf %692, %715 : vector<8x32xf32>
      %717 = vector.broadcast %40 : f32 to vector<8x32xf32>
      %718 = arith.mulf %717, %683 : vector<8x32xf32>
      %719 = vector.broadcast %41 : f32 to vector<8x32xf32>
      %720 = arith.mulf %719, %686 : vector<8x32xf32>
      %721 = arith.addf %718, %720 : vector<8x32xf32>
      %722 = vector.broadcast %42 : f32 to vector<8x32xf32>
      %723 = arith.mulf %722, %689 : vector<8x32xf32>
      %724 = arith.addf %721, %723 : vector<8x32xf32>
      %725 = vector.broadcast %43 : f32 to vector<8x32xf32>
      %726 = arith.mulf %725, %692 : vector<8x32xf32>
      %727 = arith.addf %724, %726 : vector<8x32xf32>
      %728 = math.tanh %727 : vector<8x32xf32>
      %729 = vector.broadcast %69 : f32 to vector<8x32xf32>
      %730 = arith.mulf %729, %728 : vector<8x32xf32>
      %731 = arith.addf %707, %730 : vector<8x32xf32>
      %732 = vector.broadcast %77 : f32 to vector<8x32xf32>
      %733 = arith.mulf %732, %728 : vector<8x32xf32>
      %734 = arith.addf %710, %733 : vector<8x32xf32>
      %735 = vector.broadcast %85 : f32 to vector<8x32xf32>
      %736 = arith.mulf %735, %728 : vector<8x32xf32>
      %737 = arith.addf %713, %736 : vector<8x32xf32>
      %738 = vector.broadcast %93 : f32 to vector<8x32xf32>
      %739 = arith.mulf %738, %728 : vector<8x32xf32>
      %740 = arith.addf %716, %739 : vector<8x32xf32>
      %741 = vector.broadcast %44 : f32 to vector<8x32xf32>
      %742 = arith.mulf %741, %683 : vector<8x32xf32>
      %743 = vector.broadcast %45 : f32 to vector<8x32xf32>
      %744 = arith.mulf %743, %686 : vector<8x32xf32>
      %745 = arith.addf %742, %744 : vector<8x32xf32>
      %746 = vector.broadcast %46 : f32 to vector<8x32xf32>
      %747 = arith.mulf %746, %689 : vector<8x32xf32>
      %748 = arith.addf %745, %747 : vector<8x32xf32>
      %749 = vector.broadcast %47 : f32 to vector<8x32xf32>
      %750 = arith.mulf %749, %692 : vector<8x32xf32>
      %751 = arith.addf %748, %750 : vector<8x32xf32>
      %752 = math.tanh %751 : vector<8x32xf32>
      %753 = vector.broadcast %70 : f32 to vector<8x32xf32>
      %754 = arith.mulf %753, %752 : vector<8x32xf32>
      %755 = arith.addf %731, %754 : vector<8x32xf32>
      %756 = vector.broadcast %78 : f32 to vector<8x32xf32>
      %757 = arith.mulf %756, %752 : vector<8x32xf32>
      %758 = arith.addf %734, %757 : vector<8x32xf32>
      %759 = vector.broadcast %86 : f32 to vector<8x32xf32>
      %760 = arith.mulf %759, %752 : vector<8x32xf32>
      %761 = arith.addf %737, %760 : vector<8x32xf32>
      %762 = vector.broadcast %94 : f32 to vector<8x32xf32>
      %763 = arith.mulf %762, %752 : vector<8x32xf32>
      %764 = arith.addf %740, %763 : vector<8x32xf32>
      %765 = vector.broadcast %48 : f32 to vector<8x32xf32>
      %766 = arith.mulf %765, %683 : vector<8x32xf32>
      %767 = vector.broadcast %49 : f32 to vector<8x32xf32>
      %768 = arith.mulf %767, %686 : vector<8x32xf32>
      %769 = arith.addf %766, %768 : vector<8x32xf32>
      %770 = vector.broadcast %50 : f32 to vector<8x32xf32>
      %771 = arith.mulf %770, %689 : vector<8x32xf32>
      %772 = arith.addf %769, %771 : vector<8x32xf32>
      %773 = vector.broadcast %51 : f32 to vector<8x32xf32>
      %774 = arith.mulf %773, %692 : vector<8x32xf32>
      %775 = arith.addf %772, %774 : vector<8x32xf32>
      %776 = math.tanh %775 : vector<8x32xf32>
      %777 = vector.broadcast %71 : f32 to vector<8x32xf32>
      %778 = arith.mulf %777, %776 : vector<8x32xf32>
      %779 = arith.addf %755, %778 : vector<8x32xf32>
      %780 = vector.broadcast %79 : f32 to vector<8x32xf32>
      %781 = arith.mulf %780, %776 : vector<8x32xf32>
      %782 = arith.addf %758, %781 : vector<8x32xf32>
      %783 = vector.broadcast %87 : f32 to vector<8x32xf32>
      %784 = arith.mulf %783, %776 : vector<8x32xf32>
      %785 = arith.addf %761, %784 : vector<8x32xf32>
      %786 = vector.broadcast %95 : f32 to vector<8x32xf32>
      %787 = arith.mulf %786, %776 : vector<8x32xf32>
      %788 = arith.addf %764, %787 : vector<8x32xf32>
      %789 = vector.broadcast %52 : f32 to vector<8x32xf32>
      %790 = arith.mulf %789, %683 : vector<8x32xf32>
      %791 = vector.broadcast %53 : f32 to vector<8x32xf32>
      %792 = arith.mulf %791, %686 : vector<8x32xf32>
      %793 = arith.addf %790, %792 : vector<8x32xf32>
      %794 = vector.broadcast %54 : f32 to vector<8x32xf32>
      %795 = arith.mulf %794, %689 : vector<8x32xf32>
      %796 = arith.addf %793, %795 : vector<8x32xf32>
      %797 = vector.broadcast %55 : f32 to vector<8x32xf32>
      %798 = arith.mulf %797, %692 : vector<8x32xf32>
      %799 = arith.addf %796, %798 : vector<8x32xf32>
      %800 = math.tanh %799 : vector<8x32xf32>
      %801 = vector.broadcast %72 : f32 to vector<8x32xf32>
      %802 = arith.mulf %801, %800 : vector<8x32xf32>
      %803 = arith.addf %779, %802 : vector<8x32xf32>
      %804 = vector.broadcast %80 : f32 to vector<8x32xf32>
      %805 = arith.mulf %804, %800 : vector<8x32xf32>
      %806 = arith.addf %782, %805 : vector<8x32xf32>
      %807 = vector.broadcast %88 : f32 to vector<8x32xf32>
      %808 = arith.mulf %807, %800 : vector<8x32xf32>
      %809 = arith.addf %785, %808 : vector<8x32xf32>
      %810 = vector.broadcast %96 : f32 to vector<8x32xf32>
      %811 = arith.mulf %810, %800 : vector<8x32xf32>
      %812 = arith.addf %788, %811 : vector<8x32xf32>
      %813 = vector.broadcast %56 : f32 to vector<8x32xf32>
      %814 = arith.mulf %813, %683 : vector<8x32xf32>
      %815 = vector.broadcast %57 : f32 to vector<8x32xf32>
      %816 = arith.mulf %815, %686 : vector<8x32xf32>
      %817 = arith.addf %814, %816 : vector<8x32xf32>
      %818 = vector.broadcast %58 : f32 to vector<8x32xf32>
      %819 = arith.mulf %818, %689 : vector<8x32xf32>
      %820 = arith.addf %817, %819 : vector<8x32xf32>
      %821 = vector.broadcast %59 : f32 to vector<8x32xf32>
      %822 = arith.mulf %821, %692 : vector<8x32xf32>
      %823 = arith.addf %820, %822 : vector<8x32xf32>
      %824 = math.tanh %823 : vector<8x32xf32>
      %825 = vector.broadcast %73 : f32 to vector<8x32xf32>
      %826 = arith.mulf %825, %824 : vector<8x32xf32>
      %827 = arith.addf %803, %826 : vector<8x32xf32>
      %828 = vector.broadcast %81 : f32 to vector<8x32xf32>
      %829 = arith.mulf %828, %824 : vector<8x32xf32>
      %830 = arith.addf %806, %829 : vector<8x32xf32>
      %831 = vector.broadcast %89 : f32 to vector<8x32xf32>
      %832 = arith.mulf %831, %824 : vector<8x32xf32>
      %833 = arith.addf %809, %832 : vector<8x32xf32>
      %834 = vector.broadcast %97 : f32 to vector<8x32xf32>
      %835 = arith.mulf %834, %824 : vector<8x32xf32>
      %836 = arith.addf %812, %835 : vector<8x32xf32>
      %837 = vector.broadcast %60 : f32 to vector<8x32xf32>
      %838 = arith.mulf %837, %683 : vector<8x32xf32>
      %839 = vector.broadcast %61 : f32 to vector<8x32xf32>
      %840 = arith.mulf %839, %686 : vector<8x32xf32>
      %841 = arith.addf %838, %840 : vector<8x32xf32>
      %842 = vector.broadcast %62 : f32 to vector<8x32xf32>
      %843 = arith.mulf %842, %689 : vector<8x32xf32>
      %844 = arith.addf %841, %843 : vector<8x32xf32>
      %845 = vector.broadcast %63 : f32 to vector<8x32xf32>
      %846 = arith.mulf %845, %692 : vector<8x32xf32>
      %847 = arith.addf %844, %846 : vector<8x32xf32>
      %848 = math.tanh %847 : vector<8x32xf32>
      %849 = vector.broadcast %74 : f32 to vector<8x32xf32>
      %850 = arith.mulf %849, %848 : vector<8x32xf32>
      %851 = arith.addf %827, %850 : vector<8x32xf32>
      %852 = vector.broadcast %82 : f32 to vector<8x32xf32>
      %853 = arith.mulf %852, %848 : vector<8x32xf32>
      %854 = arith.addf %830, %853 : vector<8x32xf32>
      %855 = vector.broadcast %90 : f32 to vector<8x32xf32>
      %856 = arith.mulf %855, %848 : vector<8x32xf32>
      %857 = arith.addf %833, %856 : vector<8x32xf32>
      %858 = vector.broadcast %98 : f32 to vector<8x32xf32>
      %859 = arith.mulf %858, %848 : vector<8x32xf32>
      %860 = arith.addf %836, %859 : vector<8x32xf32>
      %861 = vector.broadcast %64 : f32 to vector<8x32xf32>
      %862 = arith.mulf %861, %683 : vector<8x32xf32>
      %863 = vector.broadcast %65 : f32 to vector<8x32xf32>
      %864 = arith.mulf %863, %686 : vector<8x32xf32>
      %865 = arith.addf %862, %864 : vector<8x32xf32>
      %866 = vector.broadcast %66 : f32 to vector<8x32xf32>
      %867 = arith.mulf %866, %689 : vector<8x32xf32>
      %868 = arith.addf %865, %867 : vector<8x32xf32>
      %869 = vector.broadcast %67 : f32 to vector<8x32xf32>
      %870 = arith.mulf %869, %692 : vector<8x32xf32>
      %871 = arith.addf %868, %870 : vector<8x32xf32>
      %872 = math.tanh %871 : vector<8x32xf32>
      %873 = vector.broadcast %75 : f32 to vector<8x32xf32>
      %874 = arith.mulf %873, %872 : vector<8x32xf32>
      %875 = arith.addf %851, %874 : vector<8x32xf32>
      %876 = vector.broadcast %83 : f32 to vector<8x32xf32>
      %877 = arith.mulf %876, %872 : vector<8x32xf32>
      %878 = arith.addf %854, %877 : vector<8x32xf32>
      %879 = vector.broadcast %91 : f32 to vector<8x32xf32>
      %880 = arith.mulf %879, %872 : vector<8x32xf32>
      %881 = arith.addf %857, %880 : vector<8x32xf32>
      %882 = vector.broadcast %99 : f32 to vector<8x32xf32>
      %883 = arith.mulf %882, %872 : vector<8x32xf32>
      %884 = arith.addf %860, %883 : vector<8x32xf32>
      %885 = vector.broadcast %36 : f32 to vector<8x32xf32>
      %886 = arith.mulf %885, %875 : vector<8x32xf32>
      %887 = vector.broadcast %37 : f32 to vector<8x32xf32>
      %888 = arith.mulf %887, %878 : vector<8x32xf32>
      %889 = arith.addf %886, %888 : vector<8x32xf32>
      %890 = vector.broadcast %38 : f32 to vector<8x32xf32>
      %891 = arith.mulf %890, %881 : vector<8x32xf32>
      %892 = arith.addf %889, %891 : vector<8x32xf32>
      %893 = vector.broadcast %39 : f32 to vector<8x32xf32>
      %894 = arith.mulf %893, %884 : vector<8x32xf32>
      %895 = arith.addf %892, %894 : vector<8x32xf32>
      %896 = math.tanh %895 : vector<8x32xf32>
      %897 = vector.broadcast %68 : f32 to vector<8x32xf32>
      %898 = arith.mulf %897, %896 : vector<8x32xf32>
      %899 = arith.addf %875, %898 : vector<8x32xf32>
      %900 = vector.broadcast %76 : f32 to vector<8x32xf32>
      %901 = arith.mulf %900, %896 : vector<8x32xf32>
      %902 = arith.addf %878, %901 : vector<8x32xf32>
      %903 = vector.broadcast %84 : f32 to vector<8x32xf32>
      %904 = arith.mulf %903, %896 : vector<8x32xf32>
      %905 = arith.addf %881, %904 : vector<8x32xf32>
      %906 = vector.broadcast %92 : f32 to vector<8x32xf32>
      %907 = arith.mulf %906, %896 : vector<8x32xf32>
      %908 = arith.addf %884, %907 : vector<8x32xf32>
      %909 = vector.broadcast %40 : f32 to vector<8x32xf32>
      %910 = arith.mulf %909, %875 : vector<8x32xf32>
      %911 = vector.broadcast %41 : f32 to vector<8x32xf32>
      %912 = arith.mulf %911, %878 : vector<8x32xf32>
      %913 = arith.addf %910, %912 : vector<8x32xf32>
      %914 = vector.broadcast %42 : f32 to vector<8x32xf32>
      %915 = arith.mulf %914, %881 : vector<8x32xf32>
      %916 = arith.addf %913, %915 : vector<8x32xf32>
      %917 = vector.broadcast %43 : f32 to vector<8x32xf32>
      %918 = arith.mulf %917, %884 : vector<8x32xf32>
      %919 = arith.addf %916, %918 : vector<8x32xf32>
      %920 = math.tanh %919 : vector<8x32xf32>
      %921 = vector.broadcast %69 : f32 to vector<8x32xf32>
      %922 = arith.mulf %921, %920 : vector<8x32xf32>
      %923 = arith.addf %899, %922 : vector<8x32xf32>
      %924 = vector.broadcast %77 : f32 to vector<8x32xf32>
      %925 = arith.mulf %924, %920 : vector<8x32xf32>
      %926 = arith.addf %902, %925 : vector<8x32xf32>
      %927 = vector.broadcast %85 : f32 to vector<8x32xf32>
      %928 = arith.mulf %927, %920 : vector<8x32xf32>
      %929 = arith.addf %905, %928 : vector<8x32xf32>
      %930 = vector.broadcast %93 : f32 to vector<8x32xf32>
      %931 = arith.mulf %930, %920 : vector<8x32xf32>
      %932 = arith.addf %908, %931 : vector<8x32xf32>
      %933 = vector.broadcast %44 : f32 to vector<8x32xf32>
      %934 = arith.mulf %933, %875 : vector<8x32xf32>
      %935 = vector.broadcast %45 : f32 to vector<8x32xf32>
      %936 = arith.mulf %935, %878 : vector<8x32xf32>
      %937 = arith.addf %934, %936 : vector<8x32xf32>
      %938 = vector.broadcast %46 : f32 to vector<8x32xf32>
      %939 = arith.mulf %938, %881 : vector<8x32xf32>
      %940 = arith.addf %937, %939 : vector<8x32xf32>
      %941 = vector.broadcast %47 : f32 to vector<8x32xf32>
      %942 = arith.mulf %941, %884 : vector<8x32xf32>
      %943 = arith.addf %940, %942 : vector<8x32xf32>
      %944 = math.tanh %943 : vector<8x32xf32>
      %945 = vector.broadcast %70 : f32 to vector<8x32xf32>
      %946 = arith.mulf %945, %944 : vector<8x32xf32>
      %947 = arith.addf %923, %946 : vector<8x32xf32>
      %948 = vector.broadcast %78 : f32 to vector<8x32xf32>
      %949 = arith.mulf %948, %944 : vector<8x32xf32>
      %950 = arith.addf %926, %949 : vector<8x32xf32>
      %951 = vector.broadcast %86 : f32 to vector<8x32xf32>
      %952 = arith.mulf %951, %944 : vector<8x32xf32>
      %953 = arith.addf %929, %952 : vector<8x32xf32>
      %954 = vector.broadcast %94 : f32 to vector<8x32xf32>
      %955 = arith.mulf %954, %944 : vector<8x32xf32>
      %956 = arith.addf %932, %955 : vector<8x32xf32>
      %957 = vector.broadcast %48 : f32 to vector<8x32xf32>
      %958 = arith.mulf %957, %875 : vector<8x32xf32>
      %959 = vector.broadcast %49 : f32 to vector<8x32xf32>
      %960 = arith.mulf %959, %878 : vector<8x32xf32>
      %961 = arith.addf %958, %960 : vector<8x32xf32>
      %962 = vector.broadcast %50 : f32 to vector<8x32xf32>
      %963 = arith.mulf %962, %881 : vector<8x32xf32>
      %964 = arith.addf %961, %963 : vector<8x32xf32>
      %965 = vector.broadcast %51 : f32 to vector<8x32xf32>
      %966 = arith.mulf %965, %884 : vector<8x32xf32>
      %967 = arith.addf %964, %966 : vector<8x32xf32>
      %968 = math.tanh %967 : vector<8x32xf32>
      %969 = vector.broadcast %71 : f32 to vector<8x32xf32>
      %970 = arith.mulf %969, %968 : vector<8x32xf32>
      %971 = arith.addf %947, %970 : vector<8x32xf32>
      %972 = vector.broadcast %79 : f32 to vector<8x32xf32>
      %973 = arith.mulf %972, %968 : vector<8x32xf32>
      %974 = arith.addf %950, %973 : vector<8x32xf32>
      %975 = vector.broadcast %87 : f32 to vector<8x32xf32>
      %976 = arith.mulf %975, %968 : vector<8x32xf32>
      %977 = arith.addf %953, %976 : vector<8x32xf32>
      %978 = vector.broadcast %95 : f32 to vector<8x32xf32>
      %979 = arith.mulf %978, %968 : vector<8x32xf32>
      %980 = arith.addf %956, %979 : vector<8x32xf32>
      %981 = vector.broadcast %52 : f32 to vector<8x32xf32>
      %982 = arith.mulf %981, %875 : vector<8x32xf32>
      %983 = vector.broadcast %53 : f32 to vector<8x32xf32>
      %984 = arith.mulf %983, %878 : vector<8x32xf32>
      %985 = arith.addf %982, %984 : vector<8x32xf32>
      %986 = vector.broadcast %54 : f32 to vector<8x32xf32>
      %987 = arith.mulf %986, %881 : vector<8x32xf32>
      %988 = arith.addf %985, %987 : vector<8x32xf32>
      %989 = vector.broadcast %55 : f32 to vector<8x32xf32>
      %990 = arith.mulf %989, %884 : vector<8x32xf32>
      %991 = arith.addf %988, %990 : vector<8x32xf32>
      %992 = math.tanh %991 : vector<8x32xf32>
      %993 = vector.broadcast %72 : f32 to vector<8x32xf32>
      %994 = arith.mulf %993, %992 : vector<8x32xf32>
      %995 = arith.addf %971, %994 : vector<8x32xf32>
      %996 = vector.broadcast %80 : f32 to vector<8x32xf32>
      %997 = arith.mulf %996, %992 : vector<8x32xf32>
      %998 = arith.addf %974, %997 : vector<8x32xf32>
      %999 = vector.broadcast %88 : f32 to vector<8x32xf32>
      %1000 = arith.mulf %999, %992 : vector<8x32xf32>
      %1001 = arith.addf %977, %1000 : vector<8x32xf32>
      %1002 = vector.broadcast %96 : f32 to vector<8x32xf32>
      %1003 = arith.mulf %1002, %992 : vector<8x32xf32>
      %1004 = arith.addf %980, %1003 : vector<8x32xf32>
      %1005 = vector.broadcast %56 : f32 to vector<8x32xf32>
      %1006 = arith.mulf %1005, %875 : vector<8x32xf32>
      %1007 = vector.broadcast %57 : f32 to vector<8x32xf32>
      %1008 = arith.mulf %1007, %878 : vector<8x32xf32>
      %1009 = arith.addf %1006, %1008 : vector<8x32xf32>
      %1010 = vector.broadcast %58 : f32 to vector<8x32xf32>
      %1011 = arith.mulf %1010, %881 : vector<8x32xf32>
      %1012 = arith.addf %1009, %1011 : vector<8x32xf32>
      %1013 = vector.broadcast %59 : f32 to vector<8x32xf32>
      %1014 = arith.mulf %1013, %884 : vector<8x32xf32>
      %1015 = arith.addf %1012, %1014 : vector<8x32xf32>
      %1016 = math.tanh %1015 : vector<8x32xf32>
      %1017 = vector.broadcast %73 : f32 to vector<8x32xf32>
      %1018 = arith.mulf %1017, %1016 : vector<8x32xf32>
      %1019 = arith.addf %995, %1018 : vector<8x32xf32>
      %1020 = vector.broadcast %81 : f32 to vector<8x32xf32>
      %1021 = arith.mulf %1020, %1016 : vector<8x32xf32>
      %1022 = arith.addf %998, %1021 : vector<8x32xf32>
      %1023 = vector.broadcast %89 : f32 to vector<8x32xf32>
      %1024 = arith.mulf %1023, %1016 : vector<8x32xf32>
      %1025 = arith.addf %1001, %1024 : vector<8x32xf32>
      %1026 = vector.broadcast %97 : f32 to vector<8x32xf32>
      %1027 = arith.mulf %1026, %1016 : vector<8x32xf32>
      %1028 = arith.addf %1004, %1027 : vector<8x32xf32>
      %1029 = vector.broadcast %60 : f32 to vector<8x32xf32>
      %1030 = arith.mulf %1029, %875 : vector<8x32xf32>
      %1031 = vector.broadcast %61 : f32 to vector<8x32xf32>
      %1032 = arith.mulf %1031, %878 : vector<8x32xf32>
      %1033 = arith.addf %1030, %1032 : vector<8x32xf32>
      %1034 = vector.broadcast %62 : f32 to vector<8x32xf32>
      %1035 = arith.mulf %1034, %881 : vector<8x32xf32>
      %1036 = arith.addf %1033, %1035 : vector<8x32xf32>
      %1037 = vector.broadcast %63 : f32 to vector<8x32xf32>
      %1038 = arith.mulf %1037, %884 : vector<8x32xf32>
      %1039 = arith.addf %1036, %1038 : vector<8x32xf32>
      %1040 = math.tanh %1039 : vector<8x32xf32>
      %1041 = vector.broadcast %74 : f32 to vector<8x32xf32>
      %1042 = arith.mulf %1041, %1040 : vector<8x32xf32>
      %1043 = arith.addf %1019, %1042 : vector<8x32xf32>
      %1044 = vector.broadcast %82 : f32 to vector<8x32xf32>
      %1045 = arith.mulf %1044, %1040 : vector<8x32xf32>
      %1046 = arith.addf %1022, %1045 : vector<8x32xf32>
      %1047 = vector.broadcast %90 : f32 to vector<8x32xf32>
      %1048 = arith.mulf %1047, %1040 : vector<8x32xf32>
      %1049 = arith.addf %1025, %1048 : vector<8x32xf32>
      %1050 = vector.broadcast %98 : f32 to vector<8x32xf32>
      %1051 = arith.mulf %1050, %1040 : vector<8x32xf32>
      %1052 = arith.addf %1028, %1051 : vector<8x32xf32>
      %1053 = vector.broadcast %64 : f32 to vector<8x32xf32>
      %1054 = arith.mulf %1053, %875 : vector<8x32xf32>
      %1055 = vector.broadcast %65 : f32 to vector<8x32xf32>
      %1056 = arith.mulf %1055, %878 : vector<8x32xf32>
      %1057 = arith.addf %1054, %1056 : vector<8x32xf32>
      %1058 = vector.broadcast %66 : f32 to vector<8x32xf32>
      %1059 = arith.mulf %1058, %881 : vector<8x32xf32>
      %1060 = arith.addf %1057, %1059 : vector<8x32xf32>
      %1061 = vector.broadcast %67 : f32 to vector<8x32xf32>
      %1062 = arith.mulf %1061, %884 : vector<8x32xf32>
      %1063 = arith.addf %1060, %1062 : vector<8x32xf32>
      %1064 = math.tanh %1063 : vector<8x32xf32>
      %1065 = vector.broadcast %75 : f32 to vector<8x32xf32>
      %1066 = arith.mulf %1065, %1064 : vector<8x32xf32>
      %1067 = arith.addf %1043, %1066 : vector<8x32xf32>
      %1068 = vector.broadcast %83 : f32 to vector<8x32xf32>
      %1069 = arith.mulf %1068, %1064 : vector<8x32xf32>
      %1070 = arith.addf %1046, %1069 : vector<8x32xf32>
      %1071 = vector.broadcast %91 : f32 to vector<8x32xf32>
      %1072 = arith.mulf %1071, %1064 : vector<8x32xf32>
      %1073 = arith.addf %1049, %1072 : vector<8x32xf32>
      %1074 = vector.broadcast %99 : f32 to vector<8x32xf32>
      %1075 = arith.mulf %1074, %1064 : vector<8x32xf32>
      %1076 = arith.addf %1052, %1075 : vector<8x32xf32>
      %1077 = vector.broadcast %36 : f32 to vector<8x32xf32>
      %1078 = arith.mulf %1077, %1067 : vector<8x32xf32>
      %1079 = vector.broadcast %37 : f32 to vector<8x32xf32>
      %1080 = arith.mulf %1079, %1070 : vector<8x32xf32>
      %1081 = arith.addf %1078, %1080 : vector<8x32xf32>
      %1082 = vector.broadcast %38 : f32 to vector<8x32xf32>
      %1083 = arith.mulf %1082, %1073 : vector<8x32xf32>
      %1084 = arith.addf %1081, %1083 : vector<8x32xf32>
      %1085 = vector.broadcast %39 : f32 to vector<8x32xf32>
      %1086 = arith.mulf %1085, %1076 : vector<8x32xf32>
      %1087 = arith.addf %1084, %1086 : vector<8x32xf32>
      %1088 = math.tanh %1087 : vector<8x32xf32>
      %1089 = vector.broadcast %68 : f32 to vector<8x32xf32>
      %1090 = arith.mulf %1089, %1088 : vector<8x32xf32>
      %1091 = arith.addf %1067, %1090 : vector<8x32xf32>
      %1092 = vector.broadcast %76 : f32 to vector<8x32xf32>
      %1093 = arith.mulf %1092, %1088 : vector<8x32xf32>
      %1094 = arith.addf %1070, %1093 : vector<8x32xf32>
      %1095 = vector.broadcast %84 : f32 to vector<8x32xf32>
      %1096 = arith.mulf %1095, %1088 : vector<8x32xf32>
      %1097 = arith.addf %1073, %1096 : vector<8x32xf32>
      %1098 = vector.broadcast %92 : f32 to vector<8x32xf32>
      %1099 = arith.mulf %1098, %1088 : vector<8x32xf32>
      %1100 = arith.addf %1076, %1099 : vector<8x32xf32>
      %1101 = vector.broadcast %40 : f32 to vector<8x32xf32>
      %1102 = arith.mulf %1101, %1067 : vector<8x32xf32>
      %1103 = vector.broadcast %41 : f32 to vector<8x32xf32>
      %1104 = arith.mulf %1103, %1070 : vector<8x32xf32>
      %1105 = arith.addf %1102, %1104 : vector<8x32xf32>
      %1106 = vector.broadcast %42 : f32 to vector<8x32xf32>
      %1107 = arith.mulf %1106, %1073 : vector<8x32xf32>
      %1108 = arith.addf %1105, %1107 : vector<8x32xf32>
      %1109 = vector.broadcast %43 : f32 to vector<8x32xf32>
      %1110 = arith.mulf %1109, %1076 : vector<8x32xf32>
      %1111 = arith.addf %1108, %1110 : vector<8x32xf32>
      %1112 = math.tanh %1111 : vector<8x32xf32>
      %1113 = vector.broadcast %69 : f32 to vector<8x32xf32>
      %1114 = arith.mulf %1113, %1112 : vector<8x32xf32>
      %1115 = arith.addf %1091, %1114 : vector<8x32xf32>
      %1116 = vector.broadcast %77 : f32 to vector<8x32xf32>
      %1117 = arith.mulf %1116, %1112 : vector<8x32xf32>
      %1118 = arith.addf %1094, %1117 : vector<8x32xf32>
      %1119 = vector.broadcast %85 : f32 to vector<8x32xf32>
      %1120 = arith.mulf %1119, %1112 : vector<8x32xf32>
      %1121 = arith.addf %1097, %1120 : vector<8x32xf32>
      %1122 = vector.broadcast %93 : f32 to vector<8x32xf32>
      %1123 = arith.mulf %1122, %1112 : vector<8x32xf32>
      %1124 = arith.addf %1100, %1123 : vector<8x32xf32>
      %1125 = vector.broadcast %44 : f32 to vector<8x32xf32>
      %1126 = arith.mulf %1125, %1067 : vector<8x32xf32>
      %1127 = vector.broadcast %45 : f32 to vector<8x32xf32>
      %1128 = arith.mulf %1127, %1070 : vector<8x32xf32>
      %1129 = arith.addf %1126, %1128 : vector<8x32xf32>
      %1130 = vector.broadcast %46 : f32 to vector<8x32xf32>
      %1131 = arith.mulf %1130, %1073 : vector<8x32xf32>
      %1132 = arith.addf %1129, %1131 : vector<8x32xf32>
      %1133 = vector.broadcast %47 : f32 to vector<8x32xf32>
      %1134 = arith.mulf %1133, %1076 : vector<8x32xf32>
      %1135 = arith.addf %1132, %1134 : vector<8x32xf32>
      %1136 = math.tanh %1135 : vector<8x32xf32>
      %1137 = vector.broadcast %70 : f32 to vector<8x32xf32>
      %1138 = arith.mulf %1137, %1136 : vector<8x32xf32>
      %1139 = arith.addf %1115, %1138 : vector<8x32xf32>
      %1140 = vector.broadcast %78 : f32 to vector<8x32xf32>
      %1141 = arith.mulf %1140, %1136 : vector<8x32xf32>
      %1142 = arith.addf %1118, %1141 : vector<8x32xf32>
      %1143 = vector.broadcast %86 : f32 to vector<8x32xf32>
      %1144 = arith.mulf %1143, %1136 : vector<8x32xf32>
      %1145 = arith.addf %1121, %1144 : vector<8x32xf32>
      %1146 = vector.broadcast %94 : f32 to vector<8x32xf32>
      %1147 = arith.mulf %1146, %1136 : vector<8x32xf32>
      %1148 = arith.addf %1124, %1147 : vector<8x32xf32>
      %1149 = vector.broadcast %48 : f32 to vector<8x32xf32>
      %1150 = arith.mulf %1149, %1067 : vector<8x32xf32>
      %1151 = vector.broadcast %49 : f32 to vector<8x32xf32>
      %1152 = arith.mulf %1151, %1070 : vector<8x32xf32>
      %1153 = arith.addf %1150, %1152 : vector<8x32xf32>
      %1154 = vector.broadcast %50 : f32 to vector<8x32xf32>
      %1155 = arith.mulf %1154, %1073 : vector<8x32xf32>
      %1156 = arith.addf %1153, %1155 : vector<8x32xf32>
      %1157 = vector.broadcast %51 : f32 to vector<8x32xf32>
      %1158 = arith.mulf %1157, %1076 : vector<8x32xf32>
      %1159 = arith.addf %1156, %1158 : vector<8x32xf32>
      %1160 = math.tanh %1159 : vector<8x32xf32>
      %1161 = vector.broadcast %71 : f32 to vector<8x32xf32>
      %1162 = arith.mulf %1161, %1160 : vector<8x32xf32>
      %1163 = arith.addf %1139, %1162 : vector<8x32xf32>
      %1164 = vector.broadcast %79 : f32 to vector<8x32xf32>
      %1165 = arith.mulf %1164, %1160 : vector<8x32xf32>
      %1166 = arith.addf %1142, %1165 : vector<8x32xf32>
      %1167 = vector.broadcast %87 : f32 to vector<8x32xf32>
      %1168 = arith.mulf %1167, %1160 : vector<8x32xf32>
      %1169 = arith.addf %1145, %1168 : vector<8x32xf32>
      %1170 = vector.broadcast %95 : f32 to vector<8x32xf32>
      %1171 = arith.mulf %1170, %1160 : vector<8x32xf32>
      %1172 = arith.addf %1148, %1171 : vector<8x32xf32>
      %1173 = vector.broadcast %52 : f32 to vector<8x32xf32>
      %1174 = arith.mulf %1173, %1067 : vector<8x32xf32>
      %1175 = vector.broadcast %53 : f32 to vector<8x32xf32>
      %1176 = arith.mulf %1175, %1070 : vector<8x32xf32>
      %1177 = arith.addf %1174, %1176 : vector<8x32xf32>
      %1178 = vector.broadcast %54 : f32 to vector<8x32xf32>
      %1179 = arith.mulf %1178, %1073 : vector<8x32xf32>
      %1180 = arith.addf %1177, %1179 : vector<8x32xf32>
      %1181 = vector.broadcast %55 : f32 to vector<8x32xf32>
      %1182 = arith.mulf %1181, %1076 : vector<8x32xf32>
      %1183 = arith.addf %1180, %1182 : vector<8x32xf32>
      %1184 = math.tanh %1183 : vector<8x32xf32>
      %1185 = vector.broadcast %72 : f32 to vector<8x32xf32>
      %1186 = arith.mulf %1185, %1184 : vector<8x32xf32>
      %1187 = arith.addf %1163, %1186 : vector<8x32xf32>
      %1188 = vector.broadcast %80 : f32 to vector<8x32xf32>
      %1189 = arith.mulf %1188, %1184 : vector<8x32xf32>
      %1190 = arith.addf %1166, %1189 : vector<8x32xf32>
      %1191 = vector.broadcast %88 : f32 to vector<8x32xf32>
      %1192 = arith.mulf %1191, %1184 : vector<8x32xf32>
      %1193 = arith.addf %1169, %1192 : vector<8x32xf32>
      %1194 = vector.broadcast %96 : f32 to vector<8x32xf32>
      %1195 = arith.mulf %1194, %1184 : vector<8x32xf32>
      %1196 = arith.addf %1172, %1195 : vector<8x32xf32>
      %1197 = vector.broadcast %56 : f32 to vector<8x32xf32>
      %1198 = arith.mulf %1197, %1067 : vector<8x32xf32>
      %1199 = vector.broadcast %57 : f32 to vector<8x32xf32>
      %1200 = arith.mulf %1199, %1070 : vector<8x32xf32>
      %1201 = arith.addf %1198, %1200 : vector<8x32xf32>
      %1202 = vector.broadcast %58 : f32 to vector<8x32xf32>
      %1203 = arith.mulf %1202, %1073 : vector<8x32xf32>
      %1204 = arith.addf %1201, %1203 : vector<8x32xf32>
      %1205 = vector.broadcast %59 : f32 to vector<8x32xf32>
      %1206 = arith.mulf %1205, %1076 : vector<8x32xf32>
      %1207 = arith.addf %1204, %1206 : vector<8x32xf32>
      %1208 = math.tanh %1207 : vector<8x32xf32>
      %1209 = vector.broadcast %73 : f32 to vector<8x32xf32>
      %1210 = arith.mulf %1209, %1208 : vector<8x32xf32>
      %1211 = arith.addf %1187, %1210 : vector<8x32xf32>
      %1212 = vector.broadcast %81 : f32 to vector<8x32xf32>
      %1213 = arith.mulf %1212, %1208 : vector<8x32xf32>
      %1214 = arith.addf %1190, %1213 : vector<8x32xf32>
      %1215 = vector.broadcast %89 : f32 to vector<8x32xf32>
      %1216 = arith.mulf %1215, %1208 : vector<8x32xf32>
      %1217 = arith.addf %1193, %1216 : vector<8x32xf32>
      %1218 = vector.broadcast %97 : f32 to vector<8x32xf32>
      %1219 = arith.mulf %1218, %1208 : vector<8x32xf32>
      %1220 = arith.addf %1196, %1219 : vector<8x32xf32>
      %1221 = vector.broadcast %60 : f32 to vector<8x32xf32>
      %1222 = arith.mulf %1221, %1067 : vector<8x32xf32>
      %1223 = vector.broadcast %61 : f32 to vector<8x32xf32>
      %1224 = arith.mulf %1223, %1070 : vector<8x32xf32>
      %1225 = arith.addf %1222, %1224 : vector<8x32xf32>
      %1226 = vector.broadcast %62 : f32 to vector<8x32xf32>
      %1227 = arith.mulf %1226, %1073 : vector<8x32xf32>
      %1228 = arith.addf %1225, %1227 : vector<8x32xf32>
      %1229 = vector.broadcast %63 : f32 to vector<8x32xf32>
      %1230 = arith.mulf %1229, %1076 : vector<8x32xf32>
      %1231 = arith.addf %1228, %1230 : vector<8x32xf32>
      %1232 = math.tanh %1231 : vector<8x32xf32>
      %1233 = vector.broadcast %74 : f32 to vector<8x32xf32>
      %1234 = arith.mulf %1233, %1232 : vector<8x32xf32>
      %1235 = arith.addf %1211, %1234 : vector<8x32xf32>
      %1236 = vector.broadcast %82 : f32 to vector<8x32xf32>
      %1237 = arith.mulf %1236, %1232 : vector<8x32xf32>
      %1238 = arith.addf %1214, %1237 : vector<8x32xf32>
      %1239 = vector.broadcast %90 : f32 to vector<8x32xf32>
      %1240 = arith.mulf %1239, %1232 : vector<8x32xf32>
      %1241 = arith.addf %1217, %1240 : vector<8x32xf32>
      %1242 = vector.broadcast %98 : f32 to vector<8x32xf32>
      %1243 = arith.mulf %1242, %1232 : vector<8x32xf32>
      %1244 = arith.addf %1220, %1243 : vector<8x32xf32>
      %1245 = vector.broadcast %64 : f32 to vector<8x32xf32>
      %1246 = arith.mulf %1245, %1067 : vector<8x32xf32>
      %1247 = vector.broadcast %65 : f32 to vector<8x32xf32>
      %1248 = arith.mulf %1247, %1070 : vector<8x32xf32>
      %1249 = arith.addf %1246, %1248 : vector<8x32xf32>
      %1250 = vector.broadcast %66 : f32 to vector<8x32xf32>
      %1251 = arith.mulf %1250, %1073 : vector<8x32xf32>
      %1252 = arith.addf %1249, %1251 : vector<8x32xf32>
      %1253 = vector.broadcast %67 : f32 to vector<8x32xf32>
      %1254 = arith.mulf %1253, %1076 : vector<8x32xf32>
      %1255 = arith.addf %1252, %1254 : vector<8x32xf32>
      %1256 = math.tanh %1255 : vector<8x32xf32>
      %1257 = vector.broadcast %75 : f32 to vector<8x32xf32>
      %1258 = arith.mulf %1257, %1256 : vector<8x32xf32>
      %1259 = arith.addf %1235, %1258 : vector<8x32xf32>
      %1260 = vector.broadcast %83 : f32 to vector<8x32xf32>
      %1261 = arith.mulf %1260, %1256 : vector<8x32xf32>
      %1262 = arith.addf %1238, %1261 : vector<8x32xf32>
      %1263 = vector.broadcast %91 : f32 to vector<8x32xf32>
      %1264 = arith.mulf %1263, %1256 : vector<8x32xf32>
      %1265 = arith.addf %1241, %1264 : vector<8x32xf32>
      %1266 = vector.broadcast %99 : f32 to vector<8x32xf32>
      %1267 = arith.mulf %1266, %1256 : vector<8x32xf32>
      %1268 = arith.addf %1244, %1267 : vector<8x32xf32>
      %1269 = vector.broadcast %36 : f32 to vector<8x32xf32>
      %1270 = arith.mulf %1269, %1259 : vector<8x32xf32>
      %1271 = vector.broadcast %37 : f32 to vector<8x32xf32>
      %1272 = arith.mulf %1271, %1262 : vector<8x32xf32>
      %1273 = arith.addf %1270, %1272 : vector<8x32xf32>
      %1274 = vector.broadcast %38 : f32 to vector<8x32xf32>
      %1275 = arith.mulf %1274, %1265 : vector<8x32xf32>
      %1276 = arith.addf %1273, %1275 : vector<8x32xf32>
      %1277 = vector.broadcast %39 : f32 to vector<8x32xf32>
      %1278 = arith.mulf %1277, %1268 : vector<8x32xf32>
      %1279 = arith.addf %1276, %1278 : vector<8x32xf32>
      %1280 = math.tanh %1279 : vector<8x32xf32>
      %1281 = vector.broadcast %68 : f32 to vector<8x32xf32>
      %1282 = arith.mulf %1281, %1280 : vector<8x32xf32>
      %1283 = arith.addf %1259, %1282 : vector<8x32xf32>
      %1284 = vector.broadcast %76 : f32 to vector<8x32xf32>
      %1285 = arith.mulf %1284, %1280 : vector<8x32xf32>
      %1286 = arith.addf %1262, %1285 : vector<8x32xf32>
      %1287 = vector.broadcast %84 : f32 to vector<8x32xf32>
      %1288 = arith.mulf %1287, %1280 : vector<8x32xf32>
      %1289 = arith.addf %1265, %1288 : vector<8x32xf32>
      %1290 = vector.broadcast %92 : f32 to vector<8x32xf32>
      %1291 = arith.mulf %1290, %1280 : vector<8x32xf32>
      %1292 = arith.addf %1268, %1291 : vector<8x32xf32>
      %1293 = vector.broadcast %40 : f32 to vector<8x32xf32>
      %1294 = arith.mulf %1293, %1259 : vector<8x32xf32>
      %1295 = vector.broadcast %41 : f32 to vector<8x32xf32>
      %1296 = arith.mulf %1295, %1262 : vector<8x32xf32>
      %1297 = arith.addf %1294, %1296 : vector<8x32xf32>
      %1298 = vector.broadcast %42 : f32 to vector<8x32xf32>
      %1299 = arith.mulf %1298, %1265 : vector<8x32xf32>
      %1300 = arith.addf %1297, %1299 : vector<8x32xf32>
      %1301 = vector.broadcast %43 : f32 to vector<8x32xf32>
      %1302 = arith.mulf %1301, %1268 : vector<8x32xf32>
      %1303 = arith.addf %1300, %1302 : vector<8x32xf32>
      %1304 = math.tanh %1303 : vector<8x32xf32>
      %1305 = vector.broadcast %69 : f32 to vector<8x32xf32>
      %1306 = arith.mulf %1305, %1304 : vector<8x32xf32>
      %1307 = arith.addf %1283, %1306 : vector<8x32xf32>
      %1308 = vector.broadcast %77 : f32 to vector<8x32xf32>
      %1309 = arith.mulf %1308, %1304 : vector<8x32xf32>
      %1310 = arith.addf %1286, %1309 : vector<8x32xf32>
      %1311 = vector.broadcast %85 : f32 to vector<8x32xf32>
      %1312 = arith.mulf %1311, %1304 : vector<8x32xf32>
      %1313 = arith.addf %1289, %1312 : vector<8x32xf32>
      %1314 = vector.broadcast %93 : f32 to vector<8x32xf32>
      %1315 = arith.mulf %1314, %1304 : vector<8x32xf32>
      %1316 = arith.addf %1292, %1315 : vector<8x32xf32>
      %1317 = vector.broadcast %44 : f32 to vector<8x32xf32>
      %1318 = arith.mulf %1317, %1259 : vector<8x32xf32>
      %1319 = vector.broadcast %45 : f32 to vector<8x32xf32>
      %1320 = arith.mulf %1319, %1262 : vector<8x32xf32>
      %1321 = arith.addf %1318, %1320 : vector<8x32xf32>
      %1322 = vector.broadcast %46 : f32 to vector<8x32xf32>
      %1323 = arith.mulf %1322, %1265 : vector<8x32xf32>
      %1324 = arith.addf %1321, %1323 : vector<8x32xf32>
      %1325 = vector.broadcast %47 : f32 to vector<8x32xf32>
      %1326 = arith.mulf %1325, %1268 : vector<8x32xf32>
      %1327 = arith.addf %1324, %1326 : vector<8x32xf32>
      %1328 = math.tanh %1327 : vector<8x32xf32>
      %1329 = vector.broadcast %70 : f32 to vector<8x32xf32>
      %1330 = arith.mulf %1329, %1328 : vector<8x32xf32>
      %1331 = arith.addf %1307, %1330 : vector<8x32xf32>
      %1332 = vector.broadcast %78 : f32 to vector<8x32xf32>
      %1333 = arith.mulf %1332, %1328 : vector<8x32xf32>
      %1334 = arith.addf %1310, %1333 : vector<8x32xf32>
      %1335 = vector.broadcast %86 : f32 to vector<8x32xf32>
      %1336 = arith.mulf %1335, %1328 : vector<8x32xf32>
      %1337 = arith.addf %1313, %1336 : vector<8x32xf32>
      %1338 = vector.broadcast %94 : f32 to vector<8x32xf32>
      %1339 = arith.mulf %1338, %1328 : vector<8x32xf32>
      %1340 = arith.addf %1316, %1339 : vector<8x32xf32>
      %1341 = vector.broadcast %48 : f32 to vector<8x32xf32>
      %1342 = arith.mulf %1341, %1259 : vector<8x32xf32>
      %1343 = vector.broadcast %49 : f32 to vector<8x32xf32>
      %1344 = arith.mulf %1343, %1262 : vector<8x32xf32>
      %1345 = arith.addf %1342, %1344 : vector<8x32xf32>
      %1346 = vector.broadcast %50 : f32 to vector<8x32xf32>
      %1347 = arith.mulf %1346, %1265 : vector<8x32xf32>
      %1348 = arith.addf %1345, %1347 : vector<8x32xf32>
      %1349 = vector.broadcast %51 : f32 to vector<8x32xf32>
      %1350 = arith.mulf %1349, %1268 : vector<8x32xf32>
      %1351 = arith.addf %1348, %1350 : vector<8x32xf32>
      %1352 = math.tanh %1351 : vector<8x32xf32>
      %1353 = vector.broadcast %71 : f32 to vector<8x32xf32>
      %1354 = arith.mulf %1353, %1352 : vector<8x32xf32>
      %1355 = arith.addf %1331, %1354 : vector<8x32xf32>
      %1356 = vector.broadcast %79 : f32 to vector<8x32xf32>
      %1357 = arith.mulf %1356, %1352 : vector<8x32xf32>
      %1358 = arith.addf %1334, %1357 : vector<8x32xf32>
      %1359 = vector.broadcast %87 : f32 to vector<8x32xf32>
      %1360 = arith.mulf %1359, %1352 : vector<8x32xf32>
      %1361 = arith.addf %1337, %1360 : vector<8x32xf32>
      %1362 = vector.broadcast %95 : f32 to vector<8x32xf32>
      %1363 = arith.mulf %1362, %1352 : vector<8x32xf32>
      %1364 = arith.addf %1340, %1363 : vector<8x32xf32>
      %1365 = vector.broadcast %52 : f32 to vector<8x32xf32>
      %1366 = arith.mulf %1365, %1259 : vector<8x32xf32>
      %1367 = vector.broadcast %53 : f32 to vector<8x32xf32>
      %1368 = arith.mulf %1367, %1262 : vector<8x32xf32>
      %1369 = arith.addf %1366, %1368 : vector<8x32xf32>
      %1370 = vector.broadcast %54 : f32 to vector<8x32xf32>
      %1371 = arith.mulf %1370, %1265 : vector<8x32xf32>
      %1372 = arith.addf %1369, %1371 : vector<8x32xf32>
      %1373 = vector.broadcast %55 : f32 to vector<8x32xf32>
      %1374 = arith.mulf %1373, %1268 : vector<8x32xf32>
      %1375 = arith.addf %1372, %1374 : vector<8x32xf32>
      %1376 = math.tanh %1375 : vector<8x32xf32>
      %1377 = vector.broadcast %72 : f32 to vector<8x32xf32>
      %1378 = arith.mulf %1377, %1376 : vector<8x32xf32>
      %1379 = arith.addf %1355, %1378 : vector<8x32xf32>
      %1380 = vector.broadcast %80 : f32 to vector<8x32xf32>
      %1381 = arith.mulf %1380, %1376 : vector<8x32xf32>
      %1382 = arith.addf %1358, %1381 : vector<8x32xf32>
      %1383 = vector.broadcast %88 : f32 to vector<8x32xf32>
      %1384 = arith.mulf %1383, %1376 : vector<8x32xf32>
      %1385 = arith.addf %1361, %1384 : vector<8x32xf32>
      %1386 = vector.broadcast %96 : f32 to vector<8x32xf32>
      %1387 = arith.mulf %1386, %1376 : vector<8x32xf32>
      %1388 = arith.addf %1364, %1387 : vector<8x32xf32>
      %1389 = vector.broadcast %56 : f32 to vector<8x32xf32>
      %1390 = arith.mulf %1389, %1259 : vector<8x32xf32>
      %1391 = vector.broadcast %57 : f32 to vector<8x32xf32>
      %1392 = arith.mulf %1391, %1262 : vector<8x32xf32>
      %1393 = arith.addf %1390, %1392 : vector<8x32xf32>
      %1394 = vector.broadcast %58 : f32 to vector<8x32xf32>
      %1395 = arith.mulf %1394, %1265 : vector<8x32xf32>
      %1396 = arith.addf %1393, %1395 : vector<8x32xf32>
      %1397 = vector.broadcast %59 : f32 to vector<8x32xf32>
      %1398 = arith.mulf %1397, %1268 : vector<8x32xf32>
      %1399 = arith.addf %1396, %1398 : vector<8x32xf32>
      %1400 = math.tanh %1399 : vector<8x32xf32>
      %1401 = vector.broadcast %73 : f32 to vector<8x32xf32>
      %1402 = arith.mulf %1401, %1400 : vector<8x32xf32>
      %1403 = arith.addf %1379, %1402 : vector<8x32xf32>
      %1404 = vector.broadcast %81 : f32 to vector<8x32xf32>
      %1405 = arith.mulf %1404, %1400 : vector<8x32xf32>
      %1406 = arith.addf %1382, %1405 : vector<8x32xf32>
      %1407 = vector.broadcast %89 : f32 to vector<8x32xf32>
      %1408 = arith.mulf %1407, %1400 : vector<8x32xf32>
      %1409 = arith.addf %1385, %1408 : vector<8x32xf32>
      %1410 = vector.broadcast %97 : f32 to vector<8x32xf32>
      %1411 = arith.mulf %1410, %1400 : vector<8x32xf32>
      %1412 = arith.addf %1388, %1411 : vector<8x32xf32>
      %1413 = vector.broadcast %60 : f32 to vector<8x32xf32>
      %1414 = arith.mulf %1413, %1259 : vector<8x32xf32>
      %1415 = vector.broadcast %61 : f32 to vector<8x32xf32>
      %1416 = arith.mulf %1415, %1262 : vector<8x32xf32>
      %1417 = arith.addf %1414, %1416 : vector<8x32xf32>
      %1418 = vector.broadcast %62 : f32 to vector<8x32xf32>
      %1419 = arith.mulf %1418, %1265 : vector<8x32xf32>
      %1420 = arith.addf %1417, %1419 : vector<8x32xf32>
      %1421 = vector.broadcast %63 : f32 to vector<8x32xf32>
      %1422 = arith.mulf %1421, %1268 : vector<8x32xf32>
      %1423 = arith.addf %1420, %1422 : vector<8x32xf32>
      %1424 = math.tanh %1423 : vector<8x32xf32>
      %1425 = vector.broadcast %74 : f32 to vector<8x32xf32>
      %1426 = arith.mulf %1425, %1424 : vector<8x32xf32>
      %1427 = arith.addf %1403, %1426 : vector<8x32xf32>
      %1428 = vector.broadcast %82 : f32 to vector<8x32xf32>
      %1429 = arith.mulf %1428, %1424 : vector<8x32xf32>
      %1430 = arith.addf %1406, %1429 : vector<8x32xf32>
      %1431 = vector.broadcast %90 : f32 to vector<8x32xf32>
      %1432 = arith.mulf %1431, %1424 : vector<8x32xf32>
      %1433 = arith.addf %1409, %1432 : vector<8x32xf32>
      %1434 = vector.broadcast %98 : f32 to vector<8x32xf32>
      %1435 = arith.mulf %1434, %1424 : vector<8x32xf32>
      %1436 = arith.addf %1412, %1435 : vector<8x32xf32>
      %1437 = vector.broadcast %64 : f32 to vector<8x32xf32>
      %1438 = arith.mulf %1437, %1259 : vector<8x32xf32>
      %1439 = vector.broadcast %65 : f32 to vector<8x32xf32>
      %1440 = arith.mulf %1439, %1262 : vector<8x32xf32>
      %1441 = arith.addf %1438, %1440 : vector<8x32xf32>
      %1442 = vector.broadcast %66 : f32 to vector<8x32xf32>
      %1443 = arith.mulf %1442, %1265 : vector<8x32xf32>
      %1444 = arith.addf %1441, %1443 : vector<8x32xf32>
      %1445 = vector.broadcast %67 : f32 to vector<8x32xf32>
      %1446 = arith.mulf %1445, %1268 : vector<8x32xf32>
      %1447 = arith.addf %1444, %1446 : vector<8x32xf32>
      %1448 = math.tanh %1447 : vector<8x32xf32>
      %1449 = vector.broadcast %75 : f32 to vector<8x32xf32>
      %1450 = arith.mulf %1449, %1448 : vector<8x32xf32>
      %1451 = arith.addf %1427, %1450 : vector<8x32xf32>
      %1452 = vector.broadcast %83 : f32 to vector<8x32xf32>
      %1453 = arith.mulf %1452, %1448 : vector<8x32xf32>
      %1454 = arith.addf %1430, %1453 : vector<8x32xf32>
      %1455 = vector.broadcast %91 : f32 to vector<8x32xf32>
      %1456 = arith.mulf %1455, %1448 : vector<8x32xf32>
      %1457 = arith.addf %1433, %1456 : vector<8x32xf32>
      %1458 = vector.broadcast %99 : f32 to vector<8x32xf32>
      %1459 = arith.mulf %1458, %1448 : vector<8x32xf32>
      %1460 = arith.addf %1436, %1459 : vector<8x32xf32>
      %1461 = vector.broadcast %36 : f32 to vector<8x32xf32>
      %1462 = arith.mulf %1461, %1451 : vector<8x32xf32>
      %1463 = vector.broadcast %37 : f32 to vector<8x32xf32>
      %1464 = arith.mulf %1463, %1454 : vector<8x32xf32>
      %1465 = arith.addf %1462, %1464 : vector<8x32xf32>
      %1466 = vector.broadcast %38 : f32 to vector<8x32xf32>
      %1467 = arith.mulf %1466, %1457 : vector<8x32xf32>
      %1468 = arith.addf %1465, %1467 : vector<8x32xf32>
      %1469 = vector.broadcast %39 : f32 to vector<8x32xf32>
      %1470 = arith.mulf %1469, %1460 : vector<8x32xf32>
      %1471 = arith.addf %1468, %1470 : vector<8x32xf32>
      %1472 = math.tanh %1471 : vector<8x32xf32>
      %1473 = vector.broadcast %68 : f32 to vector<8x32xf32>
      %1474 = arith.mulf %1473, %1472 : vector<8x32xf32>
      %1475 = arith.addf %1451, %1474 : vector<8x32xf32>
      %1476 = vector.broadcast %76 : f32 to vector<8x32xf32>
      %1477 = arith.mulf %1476, %1472 : vector<8x32xf32>
      %1478 = arith.addf %1454, %1477 : vector<8x32xf32>
      %1479 = vector.broadcast %84 : f32 to vector<8x32xf32>
      %1480 = arith.mulf %1479, %1472 : vector<8x32xf32>
      %1481 = arith.addf %1457, %1480 : vector<8x32xf32>
      %1482 = vector.broadcast %92 : f32 to vector<8x32xf32>
      %1483 = arith.mulf %1482, %1472 : vector<8x32xf32>
      %1484 = arith.addf %1460, %1483 : vector<8x32xf32>
      %1485 = vector.broadcast %40 : f32 to vector<8x32xf32>
      %1486 = arith.mulf %1485, %1451 : vector<8x32xf32>
      %1487 = vector.broadcast %41 : f32 to vector<8x32xf32>
      %1488 = arith.mulf %1487, %1454 : vector<8x32xf32>
      %1489 = arith.addf %1486, %1488 : vector<8x32xf32>
      %1490 = vector.broadcast %42 : f32 to vector<8x32xf32>
      %1491 = arith.mulf %1490, %1457 : vector<8x32xf32>
      %1492 = arith.addf %1489, %1491 : vector<8x32xf32>
      %1493 = vector.broadcast %43 : f32 to vector<8x32xf32>
      %1494 = arith.mulf %1493, %1460 : vector<8x32xf32>
      %1495 = arith.addf %1492, %1494 : vector<8x32xf32>
      %1496 = math.tanh %1495 : vector<8x32xf32>
      %1497 = vector.broadcast %69 : f32 to vector<8x32xf32>
      %1498 = arith.mulf %1497, %1496 : vector<8x32xf32>
      %1499 = arith.addf %1475, %1498 : vector<8x32xf32>
      %1500 = vector.broadcast %77 : f32 to vector<8x32xf32>
      %1501 = arith.mulf %1500, %1496 : vector<8x32xf32>
      %1502 = arith.addf %1478, %1501 : vector<8x32xf32>
      %1503 = vector.broadcast %85 : f32 to vector<8x32xf32>
      %1504 = arith.mulf %1503, %1496 : vector<8x32xf32>
      %1505 = arith.addf %1481, %1504 : vector<8x32xf32>
      %1506 = vector.broadcast %93 : f32 to vector<8x32xf32>
      %1507 = arith.mulf %1506, %1496 : vector<8x32xf32>
      %1508 = arith.addf %1484, %1507 : vector<8x32xf32>
      %1509 = vector.broadcast %44 : f32 to vector<8x32xf32>
      %1510 = arith.mulf %1509, %1451 : vector<8x32xf32>
      %1511 = vector.broadcast %45 : f32 to vector<8x32xf32>
      %1512 = arith.mulf %1511, %1454 : vector<8x32xf32>
      %1513 = arith.addf %1510, %1512 : vector<8x32xf32>
      %1514 = vector.broadcast %46 : f32 to vector<8x32xf32>
      %1515 = arith.mulf %1514, %1457 : vector<8x32xf32>
      %1516 = arith.addf %1513, %1515 : vector<8x32xf32>
      %1517 = vector.broadcast %47 : f32 to vector<8x32xf32>
      %1518 = arith.mulf %1517, %1460 : vector<8x32xf32>
      %1519 = arith.addf %1516, %1518 : vector<8x32xf32>
      %1520 = math.tanh %1519 : vector<8x32xf32>
      %1521 = vector.broadcast %70 : f32 to vector<8x32xf32>
      %1522 = arith.mulf %1521, %1520 : vector<8x32xf32>
      %1523 = arith.addf %1499, %1522 : vector<8x32xf32>
      %1524 = vector.broadcast %78 : f32 to vector<8x32xf32>
      %1525 = arith.mulf %1524, %1520 : vector<8x32xf32>
      %1526 = arith.addf %1502, %1525 : vector<8x32xf32>
      %1527 = vector.broadcast %86 : f32 to vector<8x32xf32>
      %1528 = arith.mulf %1527, %1520 : vector<8x32xf32>
      %1529 = arith.addf %1505, %1528 : vector<8x32xf32>
      %1530 = vector.broadcast %94 : f32 to vector<8x32xf32>
      %1531 = arith.mulf %1530, %1520 : vector<8x32xf32>
      %1532 = arith.addf %1508, %1531 : vector<8x32xf32>
      %1533 = vector.broadcast %48 : f32 to vector<8x32xf32>
      %1534 = arith.mulf %1533, %1451 : vector<8x32xf32>
      %1535 = vector.broadcast %49 : f32 to vector<8x32xf32>
      %1536 = arith.mulf %1535, %1454 : vector<8x32xf32>
      %1537 = arith.addf %1534, %1536 : vector<8x32xf32>
      %1538 = vector.broadcast %50 : f32 to vector<8x32xf32>
      %1539 = arith.mulf %1538, %1457 : vector<8x32xf32>
      %1540 = arith.addf %1537, %1539 : vector<8x32xf32>
      %1541 = vector.broadcast %51 : f32 to vector<8x32xf32>
      %1542 = arith.mulf %1541, %1460 : vector<8x32xf32>
      %1543 = arith.addf %1540, %1542 : vector<8x32xf32>
      %1544 = math.tanh %1543 : vector<8x32xf32>
      %1545 = vector.broadcast %71 : f32 to vector<8x32xf32>
      %1546 = arith.mulf %1545, %1544 : vector<8x32xf32>
      %1547 = arith.addf %1523, %1546 : vector<8x32xf32>
      %1548 = vector.broadcast %79 : f32 to vector<8x32xf32>
      %1549 = arith.mulf %1548, %1544 : vector<8x32xf32>
      %1550 = arith.addf %1526, %1549 : vector<8x32xf32>
      %1551 = vector.broadcast %87 : f32 to vector<8x32xf32>
      %1552 = arith.mulf %1551, %1544 : vector<8x32xf32>
      %1553 = arith.addf %1529, %1552 : vector<8x32xf32>
      %1554 = vector.broadcast %95 : f32 to vector<8x32xf32>
      %1555 = arith.mulf %1554, %1544 : vector<8x32xf32>
      %1556 = arith.addf %1532, %1555 : vector<8x32xf32>
      %1557 = vector.broadcast %52 : f32 to vector<8x32xf32>
      %1558 = arith.mulf %1557, %1451 : vector<8x32xf32>
      %1559 = vector.broadcast %53 : f32 to vector<8x32xf32>
      %1560 = arith.mulf %1559, %1454 : vector<8x32xf32>
      %1561 = arith.addf %1558, %1560 : vector<8x32xf32>
      %1562 = vector.broadcast %54 : f32 to vector<8x32xf32>
      %1563 = arith.mulf %1562, %1457 : vector<8x32xf32>
      %1564 = arith.addf %1561, %1563 : vector<8x32xf32>
      %1565 = vector.broadcast %55 : f32 to vector<8x32xf32>
      %1566 = arith.mulf %1565, %1460 : vector<8x32xf32>
      %1567 = arith.addf %1564, %1566 : vector<8x32xf32>
      %1568 = math.tanh %1567 : vector<8x32xf32>
      %1569 = vector.broadcast %72 : f32 to vector<8x32xf32>
      %1570 = arith.mulf %1569, %1568 : vector<8x32xf32>
      %1571 = arith.addf %1547, %1570 : vector<8x32xf32>
      %1572 = vector.broadcast %80 : f32 to vector<8x32xf32>
      %1573 = arith.mulf %1572, %1568 : vector<8x32xf32>
      %1574 = arith.addf %1550, %1573 : vector<8x32xf32>
      %1575 = vector.broadcast %88 : f32 to vector<8x32xf32>
      %1576 = arith.mulf %1575, %1568 : vector<8x32xf32>
      %1577 = arith.addf %1553, %1576 : vector<8x32xf32>
      %1578 = vector.broadcast %96 : f32 to vector<8x32xf32>
      %1579 = arith.mulf %1578, %1568 : vector<8x32xf32>
      %1580 = arith.addf %1556, %1579 : vector<8x32xf32>
      %1581 = vector.broadcast %56 : f32 to vector<8x32xf32>
      %1582 = arith.mulf %1581, %1451 : vector<8x32xf32>
      %1583 = vector.broadcast %57 : f32 to vector<8x32xf32>
      %1584 = arith.mulf %1583, %1454 : vector<8x32xf32>
      %1585 = arith.addf %1582, %1584 : vector<8x32xf32>
      %1586 = vector.broadcast %58 : f32 to vector<8x32xf32>
      %1587 = arith.mulf %1586, %1457 : vector<8x32xf32>
      %1588 = arith.addf %1585, %1587 : vector<8x32xf32>
      %1589 = vector.broadcast %59 : f32 to vector<8x32xf32>
      %1590 = arith.mulf %1589, %1460 : vector<8x32xf32>
      %1591 = arith.addf %1588, %1590 : vector<8x32xf32>
      %1592 = math.tanh %1591 : vector<8x32xf32>
      %1593 = vector.broadcast %73 : f32 to vector<8x32xf32>
      %1594 = arith.mulf %1593, %1592 : vector<8x32xf32>
      %1595 = arith.addf %1571, %1594 : vector<8x32xf32>
      %1596 = vector.broadcast %81 : f32 to vector<8x32xf32>
      %1597 = arith.mulf %1596, %1592 : vector<8x32xf32>
      %1598 = arith.addf %1574, %1597 : vector<8x32xf32>
      %1599 = vector.broadcast %89 : f32 to vector<8x32xf32>
      %1600 = arith.mulf %1599, %1592 : vector<8x32xf32>
      %1601 = arith.addf %1577, %1600 : vector<8x32xf32>
      %1602 = vector.broadcast %97 : f32 to vector<8x32xf32>
      %1603 = arith.mulf %1602, %1592 : vector<8x32xf32>
      %1604 = arith.addf %1580, %1603 : vector<8x32xf32>
      %1605 = vector.broadcast %60 : f32 to vector<8x32xf32>
      %1606 = arith.mulf %1605, %1451 : vector<8x32xf32>
      %1607 = vector.broadcast %61 : f32 to vector<8x32xf32>
      %1608 = arith.mulf %1607, %1454 : vector<8x32xf32>
      %1609 = arith.addf %1606, %1608 : vector<8x32xf32>
      %1610 = vector.broadcast %62 : f32 to vector<8x32xf32>
      %1611 = arith.mulf %1610, %1457 : vector<8x32xf32>
      %1612 = arith.addf %1609, %1611 : vector<8x32xf32>
      %1613 = vector.broadcast %63 : f32 to vector<8x32xf32>
      %1614 = arith.mulf %1613, %1460 : vector<8x32xf32>
      %1615 = arith.addf %1612, %1614 : vector<8x32xf32>
      %1616 = math.tanh %1615 : vector<8x32xf32>
      %1617 = vector.broadcast %74 : f32 to vector<8x32xf32>
      %1618 = arith.mulf %1617, %1616 : vector<8x32xf32>
      %1619 = arith.addf %1595, %1618 : vector<8x32xf32>
      %1620 = vector.broadcast %82 : f32 to vector<8x32xf32>
      %1621 = arith.mulf %1620, %1616 : vector<8x32xf32>
      %1622 = arith.addf %1598, %1621 : vector<8x32xf32>
      %1623 = vector.broadcast %90 : f32 to vector<8x32xf32>
      %1624 = arith.mulf %1623, %1616 : vector<8x32xf32>
      %1625 = arith.addf %1601, %1624 : vector<8x32xf32>
      %1626 = vector.broadcast %98 : f32 to vector<8x32xf32>
      %1627 = arith.mulf %1626, %1616 : vector<8x32xf32>
      %1628 = arith.addf %1604, %1627 : vector<8x32xf32>
      %1629 = vector.broadcast %64 : f32 to vector<8x32xf32>
      %1630 = arith.mulf %1629, %1451 : vector<8x32xf32>
      %1631 = vector.broadcast %65 : f32 to vector<8x32xf32>
      %1632 = arith.mulf %1631, %1454 : vector<8x32xf32>
      %1633 = arith.addf %1630, %1632 : vector<8x32xf32>
      %1634 = vector.broadcast %66 : f32 to vector<8x32xf32>
      %1635 = arith.mulf %1634, %1457 : vector<8x32xf32>
      %1636 = arith.addf %1633, %1635 : vector<8x32xf32>
      %1637 = vector.broadcast %67 : f32 to vector<8x32xf32>
      %1638 = arith.mulf %1637, %1460 : vector<8x32xf32>
      %1639 = arith.addf %1636, %1638 : vector<8x32xf32>
      %1640 = math.tanh %1639 : vector<8x32xf32>
      %1641 = vector.broadcast %75 : f32 to vector<8x32xf32>
      %1642 = arith.mulf %1641, %1640 : vector<8x32xf32>
      %1643 = arith.addf %1619, %1642 : vector<8x32xf32>
      %1644 = vector.broadcast %83 : f32 to vector<8x32xf32>
      %1645 = arith.mulf %1644, %1640 : vector<8x32xf32>
      %1646 = arith.addf %1622, %1645 : vector<8x32xf32>
      %1647 = vector.broadcast %91 : f32 to vector<8x32xf32>
      %1648 = arith.mulf %1647, %1640 : vector<8x32xf32>
      %1649 = arith.addf %1625, %1648 : vector<8x32xf32>
      %1650 = vector.broadcast %99 : f32 to vector<8x32xf32>
      %1651 = arith.mulf %1650, %1640 : vector<8x32xf32>
      %1652 = arith.addf %1628, %1651 : vector<8x32xf32>
      %1653 = vector.broadcast %36 : f32 to vector<8x32xf32>
      %1654 = arith.mulf %1653, %1643 : vector<8x32xf32>
      %1655 = vector.broadcast %37 : f32 to vector<8x32xf32>
      %1656 = arith.mulf %1655, %1646 : vector<8x32xf32>
      %1657 = arith.addf %1654, %1656 : vector<8x32xf32>
      %1658 = vector.broadcast %38 : f32 to vector<8x32xf32>
      %1659 = arith.mulf %1658, %1649 : vector<8x32xf32>
      %1660 = arith.addf %1657, %1659 : vector<8x32xf32>
      %1661 = vector.broadcast %39 : f32 to vector<8x32xf32>
      %1662 = arith.mulf %1661, %1652 : vector<8x32xf32>
      %1663 = arith.addf %1660, %1662 : vector<8x32xf32>
      %1664 = math.tanh %1663 : vector<8x32xf32>
      %1665 = vector.broadcast %68 : f32 to vector<8x32xf32>
      %1666 = arith.mulf %1665, %1664 : vector<8x32xf32>
      %1667 = arith.addf %1643, %1666 : vector<8x32xf32>
      %1668 = vector.broadcast %76 : f32 to vector<8x32xf32>
      %1669 = arith.mulf %1668, %1664 : vector<8x32xf32>
      %1670 = arith.addf %1646, %1669 : vector<8x32xf32>
      %1671 = vector.broadcast %84 : f32 to vector<8x32xf32>
      %1672 = arith.mulf %1671, %1664 : vector<8x32xf32>
      %1673 = arith.addf %1649, %1672 : vector<8x32xf32>
      %1674 = vector.broadcast %92 : f32 to vector<8x32xf32>
      %1675 = arith.mulf %1674, %1664 : vector<8x32xf32>
      %1676 = arith.addf %1652, %1675 : vector<8x32xf32>
      %1677 = vector.broadcast %40 : f32 to vector<8x32xf32>
      %1678 = arith.mulf %1677, %1643 : vector<8x32xf32>
      %1679 = vector.broadcast %41 : f32 to vector<8x32xf32>
      %1680 = arith.mulf %1679, %1646 : vector<8x32xf32>
      %1681 = arith.addf %1678, %1680 : vector<8x32xf32>
      %1682 = vector.broadcast %42 : f32 to vector<8x32xf32>
      %1683 = arith.mulf %1682, %1649 : vector<8x32xf32>
      %1684 = arith.addf %1681, %1683 : vector<8x32xf32>
      %1685 = vector.broadcast %43 : f32 to vector<8x32xf32>
      %1686 = arith.mulf %1685, %1652 : vector<8x32xf32>
      %1687 = arith.addf %1684, %1686 : vector<8x32xf32>
      %1688 = math.tanh %1687 : vector<8x32xf32>
      %1689 = vector.broadcast %69 : f32 to vector<8x32xf32>
      %1690 = arith.mulf %1689, %1688 : vector<8x32xf32>
      %1691 = arith.addf %1667, %1690 : vector<8x32xf32>
      %1692 = vector.broadcast %77 : f32 to vector<8x32xf32>
      %1693 = arith.mulf %1692, %1688 : vector<8x32xf32>
      %1694 = arith.addf %1670, %1693 : vector<8x32xf32>
      %1695 = vector.broadcast %85 : f32 to vector<8x32xf32>
      %1696 = arith.mulf %1695, %1688 : vector<8x32xf32>
      %1697 = arith.addf %1673, %1696 : vector<8x32xf32>
      %1698 = vector.broadcast %93 : f32 to vector<8x32xf32>
      %1699 = arith.mulf %1698, %1688 : vector<8x32xf32>
      %1700 = arith.addf %1676, %1699 : vector<8x32xf32>
      %1701 = vector.broadcast %44 : f32 to vector<8x32xf32>
      %1702 = arith.mulf %1701, %1643 : vector<8x32xf32>
      %1703 = vector.broadcast %45 : f32 to vector<8x32xf32>
      %1704 = arith.mulf %1703, %1646 : vector<8x32xf32>
      %1705 = arith.addf %1702, %1704 : vector<8x32xf32>
      %1706 = vector.broadcast %46 : f32 to vector<8x32xf32>
      %1707 = arith.mulf %1706, %1649 : vector<8x32xf32>
      %1708 = arith.addf %1705, %1707 : vector<8x32xf32>
      %1709 = vector.broadcast %47 : f32 to vector<8x32xf32>
      %1710 = arith.mulf %1709, %1652 : vector<8x32xf32>
      %1711 = arith.addf %1708, %1710 : vector<8x32xf32>
      %1712 = math.tanh %1711 : vector<8x32xf32>
      %1713 = vector.broadcast %70 : f32 to vector<8x32xf32>
      %1714 = arith.mulf %1713, %1712 : vector<8x32xf32>
      %1715 = arith.addf %1691, %1714 : vector<8x32xf32>
      %1716 = vector.broadcast %78 : f32 to vector<8x32xf32>
      %1717 = arith.mulf %1716, %1712 : vector<8x32xf32>
      %1718 = arith.addf %1694, %1717 : vector<8x32xf32>
      %1719 = vector.broadcast %86 : f32 to vector<8x32xf32>
      %1720 = arith.mulf %1719, %1712 : vector<8x32xf32>
      %1721 = arith.addf %1697, %1720 : vector<8x32xf32>
      %1722 = vector.broadcast %94 : f32 to vector<8x32xf32>
      %1723 = arith.mulf %1722, %1712 : vector<8x32xf32>
      %1724 = arith.addf %1700, %1723 : vector<8x32xf32>
      %1725 = vector.broadcast %48 : f32 to vector<8x32xf32>
      %1726 = arith.mulf %1725, %1643 : vector<8x32xf32>
      %1727 = vector.broadcast %49 : f32 to vector<8x32xf32>
      %1728 = arith.mulf %1727, %1646 : vector<8x32xf32>
      %1729 = arith.addf %1726, %1728 : vector<8x32xf32>
      %1730 = vector.broadcast %50 : f32 to vector<8x32xf32>
      %1731 = arith.mulf %1730, %1649 : vector<8x32xf32>
      %1732 = arith.addf %1729, %1731 : vector<8x32xf32>
      %1733 = vector.broadcast %51 : f32 to vector<8x32xf32>
      %1734 = arith.mulf %1733, %1652 : vector<8x32xf32>
      %1735 = arith.addf %1732, %1734 : vector<8x32xf32>
      %1736 = math.tanh %1735 : vector<8x32xf32>
      %1737 = vector.broadcast %71 : f32 to vector<8x32xf32>
      %1738 = arith.mulf %1737, %1736 : vector<8x32xf32>
      %1739 = arith.addf %1715, %1738 : vector<8x32xf32>
      %1740 = vector.broadcast %79 : f32 to vector<8x32xf32>
      %1741 = arith.mulf %1740, %1736 : vector<8x32xf32>
      %1742 = arith.addf %1718, %1741 : vector<8x32xf32>
      %1743 = vector.broadcast %87 : f32 to vector<8x32xf32>
      %1744 = arith.mulf %1743, %1736 : vector<8x32xf32>
      %1745 = arith.addf %1721, %1744 : vector<8x32xf32>
      %1746 = vector.broadcast %95 : f32 to vector<8x32xf32>
      %1747 = arith.mulf %1746, %1736 : vector<8x32xf32>
      %1748 = arith.addf %1724, %1747 : vector<8x32xf32>
      %1749 = vector.broadcast %52 : f32 to vector<8x32xf32>
      %1750 = arith.mulf %1749, %1643 : vector<8x32xf32>
      %1751 = vector.broadcast %53 : f32 to vector<8x32xf32>
      %1752 = arith.mulf %1751, %1646 : vector<8x32xf32>
      %1753 = arith.addf %1750, %1752 : vector<8x32xf32>
      %1754 = vector.broadcast %54 : f32 to vector<8x32xf32>
      %1755 = arith.mulf %1754, %1649 : vector<8x32xf32>
      %1756 = arith.addf %1753, %1755 : vector<8x32xf32>
      %1757 = vector.broadcast %55 : f32 to vector<8x32xf32>
      %1758 = arith.mulf %1757, %1652 : vector<8x32xf32>
      %1759 = arith.addf %1756, %1758 : vector<8x32xf32>
      %1760 = math.tanh %1759 : vector<8x32xf32>
      %1761 = vector.broadcast %72 : f32 to vector<8x32xf32>
      %1762 = arith.mulf %1761, %1760 : vector<8x32xf32>
      %1763 = arith.addf %1739, %1762 : vector<8x32xf32>
      %1764 = vector.broadcast %80 : f32 to vector<8x32xf32>
      %1765 = arith.mulf %1764, %1760 : vector<8x32xf32>
      %1766 = arith.addf %1742, %1765 : vector<8x32xf32>
      %1767 = vector.broadcast %88 : f32 to vector<8x32xf32>
      %1768 = arith.mulf %1767, %1760 : vector<8x32xf32>
      %1769 = arith.addf %1745, %1768 : vector<8x32xf32>
      %1770 = vector.broadcast %96 : f32 to vector<8x32xf32>
      %1771 = arith.mulf %1770, %1760 : vector<8x32xf32>
      %1772 = arith.addf %1748, %1771 : vector<8x32xf32>
      %1773 = vector.broadcast %56 : f32 to vector<8x32xf32>
      %1774 = arith.mulf %1773, %1643 : vector<8x32xf32>
      %1775 = vector.broadcast %57 : f32 to vector<8x32xf32>
      %1776 = arith.mulf %1775, %1646 : vector<8x32xf32>
      %1777 = arith.addf %1774, %1776 : vector<8x32xf32>
      %1778 = vector.broadcast %58 : f32 to vector<8x32xf32>
      %1779 = arith.mulf %1778, %1649 : vector<8x32xf32>
      %1780 = arith.addf %1777, %1779 : vector<8x32xf32>
      %1781 = vector.broadcast %59 : f32 to vector<8x32xf32>
      %1782 = arith.mulf %1781, %1652 : vector<8x32xf32>
      %1783 = arith.addf %1780, %1782 : vector<8x32xf32>
      %1784 = math.tanh %1783 : vector<8x32xf32>
      %1785 = vector.broadcast %73 : f32 to vector<8x32xf32>
      %1786 = arith.mulf %1785, %1784 : vector<8x32xf32>
      %1787 = arith.addf %1763, %1786 : vector<8x32xf32>
      %1788 = vector.broadcast %81 : f32 to vector<8x32xf32>
      %1789 = arith.mulf %1788, %1784 : vector<8x32xf32>
      %1790 = arith.addf %1766, %1789 : vector<8x32xf32>
      %1791 = vector.broadcast %89 : f32 to vector<8x32xf32>
      %1792 = arith.mulf %1791, %1784 : vector<8x32xf32>
      %1793 = arith.addf %1769, %1792 : vector<8x32xf32>
      %1794 = vector.broadcast %97 : f32 to vector<8x32xf32>
      %1795 = arith.mulf %1794, %1784 : vector<8x32xf32>
      %1796 = arith.addf %1772, %1795 : vector<8x32xf32>
      %1797 = vector.broadcast %60 : f32 to vector<8x32xf32>
      %1798 = arith.mulf %1797, %1643 : vector<8x32xf32>
      %1799 = vector.broadcast %61 : f32 to vector<8x32xf32>
      %1800 = arith.mulf %1799, %1646 : vector<8x32xf32>
      %1801 = arith.addf %1798, %1800 : vector<8x32xf32>
      %1802 = vector.broadcast %62 : f32 to vector<8x32xf32>
      %1803 = arith.mulf %1802, %1649 : vector<8x32xf32>
      %1804 = arith.addf %1801, %1803 : vector<8x32xf32>
      %1805 = vector.broadcast %63 : f32 to vector<8x32xf32>
      %1806 = arith.mulf %1805, %1652 : vector<8x32xf32>
      %1807 = arith.addf %1804, %1806 : vector<8x32xf32>
      %1808 = math.tanh %1807 : vector<8x32xf32>
      %1809 = vector.broadcast %74 : f32 to vector<8x32xf32>
      %1810 = arith.mulf %1809, %1808 : vector<8x32xf32>
      %1811 = arith.addf %1787, %1810 : vector<8x32xf32>
      %1812 = vector.broadcast %82 : f32 to vector<8x32xf32>
      %1813 = arith.mulf %1812, %1808 : vector<8x32xf32>
      %1814 = arith.addf %1790, %1813 : vector<8x32xf32>
      %1815 = vector.broadcast %90 : f32 to vector<8x32xf32>
      %1816 = arith.mulf %1815, %1808 : vector<8x32xf32>
      %1817 = arith.addf %1793, %1816 : vector<8x32xf32>
      %1818 = vector.broadcast %98 : f32 to vector<8x32xf32>
      %1819 = arith.mulf %1818, %1808 : vector<8x32xf32>
      %1820 = arith.addf %1796, %1819 : vector<8x32xf32>
      %1821 = vector.broadcast %64 : f32 to vector<8x32xf32>
      %1822 = arith.mulf %1821, %1643 : vector<8x32xf32>
      %1823 = vector.broadcast %65 : f32 to vector<8x32xf32>
      %1824 = arith.mulf %1823, %1646 : vector<8x32xf32>
      %1825 = arith.addf %1822, %1824 : vector<8x32xf32>
      %1826 = vector.broadcast %66 : f32 to vector<8x32xf32>
      %1827 = arith.mulf %1826, %1649 : vector<8x32xf32>
      %1828 = arith.addf %1825, %1827 : vector<8x32xf32>
      %1829 = vector.broadcast %67 : f32 to vector<8x32xf32>
      %1830 = arith.mulf %1829, %1652 : vector<8x32xf32>
      %1831 = arith.addf %1828, %1830 : vector<8x32xf32>
      %1832 = math.tanh %1831 : vector<8x32xf32>
      %1833 = vector.broadcast %75 : f32 to vector<8x32xf32>
      %1834 = arith.mulf %1833, %1832 : vector<8x32xf32>
      %1835 = arith.addf %1811, %1834 : vector<8x32xf32>
      %1836 = vector.broadcast %83 : f32 to vector<8x32xf32>
      %1837 = arith.mulf %1836, %1832 : vector<8x32xf32>
      %1838 = arith.addf %1814, %1837 : vector<8x32xf32>
      %1839 = vector.broadcast %91 : f32 to vector<8x32xf32>
      %1840 = arith.mulf %1839, %1832 : vector<8x32xf32>
      %1841 = arith.addf %1817, %1840 : vector<8x32xf32>
      %1842 = vector.broadcast %99 : f32 to vector<8x32xf32>
      %1843 = arith.mulf %1842, %1832 : vector<8x32xf32>
      %1844 = arith.addf %1820, %1843 : vector<8x32xf32>
      %1845 = vector.broadcast %36 : f32 to vector<8x32xf32>
      %1846 = arith.mulf %1845, %1835 : vector<8x32xf32>
      %1847 = vector.broadcast %37 : f32 to vector<8x32xf32>
      %1848 = arith.mulf %1847, %1838 : vector<8x32xf32>
      %1849 = arith.addf %1846, %1848 : vector<8x32xf32>
      %1850 = vector.broadcast %38 : f32 to vector<8x32xf32>
      %1851 = arith.mulf %1850, %1841 : vector<8x32xf32>
      %1852 = arith.addf %1849, %1851 : vector<8x32xf32>
      %1853 = vector.broadcast %39 : f32 to vector<8x32xf32>
      %1854 = arith.mulf %1853, %1844 : vector<8x32xf32>
      %1855 = arith.addf %1852, %1854 : vector<8x32xf32>
      %1856 = math.tanh %1855 : vector<8x32xf32>
      %1857 = vector.broadcast %68 : f32 to vector<8x32xf32>
      %1858 = arith.mulf %1857, %1856 : vector<8x32xf32>
      %1859 = arith.addf %1835, %1858 : vector<8x32xf32>
      %1860 = vector.broadcast %76 : f32 to vector<8x32xf32>
      %1861 = arith.mulf %1860, %1856 : vector<8x32xf32>
      %1862 = arith.addf %1838, %1861 : vector<8x32xf32>
      %1863 = vector.broadcast %84 : f32 to vector<8x32xf32>
      %1864 = arith.mulf %1863, %1856 : vector<8x32xf32>
      %1865 = arith.addf %1841, %1864 : vector<8x32xf32>
      %1866 = vector.broadcast %92 : f32 to vector<8x32xf32>
      %1867 = arith.mulf %1866, %1856 : vector<8x32xf32>
      %1868 = arith.addf %1844, %1867 : vector<8x32xf32>
      %1869 = vector.broadcast %40 : f32 to vector<8x32xf32>
      %1870 = arith.mulf %1869, %1835 : vector<8x32xf32>
      %1871 = vector.broadcast %41 : f32 to vector<8x32xf32>
      %1872 = arith.mulf %1871, %1838 : vector<8x32xf32>
      %1873 = arith.addf %1870, %1872 : vector<8x32xf32>
      %1874 = vector.broadcast %42 : f32 to vector<8x32xf32>
      %1875 = arith.mulf %1874, %1841 : vector<8x32xf32>
      %1876 = arith.addf %1873, %1875 : vector<8x32xf32>
      %1877 = vector.broadcast %43 : f32 to vector<8x32xf32>
      %1878 = arith.mulf %1877, %1844 : vector<8x32xf32>
      %1879 = arith.addf %1876, %1878 : vector<8x32xf32>
      %1880 = math.tanh %1879 : vector<8x32xf32>
      %1881 = vector.broadcast %69 : f32 to vector<8x32xf32>
      %1882 = arith.mulf %1881, %1880 : vector<8x32xf32>
      %1883 = arith.addf %1859, %1882 : vector<8x32xf32>
      %1884 = vector.broadcast %77 : f32 to vector<8x32xf32>
      %1885 = arith.mulf %1884, %1880 : vector<8x32xf32>
      %1886 = arith.addf %1862, %1885 : vector<8x32xf32>
      %1887 = vector.broadcast %85 : f32 to vector<8x32xf32>
      %1888 = arith.mulf %1887, %1880 : vector<8x32xf32>
      %1889 = arith.addf %1865, %1888 : vector<8x32xf32>
      %1890 = vector.broadcast %93 : f32 to vector<8x32xf32>
      %1891 = arith.mulf %1890, %1880 : vector<8x32xf32>
      %1892 = arith.addf %1868, %1891 : vector<8x32xf32>
      %1893 = vector.broadcast %44 : f32 to vector<8x32xf32>
      %1894 = arith.mulf %1893, %1835 : vector<8x32xf32>
      %1895 = vector.broadcast %45 : f32 to vector<8x32xf32>
      %1896 = arith.mulf %1895, %1838 : vector<8x32xf32>
      %1897 = arith.addf %1894, %1896 : vector<8x32xf32>
      %1898 = vector.broadcast %46 : f32 to vector<8x32xf32>
      %1899 = arith.mulf %1898, %1841 : vector<8x32xf32>
      %1900 = arith.addf %1897, %1899 : vector<8x32xf32>
      %1901 = vector.broadcast %47 : f32 to vector<8x32xf32>
      %1902 = arith.mulf %1901, %1844 : vector<8x32xf32>
      %1903 = arith.addf %1900, %1902 : vector<8x32xf32>
      %1904 = math.tanh %1903 : vector<8x32xf32>
      %1905 = vector.broadcast %70 : f32 to vector<8x32xf32>
      %1906 = arith.mulf %1905, %1904 : vector<8x32xf32>
      %1907 = arith.addf %1883, %1906 : vector<8x32xf32>
      %1908 = vector.broadcast %78 : f32 to vector<8x32xf32>
      %1909 = arith.mulf %1908, %1904 : vector<8x32xf32>
      %1910 = arith.addf %1886, %1909 : vector<8x32xf32>
      %1911 = vector.broadcast %86 : f32 to vector<8x32xf32>
      %1912 = arith.mulf %1911, %1904 : vector<8x32xf32>
      %1913 = arith.addf %1889, %1912 : vector<8x32xf32>
      %1914 = vector.broadcast %94 : f32 to vector<8x32xf32>
      %1915 = arith.mulf %1914, %1904 : vector<8x32xf32>
      %1916 = arith.addf %1892, %1915 : vector<8x32xf32>
      %1917 = vector.broadcast %48 : f32 to vector<8x32xf32>
      %1918 = arith.mulf %1917, %1835 : vector<8x32xf32>
      %1919 = vector.broadcast %49 : f32 to vector<8x32xf32>
      %1920 = arith.mulf %1919, %1838 : vector<8x32xf32>
      %1921 = arith.addf %1918, %1920 : vector<8x32xf32>
      %1922 = vector.broadcast %50 : f32 to vector<8x32xf32>
      %1923 = arith.mulf %1922, %1841 : vector<8x32xf32>
      %1924 = arith.addf %1921, %1923 : vector<8x32xf32>
      %1925 = vector.broadcast %51 : f32 to vector<8x32xf32>
      %1926 = arith.mulf %1925, %1844 : vector<8x32xf32>
      %1927 = arith.addf %1924, %1926 : vector<8x32xf32>
      %1928 = math.tanh %1927 : vector<8x32xf32>
      %1929 = vector.broadcast %71 : f32 to vector<8x32xf32>
      %1930 = arith.mulf %1929, %1928 : vector<8x32xf32>
      %1931 = arith.addf %1907, %1930 : vector<8x32xf32>
      %1932 = vector.broadcast %79 : f32 to vector<8x32xf32>
      %1933 = arith.mulf %1932, %1928 : vector<8x32xf32>
      %1934 = arith.addf %1910, %1933 : vector<8x32xf32>
      %1935 = vector.broadcast %87 : f32 to vector<8x32xf32>
      %1936 = arith.mulf %1935, %1928 : vector<8x32xf32>
      %1937 = arith.addf %1913, %1936 : vector<8x32xf32>
      %1938 = vector.broadcast %95 : f32 to vector<8x32xf32>
      %1939 = arith.mulf %1938, %1928 : vector<8x32xf32>
      %1940 = arith.addf %1916, %1939 : vector<8x32xf32>
      %1941 = vector.broadcast %52 : f32 to vector<8x32xf32>
      %1942 = arith.mulf %1941, %1835 : vector<8x32xf32>
      %1943 = vector.broadcast %53 : f32 to vector<8x32xf32>
      %1944 = arith.mulf %1943, %1838 : vector<8x32xf32>
      %1945 = arith.addf %1942, %1944 : vector<8x32xf32>
      %1946 = vector.broadcast %54 : f32 to vector<8x32xf32>
      %1947 = arith.mulf %1946, %1841 : vector<8x32xf32>
      %1948 = arith.addf %1945, %1947 : vector<8x32xf32>
      %1949 = vector.broadcast %55 : f32 to vector<8x32xf32>
      %1950 = arith.mulf %1949, %1844 : vector<8x32xf32>
      %1951 = arith.addf %1948, %1950 : vector<8x32xf32>
      %1952 = math.tanh %1951 : vector<8x32xf32>
      %1953 = vector.broadcast %72 : f32 to vector<8x32xf32>
      %1954 = arith.mulf %1953, %1952 : vector<8x32xf32>
      %1955 = arith.addf %1931, %1954 : vector<8x32xf32>
      %1956 = vector.broadcast %80 : f32 to vector<8x32xf32>
      %1957 = arith.mulf %1956, %1952 : vector<8x32xf32>
      %1958 = arith.addf %1934, %1957 : vector<8x32xf32>
      %1959 = vector.broadcast %88 : f32 to vector<8x32xf32>
      %1960 = arith.mulf %1959, %1952 : vector<8x32xf32>
      %1961 = arith.addf %1937, %1960 : vector<8x32xf32>
      %1962 = vector.broadcast %96 : f32 to vector<8x32xf32>
      %1963 = arith.mulf %1962, %1952 : vector<8x32xf32>
      %1964 = arith.addf %1940, %1963 : vector<8x32xf32>
      %1965 = vector.broadcast %56 : f32 to vector<8x32xf32>
      %1966 = arith.mulf %1965, %1835 : vector<8x32xf32>
      %1967 = vector.broadcast %57 : f32 to vector<8x32xf32>
      %1968 = arith.mulf %1967, %1838 : vector<8x32xf32>
      %1969 = arith.addf %1966, %1968 : vector<8x32xf32>
      %1970 = vector.broadcast %58 : f32 to vector<8x32xf32>
      %1971 = arith.mulf %1970, %1841 : vector<8x32xf32>
      %1972 = arith.addf %1969, %1971 : vector<8x32xf32>
      %1973 = vector.broadcast %59 : f32 to vector<8x32xf32>
      %1974 = arith.mulf %1973, %1844 : vector<8x32xf32>
      %1975 = arith.addf %1972, %1974 : vector<8x32xf32>
      %1976 = math.tanh %1975 : vector<8x32xf32>
      %1977 = vector.broadcast %73 : f32 to vector<8x32xf32>
      %1978 = arith.mulf %1977, %1976 : vector<8x32xf32>
      %1979 = arith.addf %1955, %1978 : vector<8x32xf32>
      %1980 = vector.broadcast %81 : f32 to vector<8x32xf32>
      %1981 = arith.mulf %1980, %1976 : vector<8x32xf32>
      %1982 = arith.addf %1958, %1981 : vector<8x32xf32>
      %1983 = vector.broadcast %89 : f32 to vector<8x32xf32>
      %1984 = arith.mulf %1983, %1976 : vector<8x32xf32>
      %1985 = arith.addf %1961, %1984 : vector<8x32xf32>
      %1986 = vector.broadcast %97 : f32 to vector<8x32xf32>
      %1987 = arith.mulf %1986, %1976 : vector<8x32xf32>
      %1988 = arith.addf %1964, %1987 : vector<8x32xf32>
      %1989 = vector.broadcast %60 : f32 to vector<8x32xf32>
      %1990 = arith.mulf %1989, %1835 : vector<8x32xf32>
      %1991 = vector.broadcast %61 : f32 to vector<8x32xf32>
      %1992 = arith.mulf %1991, %1838 : vector<8x32xf32>
      %1993 = arith.addf %1990, %1992 : vector<8x32xf32>
      %1994 = vector.broadcast %62 : f32 to vector<8x32xf32>
      %1995 = arith.mulf %1994, %1841 : vector<8x32xf32>
      %1996 = arith.addf %1993, %1995 : vector<8x32xf32>
      %1997 = vector.broadcast %63 : f32 to vector<8x32xf32>
      %1998 = arith.mulf %1997, %1844 : vector<8x32xf32>
      %1999 = arith.addf %1996, %1998 : vector<8x32xf32>
      %2000 = math.tanh %1999 : vector<8x32xf32>
      %2001 = vector.broadcast %74 : f32 to vector<8x32xf32>
      %2002 = arith.mulf %2001, %2000 : vector<8x32xf32>
      %2003 = arith.addf %1979, %2002 : vector<8x32xf32>
      %2004 = vector.broadcast %82 : f32 to vector<8x32xf32>
      %2005 = arith.mulf %2004, %2000 : vector<8x32xf32>
      %2006 = arith.addf %1982, %2005 : vector<8x32xf32>
      %2007 = vector.broadcast %90 : f32 to vector<8x32xf32>
      %2008 = arith.mulf %2007, %2000 : vector<8x32xf32>
      %2009 = arith.addf %1985, %2008 : vector<8x32xf32>
      %2010 = vector.broadcast %98 : f32 to vector<8x32xf32>
      %2011 = arith.mulf %2010, %2000 : vector<8x32xf32>
      %2012 = arith.addf %1988, %2011 : vector<8x32xf32>
      %2013 = vector.broadcast %64 : f32 to vector<8x32xf32>
      %2014 = arith.mulf %2013, %1835 : vector<8x32xf32>
      %2015 = vector.broadcast %65 : f32 to vector<8x32xf32>
      %2016 = arith.mulf %2015, %1838 : vector<8x32xf32>
      %2017 = arith.addf %2014, %2016 : vector<8x32xf32>
      %2018 = vector.broadcast %66 : f32 to vector<8x32xf32>
      %2019 = arith.mulf %2018, %1841 : vector<8x32xf32>
      %2020 = arith.addf %2017, %2019 : vector<8x32xf32>
      %2021 = vector.broadcast %67 : f32 to vector<8x32xf32>
      %2022 = arith.mulf %2021, %1844 : vector<8x32xf32>
      %2023 = arith.addf %2020, %2022 : vector<8x32xf32>
      %2024 = math.tanh %2023 : vector<8x32xf32>
      %2025 = vector.broadcast %75 : f32 to vector<8x32xf32>
      %2026 = arith.mulf %2025, %2024 : vector<8x32xf32>
      %2027 = arith.addf %2003, %2026 : vector<8x32xf32>
      %2028 = vector.broadcast %83 : f32 to vector<8x32xf32>
      %2029 = arith.mulf %2028, %2024 : vector<8x32xf32>
      %2030 = arith.addf %2006, %2029 : vector<8x32xf32>
      %2031 = vector.broadcast %91 : f32 to vector<8x32xf32>
      %2032 = arith.mulf %2031, %2024 : vector<8x32xf32>
      %2033 = arith.addf %2009, %2032 : vector<8x32xf32>
      %2034 = vector.broadcast %99 : f32 to vector<8x32xf32>
      %2035 = arith.mulf %2034, %2024 : vector<8x32xf32>
      %2036 = arith.addf %2012, %2035 : vector<8x32xf32>
      %c0_175 = arith.constant 0 : index
      %c0_176 = arith.constant 0 : index
      %2037 = arith.index_cast %104 : i32 to index
      %c0_177 = arith.constant 0 : index
      %2038 = vector.load %arg7[%c0_175, %c0_176, %2037, %c0_177] : memref<1x4x32x32xf32, #tpu.memory_space<vmem>>, vector<1x1x8x32xf32>
      %2039 = vector.shape_cast %2038 : vector<1x1x8x32xf32> to vector<8x32xf32>
      %2040 = vector.shape_cast %2027 : vector<8x32xf32> to vector<1x1x8x32xf32>
      tpu.vector_store %arg7[%c0_175, %c0_176, %2037, %c0_177], %2040 {strides = array<i32>} : memref<1x4x32x32xf32, #tpu.memory_space<vmem>>, vector<1x1x8x32xf32>,
      %c0_178 = arith.constant 0 : index
      %c1_179 = arith.constant 1 : index
      %2041 = arith.index_cast %104 : i32 to index
      %c0_180 = arith.constant 0 : index
      %2042 = vector.load %arg7[%c0_178, %c1_179, %2041, %c0_180] : memref<1x4x32x32xf32, #tpu.memory_space<vmem>>, vector<1x1x8x32xf32>
      %2043 = vector.shape_cast %2042 : vector<1x1x8x32xf32> to vector<8x32xf32>
      %2044 = vector.shape_cast %2030 : vector<8x32xf32> to vector<1x1x8x32xf32>
      tpu.vector_store %arg7[%c0_178, %c1_179, %2041, %c0_180], %2044 {strides = array<i32>} : memref<1x4x32x32xf32, #tpu.memory_space<vmem>>, vector<1x1x8x32xf32>,
      %c0_181 = arith.constant 0 : index
      %c2_182 = arith.constant 2 : index
      %2045 = arith.index_cast %104 : i32 to index
      %c0_183 = arith.constant 0 : index
      %2046 = vector.load %arg7[%c0_181, %c2_182, %2045, %c0_183] : memref<1x4x32x32xf32, #tpu.memory_space<vmem>>, vector<1x1x8x32xf32>
      %2047 = vector.shape_cast %2046 : vector<1x1x8x32xf32> to vector<8x32xf32>
      %2048 = vector.shape_cast %2033 : vector<8x32xf32> to vector<1x1x8x32xf32>
      tpu.vector_store %arg7[%c0_181, %c2_182, %2045, %c0_183], %2048 {strides = array<i32>} : memref<1x4x32x32xf32, #tpu.memory_space<vmem>>, vector<1x1x8x32xf32>,
      %c0_184 = arith.constant 0 : index
      %c3_185 = arith.constant 3 : index
      %2049 = arith.index_cast %104 : i32 to index
      %c0_186 = arith.constant 0 : index
      %2050 = vector.load %arg7[%c0_184, %c3_185, %2049, %c0_186] : memref<1x4x32x32xf32, #tpu.memory_space<vmem>>, vector<1x1x8x32xf32>
      %2051 = vector.shape_cast %2050 : vector<1x1x8x32xf32> to vector<8x32xf32>
      %2052 = vector.shape_cast %2036 : vector<8x32xf32> to vector<1x1x8x32xf32>
      tpu.vector_store %arg7[%c0_184, %c3_185, %2049, %c0_186], %2052 {strides = array<i32>} : memref<1x4x32x32xf32, #tpu.memory_space<vmem>>, vector<1x1x8x32xf32>,
    }
    %c4_i32_160 = arith.constant 4 : i32
    return
  }
  func.func @transform_0(%arg0: i32, %arg1: i32) -> (i32, i32) {
    %c0_i32 = arith.constant 0 : i32
    %c0_i32_0 = arith.constant 0 : i32
    %c0_i32_1 = arith.constant 0 : i32
    return %c0_i32, %c0_i32_0 : i32, i32
  }
  func.func @transform_1(%arg0: i32, %arg1: i32) -> (i32, i32) {
    %c0_i32 = arith.constant 0 : i32
    %c0_i32_0 = arith.constant 0 : i32
    %c0_i32_1 = arith.constant 0 : i32
    return %c0_i32, %c0_i32_0 : i32, i32
  }
  func.func @transform_2(%arg0: i32, %arg1: i32) -> (i32, i32) {
    %c0_i32 = arith.constant 0 : i32
    %c0_i32_0 = arith.constant 0 : i32
    return %arg1, %c0_i32 : i32, i32
  }
  func.func @transform_3(%arg0: i32, %arg1: i32) -> (i32, i32) {
    %c0_i32 = arith.constant 0 : i32
    %c0_i32_0 = arith.constant 0 : i32
    %c0_i32_1 = arith.constant 0 : i32
    return %c0_i32, %c0_i32_0 : i32, i32
  }
  func.func @transform_4(%arg0: i32, %arg1: i32) -> (i32, i32, i32, i32) {
    %c0_i32 = arith.constant 0 : i32
    %c0_i32_0 = arith.constant 0 : i32
    %c0_i32_1 = arith.constant 0 : i32
    %c0_i32_2 = arith.constant 0 : i32
    return %arg0, %c0_i32, %c0_i32_0, %c0_i32_1 : i32, i32, i32, i32
  }
  func.func @transform_5(%arg0: i32, %arg1: i32) -> (i32, i32, i32, i32) {
    %c0_i32 = arith.constant 0 : i32
    %c0_i32_0 = arith.constant 0 : i32
    %c0_i32_1 = arith.constant 0 : i32
    return %arg0, %c0_i32, %arg1, %c0_i32_0 : i32, i32, i32, i32
  }
}

</mosaic_0001>

<llo_original>
// kernel: tpu_custom_call.1
$region0: #{tpu_custom_call.1}
  #allocation0 [shape = 'u32[]', space=smem, size = 0x4, offset = 0x4, fixed_abs, tag = 'smem constant byte address 0x4 - core index']
  #allocation1 [shape = 'u32[144,128]{1,0:T(1,128)}', space=vmem, size = 0x12000, scoped, tag = 'internal scratch']
  %s0 = inlined_call_operand.hbm [shape: f32[8,4], index: 0, kind: input, shape index: {}]
  %s1 = inlined_call_operand.hbm [shape: f32[4,8], index: 1, kind: input, shape index: {}]
  %s2 = inlined_call_operand.hbm [shape: bf16[32,16], index: 2, kind: input, shape index: {}]
  %s3 = inlined_call_operand.hbm [shape: bf16[16,32], index: 3, kind: input, shape index: {}]
  %s4 = inlined_call_operand.hbm [shape: bf16[2,4,16,16], index: 4, kind: input, shape index: {}]
  %s5 = inlined_call_operand.hbm [shape: f32[2,4,32,32], index: 5, kind: output, shape index: {}]
  %s6 = sld [smem:[#allocation0]]
  $region80: #{tpu_custom_call.1} parent=0
    _
  %s8 = ssub.s32 1, %s6
  %s9 = scalar_select 0, %s8, %s6
  $region1: #{tpu_custom_call.1} parent=0
    #allocation2 [shape = 'u8[4096]{0}', space=smem, size = 0x1000, scoped, tag = 'input window, operand 0, single buffered']
    #allocation3 [shape = 's32[2]{0}', space=sflag, size = 0x8, scoped, tag = 'scoped memory for tpu_custom_call.1']
    #allocation4 [shape = 's32[2]{0}', space=sflag, size = 0x8, scoped, tag = 'scoped memory for tpu_custom_call.1']
    #allocation5 [shape = 's32[2]{0}', space=sflag, size = 0x8, scoped, tag = 'scoped memory for tpu_custom_call.1']
    #allocation6 [shape = 'u8[2048]{0}', space=smem, size = 0x800, scoped, tag = 'input window, operand 1, single buffered']
    #allocation7 [shape = 's32[1]{0}', space=sflag, size = 0x4, scoped, tag = 'scoped memory for tpu_custom_call.1']
    #allocation8 [shape = 'u8[8192]{0}', space=vmem, size = 0x2000, scoped, tag = 'input window, operand 2, single buffered']
    #allocation9 [shape = 'u8[4096]{0}', space=vmem, size = 0x1000, scoped, tag = 'input window, operand 3, single buffered']
    #allocation10 [shape = 's32[1]{0}', space=sflag, size = 0x4, scoped, tag = 'scoped memory for tpu_custom_call.1']
    #allocation11 [shape = 'u8[32768]{0}', space=vmem, size = 0x8000, scoped, tag = 'input window, operand 4']
    #allocation12 [shape = 'u8[131072]{0}', space=vmem, size = 0x20000, scoped, tag = 'output window, operand 0']
    %10 = vsyncpa [#allocation5], 0
    %11 = vsyncpa [#allocation7], 0
    %12 = vsyncpa [#allocation3], 0
    %13 = vsyncpa [#allocation10], 0
    %14 = vsyncpa [#allocation4], 0
    %s15 = scalar_lea.sflag [#allocation4], 1
    %16 = vsyncpa %s15, 0
    loop: start=0, step=1, limit=4
    $region2: #{tpu_custom_call.1} parent=1 // loop_pre_header
      _
    $region3: #{tpu_custom_call.1} parent=1 // loop_header
      %s18 = sphi 0, %s22
      %p19 = scmp.ge.s32.totalorder %s18, 4
      %s25 = sphi 0, %s37
      %s26 = sphi 0, %s33
      %s27 = sphi 0, %s25
      %s28 = sphi 0, %s26
      %s29 = sphi 0, %s27
      %s30 = sphi 0, %s28
      %s38 = sphi 0, %s38
      %s40 = sphi 0, %s38
      %s41 = sphi 0, %s40
      %s55 = sphi 0, %s41
      %s59 = sphi 0, %s59
      %s61 = sphi 0, %s59
      %s62 = sphi 0, %s61
      %s76 = sphi 0, %s62
      %s82 = sphi 0, %s84
      %s85 = sphi 0, %s82
      %s86 = sphi 0, %s85
      %s102 = sphi 0, %s86
      %s106 = sphi 0, %s106
      %s108 = sphi 0, %s106
      %s109 = sphi 0, %s108
      %s123 = sphi 0, %s109
      %s129 = sphi 0, %s131
      %s132 = sphi 0, %s129
      %s133 = sphi 0, %s132
      %s149 = sphi 0, %s133
      %s157 = sphi 0, %s159
      %s160 = sphi 0, %s157
      %s161 = sphi 0, %s160
      %s177 = sphi 0, %s161
    $region4: #{tpu_custom_call.1} parent=1 // loop_header_branch
      %21 = sbr.rel (%p19) target = $region8
    $region5: #{tpu_custom_call.1} parent=1 // loop_body
      %s23 = ssub.s32 %s18, 1
      %s24 = ssub.s32 %s18, 2
      %s31 = sadd.s32 1, %s26
      %p32 = scmp.ge.s32.totalorder %s31, 1
      %s33 = scalar_select %p32, 0, %s31
      %s34 = sadd.s32 1, %s25
      %s35 = scalar_select %p32, %s34, %s25
      %p36 = scmp.ge.s32.totalorder %s35, 2
      %s37 = scalar_select %p36, 0, %s35
      %s39 = sadd.s32 %s38, 1
      %p42 = scmp.eq.s32.totalorder %s18, 1
      %p43 = scmp.ne.s32.totalorder %s38, %s40
      %p44 = scmp.eq.s32.totalorder %s18, 0
      %p45 = por %p43, %p44
      %p46 = scmp.ne.s32.totalorder %s38, %s40
      %p47 = scmp.eq.s32.totalorder %s23, 1
      %p48 = por %p46, %p47
      %p49 = scmp.ne.s32.totalorder %s40, %s41
      %p50 = scmp.eq.s32.totalorder %s23, 0
      %p51 = por %p49, %p50
      %p52 = scmp.ne.s32.totalorder %s40, %s41
      %p53 = scmp.eq.s32.totalorder %s24, 1
      %p54 = por %p52, %p53
      %p56 = scmp.ne.s32.totalorder %s41, %s55
      %p57 = scmp.eq.s32.totalorder %s24, 0
      %p58 = por %p56, %p57
      %s60 = sadd.s32 %s59, 1
      %p63 = scmp.eq.s32.totalorder %s18, 1
      %p64 = scmp.ne.s32.totalorder %s59, %s61
      %p65 = scmp.eq.s32.totalorder %s18, 0
      %p66 = por %p64, %p65
      %p67 = scmp.ne.s32.totalorder %s59, %s61
      %p68 = scmp.eq.s32.totalorder %s23, 1
      %p69 = por %p67, %p68
      %p70 = scmp.ne.s32.totalorder %s61, %s62
      %p71 = scmp.eq.s32.totalorder %s23, 0
      %p72 = por %p70, %p71
      %p73 = scmp.ne.s32.totalorder %s61, %s62
      %p74 = scmp.eq.s32.totalorder %s24, 1
      %p75 = por %p73, %p74
      %p77 = scmp.ne.s32.totalorder %s62, %s76
      %p78 = scmp.eq.s32.totalorder %s24, 0
      %p79 = por %p77, %p78
      %s80 = ssub.s32 %s26, %s33
      %p81 = scmp.eq.s32.totalorder %s80, 0
      %s83 = sadd.s32 %s82, 1
      %s84 = scalar_select %p81, %s82, %s83
      %p87 = pneg %p81
      %p88 = scmp.eq.s32.totalorder %s18, 1
      %p89 = por %p87, %p88
      %p90 = scmp.ne.s32.totalorder %s82, %s85
      %p91 = scmp.eq.s32.totalorder %s18, 0
      %p92 = por %p90, %p91
      %p93 = scmp.ne.s32.totalorder %s82, %s85
      %p94 = scmp.eq.s32.totalorder %s23, 1
      %p95 = por %p93, %p94
      %p96 = scmp.ne.s32.totalorder %s85, %s86
      %p97 = scmp.eq.s32.totalorder %s23, 0
      %p98 = por %p96, %p97
      %p99 = scmp.ne.s32.totalorder %s85, %s86
      %p100 = scmp.eq.s32.totalorder %s24, 1
      %p101 = por %p99, %p100
      %p103 = scmp.ne.s32.totalorder %s86, %s102
      %p104 = scmp.eq.s32.totalorder %s24, 0
      %p105 = por %p103, %p104
      %s107 = sadd.s32 %s106, 1
      %p110 = scmp.eq.s32.totalorder %s18, 1
      %p111 = scmp.ne.s32.totalorder %s106, %s108
      %p112 = scmp.eq.s32.totalorder %s18, 0
      %p113 = por %p111, %p112
      %p114 = scmp.ne.s32.totalorder %s106, %s108
      %p115 = scmp.eq.s32.totalorder %s23, 1
      %p116 = por %p114, %p115
      %p117 = scmp.ne.s32.totalorder %s108, %s109
      %p118 = scmp.eq.s32.totalorder %s23, 0
      %p119 = por %p117, %p118
      %p120 = scmp.ne.s32.totalorder %s108, %s109
      %p121 = scmp.eq.s32.totalorder %s24, 1
      %p122 = por %p120, %p121
      %p124 = scmp.ne.s32.totalorder %s109, %s123
      %p125 = scmp.eq.s32.totalorder %s24, 0
      %p126 = por %p124, %p125
      %s127 = ssub.s32 %s25, %s37
      %p128 = scmp.eq.s32.totalorder %s127, 0
      %s130 = sadd.s32 %s129, 1
      %s131 = scalar_select %p128, %s129, %s130
      %p134 = pneg %p128
      %p135 = scmp.eq.s32.totalorder %s18, 1
      %p136 = por %p134, %p135
      %p137 = scmp.ne.s32.totalorder %s129, %s132
      %p138 = scmp.eq.s32.totalorder %s18, 0
      %p139 = por %p137, %p138
      %p140 = scmp.ne.s32.totalorder %s129, %s132
      %p141 = scmp.eq.s32.totalorder %s23, 1
      %p142 = por %p140, %p141
      %p143 = scmp.ne.s32.totalorder %s132, %s133
      %p144 = scmp.eq.s32.totalorder %s23, 0
      %p145 = por %p143, %p144
      %p146 = scmp.ne.s32.totalorder %s132, %s133
      %p147 = scmp.eq.s32.totalorder %s24, 1
      %p148 = por %p146, %p147
      %p150 = scmp.ne.s32.totalorder %s133, %s149
      %p151 = scmp.eq.s32.totalorder %s24, 0
      %p152 = por %p150, %p151
      %s153 = ssub.s32 %s25, %s37
      %s154 = ssub.s32 %s26, %s33
      %s155 = sor.u32 %s153, %s154
      %p156 = scmp.eq.s32.totalorder %s155, 0
      %s158 = sadd.s32 %s157, 1
      %s159 = scalar_select %p156, %s157, %s158
      %p162 = pneg %p156
      %p163 = scmp.eq.s32.totalorder %s18, 1
      %p164 = por %p162, %p163
      %p165 = scmp.ne.s32.totalorder %s157, %s160
      %p166 = scmp.eq.s32.totalorder %s18, 0
      %p167 = por %p165, %p166
      %p168 = scmp.ne.s32.totalorder %s157, %s160
      %p169 = scmp.eq.s32.totalorder %s23, 1
      %p170 = por %p168, %p169
      %p171 = scmp.ne.s32.totalorder %s160, %s161
      %p172 = scmp.eq.s32.totalorder %s23, 0
      %p173 = por %p171, %p172
      %p174 = scmp.ne.s32.totalorder %s160, %s161
      %p175 = scmp.eq.s32.totalorder %s24, 1
      %p176 = por %p174, %p175
      %p178 = scmp.ne.s32.totalorder %s161, %s177
      %p179 = scmp.eq.s32.totalorder %s24, 0
      %p180 = por %p178, %p179
      %p181 = scmp.le.s32.totalorder 1, %s18
      %p182 = scmp.lt.s32.totalorder %s18, 3
      %p183 = pnand %p181, %p182
      %p184 = pneg %p183
      // Predicated region
      $region9: #{tpu_custom_call.1} parent=5 // pred_check
        _
      $region10: #{tpu_custom_call.1} parent=5 // pred_check_branch
        %186 = sbr.rel (%p183) target = $region12
      $region11: #{tpu_custom_call.1} parent=5 // pred_region
        %s187 = ssub.s32 %s18, 1
        // Predicated region
        $region13: #{tpu_custom_call.1} parent=11 // pred_check
          %p188 = pneg %p51
        $region14: #{tpu_custom_call.1} parent=11 // pred_check_branch
          %190 = sbr.rel (%p188) target = $region16
        $region15: #{tpu_custom_call.1} parent=11 // pred_region
          %s192 = ssub.s32 128, 128
          %193 = vsyncadd [#allocation5], %s192
          %196 = dma.hbm_to_smem %s0, 128, [#allocation2], [#allocation5]
        $region16: #{tpu_custom_call.1} parent=11 // pred_fallthru
          _
        // Predicated region
        $region17: #{tpu_custom_call.1} parent=11 // pred_check
          %p197 = pneg %p72
        $region18: #{tpu_custom_call.1} parent=11 // pred_check_branch
          %199 = sbr.rel (%p197) target = $region20
        $region19: #{tpu_custom_call.1} parent=11 // pred_region
          %s201 = ssub.s32 64, 64
          %202 = vsyncadd [#allocation7], %s201
          %205 = dma.hbm_to_smem %s1, 64, [#allocation6], [#allocation7]
        $region20: #{tpu_custom_call.1} parent=11 // pred_fallthru
          _
        // Predicated region
        $region21: #{tpu_custom_call.1} parent=11 // pred_check
          %p206 = pneg %p98
        $region22: #{tpu_custom_call.1} parent=11 // pred_check_branch
          %208 = sbr.rel (%p206) target = $region24
        $region23: #{tpu_custom_call.1} parent=11 // pred_region
          %s209 = smul.u32 4, %s28
          %s211 = ssub.s32 256, 256
          %212 = vsyncadd [#allocation3], %s211
          %s213 = smul.addr %s209, 64
          %s214 = scalar_lea.hbm %s2, %s213
          %s215 = sshll.u32 [#allocation8], 4
          %s216 = int_to_ptr.vmem [resolvable:$true] %s215
          %221 = dma.hbm_to_vmem [thread:$0]  %s214, 256, %s216, [#allocation3], 64, 64, 4
        $region24: #{tpu_custom_call.1} parent=11 // pred_fallthru
          _
        // Predicated region
        $region25: #{tpu_custom_call.1} parent=11 // pred_check
          %p222 = pneg %p119
        $region26: #{tpu_custom_call.1} parent=11 // pred_check_branch
          %224 = sbr.rel (%p222) target = $region28
        $region27: #{tpu_custom_call.1} parent=11 // pred_region
          %s226 = ssub.s32 128, 128
          %227 = vsyncadd [#allocation10], %s226
          %s228 = sshll.u32 [#allocation9], 4
          %s229 = int_to_ptr.vmem [resolvable:$true] %s228
          %234 = dma.hbm_to_vmem [thread:$0]  %s3, 128, %s229, [#allocation10], 64, 64, 4
        $region28: #{tpu_custom_call.1} parent=11 // pred_fallthru
          _
      $region12: #{tpu_custom_call.1} parent=5 // pred_fallthru
        _
      %p235 = scmp.lt.s32.totalorder %s18, 2
      // Predicated region
      $region29: #{tpu_custom_call.1} parent=5 // pred_check
        %p236 = pneg %p235
      $region30: #{tpu_custom_call.1} parent=5 // pred_check_branch
        %238 = sbr.rel (%p236) target = $region32
      $region31: #{tpu_custom_call.1} parent=5 // pred_region
        // Predicated region
        $region33: #{tpu_custom_call.1} parent=31 // pred_check
          %p239 = pneg %p139
        $region34: #{tpu_custom_call.1} parent=31 // pred_check_branch
          %241 = sbr.rel (%p239) target = $region36
        $region35: #{tpu_custom_call.1} parent=31 // pred_region
          %s242 = sand.u32 %s18, 1
          %s243 = scalar_lea.sflag [#allocation3], %s242
          %s244 = sand.u32 %s129, 1
          %s245 = smul.addr %s244, 32
          %s246 = scalar_lea.vmem [#allocation11], %s245
          %s248 = ssub.s32 512, 512
          %249 = vsyncadd %s243, %s248
          %s250 = smul.addr %s25, 8
          %s251 = smul.addr %s250, 64
          %s252 = scalar_lea.hbm %s4, %s251
          %s253 = sshll.u32 %s246, 4
          %s254 = int_to_ptr.vmem [resolvable:$true] %s253
          %259 = dma.hbm_to_vmem [thread:$0]  %s252, 512, %s254, %s243, 64, 64, 4
        $region36: #{tpu_custom_call.1} parent=31 // pred_fallthru
          _
      $region32: #{tpu_custom_call.1} parent=5 // pred_fallthru
        _
      %p260 = scmp.le.s32.totalorder 1, %s18
      %p261 = scmp.lt.s32.totalorder %s18, 3
      %p262 = pnand %p260, %p261
      %p263 = pneg %p262
      // Predicated region
      $region37: #{tpu_custom_call.1} parent=5 // pred_check
        _
      $region38: #{tpu_custom_call.1} parent=5 // pred_check_branch
        %265 = sbr.rel (%p262) target = $region40
      $region39: #{tpu_custom_call.1} parent=5 // pred_region
        %s266 = ssub.s32 %s18, 1
        // Predicated region
        $region41: #{tpu_custom_call.1} parent=39 // pred_check
          %p267 = pneg %p51
        $region42: #{tpu_custom_call.1} parent=39 // pred_check_branch
          %269 = sbr.rel (%p267) target = $region44
        $region43: #{tpu_custom_call.1} parent=39 // pred_region
          %270 = dma.done [#allocation5], 128
        $region44: #{tpu_custom_call.1} parent=39 // pred_fallthru
          _
        // Predicated region
        $region45: #{tpu_custom_call.1} parent=39 // pred_check
          %p271 = pneg %p72
        $region46: #{tpu_custom_call.1} parent=39 // pred_check_branch
          %273 = sbr.rel (%p271) target = $region48
        $region47: #{tpu_custom_call.1} parent=39 // pred_region
          %274 = dma.done [#allocation7], 64
        $region48: #{tpu_custom_call.1} parent=39 // pred_fallthru
          _
        // Predicated region
        $region49: #{tpu_custom_call.1} parent=39 // pred_check
          %p275 = pneg %p98
        $region50: #{tpu_custom_call.1} parent=39 // pred_check_branch
          %277 = sbr.rel (%p275) target = $region52
        $region51: #{tpu_custom_call.1} parent=39 // pred_region
          %278 = dma.done [#allocation3], 256
        $region52: #{tpu_custom_call.1} parent=39 // pred_fallthru
          _
        // Predicated region
        $region53: #{tpu_custom_call.1} parent=39 // pred_check
          %p279 = pneg %p119
        $region54: #{tpu_custom_call.1} parent=39 // pred_check_branch
          %281 = sbr.rel (%p279) target = $region56
        $region55: #{tpu_custom_call.1} parent=39 // pred_region
          %282 = dma.done [#allocation10], 128
        $region56: #{tpu_custom_call.1} parent=39 // pred_fallthru
          _
        %s283 = sand.u32 %s23, 1
        %s284 = scalar_lea.sflag [#allocation3], %s283
        %s285 = sand.u32 %s132, 1
        %s286 = smul.addr %s285, 32
        %s287 = scalar_lea.vmem [#allocation11], %s286
        // Predicated region
        $region57: #{tpu_custom_call.1} parent=39 // pred_check
          %p288 = pneg %p145
        $region58: #{tpu_custom_call.1} parent=39 // pred_check_branch
          %290 = sbr.rel (%p288) target = $region60
        $region59: #{tpu_custom_call.1} parent=39 // pred_region
          %291 = dma.done %s284, 512
        $region60: #{tpu_custom_call.1} parent=39 // pred_fallthru
          _
        %292 = sfence
        %p293 = pneg %p51
        %p294 = pneg %p48
        %p295 = pneg %p72
        %p296 = pneg %p69
        %p297 = pneg %p98
        %p298 = pneg %p95
        %p299 = pneg %p119
        %p300 = pneg %p116
        %s301 = sand.u32 %s23, 1
        %s302 = scalar_lea.sflag [#allocation3], %s301
        %s303 = sand.u32 %s132, 1
        %s304 = smul.addr %s303, 32
        %s305 = scalar_lea.vmem [#allocation11], %s304
        %p306 = pneg %p145
        %p307 = pneg %p142
        %p308 = pneg %p173
        %p309 = pneg %p170
        %s310 = sand.u32 %s160, 1
        %s311 = scalar_lea.sflag [#allocation4], %s310
        %s312 = sand.u32 %s160, 1
        %s313 = smul.addr %s312, 128
        %s314 = scalar_lea.vmem [#allocation12], %s313
        %s315 = smul.u32 4, %s28
        %s316 = smul.u32 4, %s28
        %v318 = vld [vmem:[#allocation8] sm:$0xf]
        %v319 = vld [vmem:[#allocation8 + $0x4] sm:$0xf]
        %v320 = vld [vmem:[#allocation8 + $0x8] sm:$0xf]
        %v321 = vld [vmem:[#allocation8 + $0xc] sm:$0xf]
        %v322 = vld [vmem:[#allocation9] sm:$0xf]
        %v323 = vld [vmem:[#allocation9 + $0x4] sm:$0xf]
        %v324 = vld [vmem:[%s287] sm:$0xf]
        %v325 = vld [vmem:[%s287 + $0x4] sm:$0xf]
        %v330 = vunpack.c.l.b16 %v318
        %v331 = vunpack.c.l.b16 %v319
        %v332 = vunpack.c.l.b16 %v320
        %v333 = vunpack.c.l.b16 %v321
        %v334 = vpack.c.b16 %v331, %v330
        %v335 = vpack.c.b16 %v333, %v332
        %v338 = vunpack.c.l.b16 %v324
        %v339 = vunpack.c.l.b16 %v325
        %v340 = vpack.c.b16 %v339, %v338
        %vm342 = vcmask 130048
        %v344 = vsel %vm342, %v334, 0
        %v347 = vsel %vm342, %v335, 0
        %349 = vmatprep.subr.bf16.mxu0 0
        %350 = vmatpush1.bf16.msra.mxu0 %v340
        %351 = vmatprep.subr.bf16.mxu0 0
        %352 = vmatpush1.bf16.msra.mxu0 0
        %353 = vmatprep.subr.bf16.mxu0 0
        %354 = vmatpush1.bf16.msra.mxu0 0
        %355 = vmatprep.subr.bf16.mxu0 0
        %356 = vmatpush1.bf16.msra.mxu0 0
        %357 = vmatprep.subr.bf16.mxu0 0
        %358 = vmatpush1.bf16.msra.mxu0 0
        %359 = vmatprep.subr.bf16.mxu0 0
        %360 = vmatpush1.bf16.msra.mxu0 0
        %361 = vmatprep.subr.bf16.mxu0 0
        %362 = vmatpush1.bf16.msra.mxu0 0
        %363 = vmatprep.subr.bf16.mxu0 0
        %364 = vmatpush1.bf16.msra.mxu0 0
        %365 = vmatprep.subr.bf16.mxu0 0
        %366 = vmatpush1.bf16.msra.mxu0 0
        %367 = vmatprep.subr.bf16.mxu0 0
        %368 = vmatpush1.bf16.msra.mxu0 0
        %369 = vmatprep.subr.bf16.mxu0 0
        %370 = vmatpush1.bf16.msra.mxu0 0
        %371 = vmatprep.subr.bf16.mxu0 0
        %372 = vmatpush1.bf16.msra.mxu0 0
        %373 = vmatprep.subr.bf16.mxu0 0
        %374 = vmatpush1.bf16.msra.mxu0 0
        %375 = vmatprep.subr.bf16.mxu0 0
        %376 = vmatpush1.bf16.msra.mxu0 0
        %377 = vmatprep.subr.bf16.mxu0 0
        %378 = vmatpush1.bf16.msra.mxu0 0
        %379 = vmatprep.subr.bf16.mxu0 0
        %380 = vmatpush1.bf16.msra.mxu0 0
        %381 = vmatprep.mubr.bf16.mxu0 0
        %382 = vmatmul.mubr.bf16.gmra.mrb[0].mxu0 %v344
        %v383 = vpop.f32.mrb[0].mxu0
        %v384 = vadd.f32 0.0, %v383
        %v385 = vpop.f32.mrb[0].mxu0
        %v386 = vpop.f32.mrb[0].mxu0
        %v387 = vadd.f32 0.0, %v386
        %v388 = vpop.f32.mrb[0].mxu0
        %389 = vmatprep.mubr.bf16.mxu0 0
        %390 = vmatmul.mubr.bf16.gmra.mrb[0].mxu0 %v347
        %v391 = vpop.f32.mrb[0].mxu0
        %v392 = vadd.f32 0.0, %v391
        %v393 = vpop.f32.mrb[0].mxu0
        %v394 = vpop.f32.mrb[0].mxu0
        %v395 = vadd.f32 0.0, %v394
        %v396 = vpop.f32.mrb[0].mxu0
        %397 = vdwg.mxu0
        %v398 = vpack.c.bf16 %v387, %v384
        %v399 = vpack.c.bf16 %v395, %v392
        %s400 = scalar_lea.vmem %s287, 8 [#allocation11]
        %v401 = vld [vmem:[%s400] sm:$0xf]
        %v402 = vld [vmem:[%s400 + $0x4] sm:$0xf]
        %v405 = vunpack.c.l.b16 %v401
        %v406 = vunpack.c.l.b16 %v402
        %v407 = vpack.c.b16 %v406, %v405
        %409 = vmatprep.subr.bf16.mxu0 0
        %410 = vmatpush1.bf16.msra.mxu0 %v407
        %411 = vmatprep.subr.bf16.mxu0 0
        %412 = vmatpush1.bf16.msra.mxu0 0
        %413 = vmatprep.subr.bf16.mxu0 0
        %414 = vmatpush1.bf16.msra.mxu0 0
        %415 = vmatprep.subr.bf16.mxu0 0
        %416 = vmatpush1.bf16.msra.mxu0 0
        %417 = vmatprep.subr.bf16.mxu0 0
        %418 = vmatpush1.bf16.msra.mxu0 0
        %419 = vmatprep.subr.bf16.mxu0 0
        %420 = vmatpush1.bf16.msra.mxu0 0
        %421 = vmatprep.subr.bf16.mxu0 0
        %422 = vmatpush1.bf16.msra.mxu0 0
        %423 = vmatprep.subr.bf16.mxu0 0
        %424 = vmatpush1.bf16.msra.mxu0 0
        %425 = vmatprep.subr.bf16.mxu0 0
        %426 = vmatpush1.bf16.msra.mxu0 0
        %427 = vmatprep.subr.bf16.mxu0 0
        %428 = vmatpush1.bf16.msra.mxu0 0
        %429 = vmatprep.subr.bf16.mxu0 0
        %430 = vmatpush1.bf16.msra.mxu0 0
        %431 = vmatprep.subr.bf16.mxu0 0
        %432 = vmatpush1.bf16.msra.mxu0 0
        %433 = vmatprep.subr.bf16.mxu0 0
        %434 = vmatpush1.bf16.msra.mxu0 0
        %435 = vmatprep.subr.bf16.mxu0 0
        %436 = vmatpush1.bf16.msra.mxu0 0
        %437 = vmatprep.subr.bf16.mxu0 0
        %438 = vmatpush1.bf16.msra.mxu0 0
        %439 = vmatprep.subr.bf16.mxu0 0
        %440 = vmatpush1.bf16.msra.mxu0 0
        %441 = vmatprep.mubr.bf16.mxu0 0
        %442 = vmatmul.mubr.bf16.gmra.mrb[0].mxu0 %v344
        %v443 = vpop.f32.mrb[0].mxu0
        %v444 = vadd.f32 0.0, %v443
        %v445 = vpop.f32.mrb[0].mxu0
        %v446 = vpop.f32.mrb[0].mxu0
        %v447 = vadd.f32 0.0, %v446
        %v448 = vpop.f32.mrb[0].mxu0
        %449 = vmatprep.mubr.bf16.mxu0 0
        %450 = vmatmul.mubr.bf16.gmra.mrb[0].mxu0 %v347
        %v451 = vpop.f32.mrb[0].mxu0
        %v452 = vadd.f32 0.0, %v451
        %v453 = vpop.f32.mrb[0].mxu0
        %v454 = vpop.f32.mrb[0].mxu0
        %v455 = vadd.f32 0.0, %v454
        %v456 = vpop.f32.mrb[0].mxu0
        %457 = vdwg.mxu0
        %v458 = vpack.c.bf16 %v447, %v444
        %v459 = vpack.c.bf16 %v455, %v452
        %s460 = scalar_lea.vmem %s287, 16 [#allocation11]
        %v461 = vld [vmem:[%s460] sm:$0xf]
        %v462 = vld [vmem:[%s460 + $0x4] sm:$0xf]
        %v465 = vunpack.c.l.b16 %v461
        %v466 = vunpack.c.l.b16 %v462
        %v467 = vpack.c.b16 %v466, %v465
        %469 = vmatprep.subr.bf16.mxu0 0
        %470 = vmatpush1.bf16.msra.mxu0 %v467
        %471 = vmatprep.subr.bf16.mxu0 0
        %472 = vmatpush1.bf16.msra.mxu0 0
        %473 = vmatprep.subr.bf16.mxu0 0
        %474 = vmatpush1.bf16.msra.mxu0 0
        %475 = vmatprep.subr.bf16.mxu0 0
        %476 = vmatpush1.bf16.msra.mxu0 0
        %477 = vmatprep.subr.bf16.mxu0 0
        %478 = vmatpush1.bf16.msra.mxu0 0
        %479 = vmatprep.subr.bf16.mxu0 0
        %480 = vmatpush1.bf16.msra.mxu0 0
        %481 = vmatprep.subr.bf16.mxu0 0
        %482 = vmatpush1.bf16.msra.mxu0 0
        %483 = vmatprep.subr.bf16.mxu0 0
        %484 = vmatpush1.bf16.msra.mxu0 0
        %485 = vmatprep.subr.bf16.mxu0 0
        %486 = vmatpush1.bf16.msra.mxu0 0
        %487 = vmatprep.subr.bf16.mxu0 0
        %488 = vmatpush1.bf16.msra.mxu0 0
        %489 = vmatprep.subr.bf16.mxu0 0
        %490 = vmatpush1.bf16.msra.mxu0 0
        %491 = vmatprep.subr.bf16.mxu0 0
        %492 = vmatpush1.bf16.msra.mxu0 0
        %493 = vmatprep.subr.bf16.mxu0 0
        %494 = vmatpush1.bf16.msra.mxu0 0
        %495 = vmatprep.subr.bf16.mxu0 0
        %496 = vmatpush1.bf16.msra.mxu0 0
        %497 = vmatprep.subr.bf16.mxu0 0
        %498 = vmatpush1.bf16.msra.mxu0 0
        %499 = vmatprep.subr.bf16.mxu0 0
        %500 = vmatpush1.bf16.msra.mxu0 0
        %501 = vmatprep.mubr.bf16.mxu0 0
        %502 = vmatmul.mubr.bf16.gmra.mrb[0].mxu0 %v344
        %v503 = vpop.f32.mrb[0].mxu0
        %v504 = vadd.f32 0.0, %v503
        %v505 = vpop.f32.mrb[0].mxu0
        %v506 = vpop.f32.mrb[0].mxu0
        %v507 = vadd.f32 0.0, %v506
        %v508 = vpop.f32.mrb[0].mxu0
        %509 = vmatprep.mubr.bf16.mxu0 0
        %510 = vmatmul.mubr.bf16.gmra.mrb[0].mxu0 %v347
        %v511 = vpop.f32.mrb[0].mxu0
        %v512 = vadd.f32 0.0, %v511
        %v513 = vpop.f32.mrb[0].mxu0
        %v514 = vpop.f32.mrb[0].mxu0
        %v515 = vadd.f32 0.0, %v514
        %v516 = vpop.f32.mrb[0].mxu0
        %517 = vdwg.mxu0
        %v518 = vpack.c.bf16 %v507, %v504
        %v519 = vpack.c.bf16 %v515, %v512
        %s520 = scalar_lea.vmem %s287, 24 [#allocation11]
        %v521 = vld [vmem:[%s520] sm:$0xf]
        %v522 = vld [vmem:[%s520 + $0x4] sm:$0xf]
        %v525 = vunpack.c.l.b16 %v521
        %v526 = vunpack.c.l.b16 %v522
        %v527 = vpack.c.b16 %v526, %v525
        %529 = vmatprep.subr.bf16.mxu0 0
        %530 = vmatpush1.bf16.msra.mxu0 %v527
        %531 = vmatprep.subr.bf16.mxu0 0
        %532 = vmatpush1.bf16.msra.mxu0 0
        %533 = vmatprep.subr.bf16.mxu0 0
        %534 = vmatpush1.bf16.msra.mxu0 0
        %535 = vmatprep.subr.bf16.mxu0 0
        %536 = vmatpush1.bf16.msra.mxu0 0
        %537 = vmatprep.subr.bf16.mxu0 0
        %538 = vmatpush1.bf16.msra.mxu0 0
        %539 = vmatprep.subr.bf16.mxu0 0
        %540 = vmatpush1.bf16.msra.mxu0 0
        %541 = vmatprep.subr.bf16.mxu0 0
        %542 = vmatpush1.bf16.msra.mxu0 0
        %543 = vmatprep.subr.bf16.mxu0 0
        %544 = vmatpush1.bf16.msra.mxu0 0
        %545 = vmatprep.subr.bf16.mxu0 0
        %546 = vmatpush1.bf16.msra.mxu0 0
        %547 = vmatprep.subr.bf16.mxu0 0
        %548 = vmatpush1.bf16.msra.mxu0 0
        %549 = vmatprep.subr.bf16.mxu0 0
        %550 = vmatpush1.bf16.msra.mxu0 0
        %551 = vmatprep.subr.bf16.mxu0 0
        %552 = vmatpush1.bf16.msra.mxu0 0
        %553 = vmatprep.subr.bf16.mxu0 0
        %554 = vmatpush1.bf16.msra.mxu0 0
        %555 = vmatprep.subr.bf16.mxu0 0
        %556 = vmatpush1.bf16.msra.mxu0 0
        %557 = vmatprep.subr.bf16.mxu0 0
        %558 = vmatpush1.bf16.msra.mxu0 0
        %559 = vmatprep.subr.bf16.mxu0 0
        %560 = vmatpush1.bf16.msra.mxu0 0
        %561 = vmatprep.mubr.bf16.mxu0 0
        %562 = vmatmul.mubr.bf16.gmra.mrb[0].mxu0 %v344
        %v563 = vpop.f32.mrb[0].mxu0
        %v564 = vadd.f32 0.0, %v563
        %v565 = vpop.f32.mrb[0].mxu0
        %v566 = vpop.f32.mrb[0].mxu0
        %v567 = vadd.f32 0.0, %v566
        %v568 = vpop.f32.mrb[0].mxu0
        %569 = vmatprep.mubr.bf16.mxu0 0
        %570 = vmatmul.mubr.bf16.gmra.mrb[0].mxu0 %v347
        %v571 = vpop.f32.mrb[0].mxu0
        %v572 = vadd.f32 0.0, %v571
        %v573 = vpop.f32.mrb[0].mxu0
        %v574 = vpop.f32.mrb[0].mxu0
        %v575 = vadd.f32 0.0, %v574
        %v576 = vpop.f32.mrb[0].mxu0
        %577 = vdwg.mxu0
        %v578 = vpack.c.bf16 %v567, %v564
        %v579 = vpack.c.bf16 %v575, %v572
        %v582 = vunpack.c.l.b16 %v322
        %v583 = vunpack.c.l.b16 %v323
        %v584 = vpack.c.b16 %v583, %v582
        %v587 = vsel %vm342, %v398, 0
        %v590 = vsel %vm342, %v399, 0
        %v593 = vsel %vm342, %v458, 0
        %v596 = vsel %vm342, %v459, 0
        %v599 = vsel %vm342, %v518, 0
        %v602 = vsel %vm342, %v519, 0
        %v605 = vsel %vm342, %v578, 0
        %v608 = vsel %vm342, %v579, 0
        %610 = vmatprep.subr.bf16.mxu0 0
        %611 = vmatpush1.bf16.msra.mxu0 %v584
        %612 = vmatprep.subr.bf16.mxu0 0
        %613 = vmatpush1.bf16.msra.mxu0 0
        %614 = vmatprep.subr.bf16.mxu0 0
        %615 = vmatpush1.bf16.msra.mxu0 0
        %616 = vmatprep.subr.bf16.mxu0 0
        %617 = vmatpush1.bf16.msra.mxu0 0
        %618 = vmatprep.subr.bf16.mxu0 0
        %619 = vmatpush1.bf16.msra.mxu0 0
        %620 = vmatprep.subr.bf16.mxu0 0
        %621 = vmatpush1.bf16.msra.mxu0 0
        %622 = vmatprep.subr.bf16.mxu0 0
        %623 = vmatpush1.bf16.msra.mxu0 0
        %624 = vmatprep.subr.bf16.mxu0 0
        %625 = vmatpush1.bf16.msra.mxu0 0
        %626 = vmatprep.subr.bf16.mxu0 0
        %627 = vmatpush1.bf16.msra.mxu0 0
        %628 = vmatprep.subr.bf16.mxu0 0
        %629 = vmatpush1.bf16.msra.mxu0 0
        %630 = vmatprep.subr.bf16.mxu0 0
        %631 = vmatpush1.bf16.msra.mxu0 0
        %632 = vmatprep.subr.bf16.mxu0 0
        %633 = vmatpush1.bf16.msra.mxu0 0
        %634 = vmatprep.subr.bf16.mxu0 0
        %635 = vmatpush1.bf16.msra.mxu0 0
        %636 = vmatprep.subr.bf16.mxu0 0
        %637 = vmatpush1.bf16.msra.mxu0 0
        %638 = vmatprep.subr.bf16.mxu0 0
        %639 = vmatpush1.bf16.msra.mxu0 0
        %640 = vmatprep.subr.bf16.mxu0 0
        %641 = vmatpush1.bf16.msra.mxu0 0
        %642 = vmatprep.mubr.bf16.mxu0 0
        %643 = vmatmul.mubr.bf16.gmra.mrb[0].mxu0 %v587
        %v644 = vpop.f32.mrb[0].mxu0
        %v645 = vadd.f32 0.0, %v644
        %v646 = vpop.f32.mrb[0].mxu0
        %v647 = vpop.f32.mrb[0].mxu0
        %v648 = vadd.f32 0.0, %v647
        %v649 = vpop.f32.mrb[0].mxu0
        %650 = vmatprep.mubr.bf16.mxu0 0
        %651 = vmatmul.mubr.bf16.gmra.mrb[0].mxu0 %v590
        %v652 = vpop.f32.mrb[0].mxu0
        %v653 = vadd.f32 0.0, %v652
        %v654 = vpop.f32.mrb[0].mxu0
        %v655 = vpop.f32.mrb[0].mxu0
        %v656 = vadd.f32 0.0, %v655
        %v657 = vpop.f32.mrb[0].mxu0
        %658 = vmatprep.mubr.bf16.mxu0 0
        %659 = vmatmul.mubr.bf16.gmra.mrb[0].mxu0 %v593
        %v660 = vpop.f32.mrb[0].mxu0
        %v661 = vadd.f32 0.0, %v660
        %v662 = vpop.f32.mrb[0].mxu0
        %v663 = vpop.f32.mrb[0].mxu0
        %v664 = vadd.f32 0.0, %v663
        %v665 = vpop.f32.mrb[0].mxu0
        %666 = vmatprep.mubr.bf16.mxu0 0
        %667 = vmatmul.mubr.bf16.gmra.mrb[0].mxu0 %v596
        %v668 = vpop.f32.mrb[0].mxu0
        %v669 = vadd.f32 0.0, %v668
        %v670 = vpop.f32.mrb[0].mxu0
        %v671 = vpop.f32.mrb[0].mxu0
        %v672 = vadd.f32 0.0, %v671
        %v673 = vpop.f32.mrb[0].mxu0
        %674 = vmatprep.mubr.bf16.mxu0 0
        %675 = vmatmul.mubr.bf16.gmra.mrb[0].mxu0 %v599
        %v676 = vpop.f32.mrb[0].mxu0
        %v677 = vadd.f32 0.0, %v676
        %v678 = vpop.f32.mrb[0].mxu0
        %v679 = vpop.f32.mrb[0].mxu0
        %v680 = vadd.f32 0.0, %v679
        %v681 = vpop.f32.mrb[0].mxu0
        %682 = vmatprep.mubr.bf16.mxu0 0
        %683 = vmatmul.mubr.bf16.gmra.mrb[0].mxu0 %v602
        %v684 = vpop.f32.mrb[0].mxu0
        %v685 = vadd.f32 0.0, %v684
        %v686 = vpop.f32.mrb[0].mxu0
        %v687 = vpop.f32.mrb[0].mxu0
        %v688 = vadd.f32 0.0, %v687
        %v689 = vpop.f32.mrb[0].mxu0
        %690 = vmatprep.mubr.bf16.mxu0 0
        %691 = vmatmul.mubr.bf16.gmra.mrb[0].mxu0 %v605
        %v692 = vpop.f32.mrb[0].mxu0
        %v693 = vadd.f32 0.0, %v692
        %v694 = vpop.f32.mrb[0].mxu0
        %v695 = vpop.f32.mrb[0].mxu0
        %v696 = vadd.f32 0.0, %v695
        %v697 = vpop.f32.mrb[0].mxu0
        %698 = vmatprep.mubr.bf16.mxu0 0
        %699 = vmatmul.mubr.bf16.gmra.mrb[0].mxu0 %v608
        %v700 = vpop.f32.mrb[0].mxu0
        %v701 = vadd.f32 0.0, %v700
        %v702 = vpop.f32.mrb[0].mxu0
        %v703 = vpop.f32.mrb[0].mxu0
        %v704 = vadd.f32 0.0, %v703
        %v705 = vpop.f32.mrb[0].mxu0
        %706 = vdwg.mxu0
        %vm707 = vcmask 261120
        %708 = vst.msk [vmem:[%s314] sm:$0xff] %vm707, %v645
        %709 = vst.msk [vmem:[%s314 + $0x8] sm:$0xff] %vm707, %v648
        %710 = vst.msk [vmem:[%s314 + $0x10] sm:$0xff] %vm707, %v653
        %711 = vst.msk [vmem:[%s314 + $0x18] sm:$0xff] %vm707, %v656
        %s712 = scalar_lea.vmem %s314, 32 [#allocation12]
        %713 = vst.msk [vmem:[%s712] sm:$0xff] %vm707, %v661
        %714 = vst.msk [vmem:[%s712 + $0x8] sm:$0xff] %vm707, %v664
        %715 = vst.msk [vmem:[%s712 + $0x10] sm:$0xff] %vm707, %v669
        %716 = vst.msk [vmem:[%s712 + $0x18] sm:$0xff] %vm707, %v672
        %s717 = scalar_lea.vmem %s314, 64 [#allocation12]
        %718 = vst.msk [vmem:[%s717] sm:$0xff] %vm707, %v677
        %719 = vst.msk [vmem:[%s717 + $0x8] sm:$0xff] %vm707, %v680
        %720 = vst.msk [vmem:[%s717 + $0x10] sm:$0xff] %vm707, %v685
        %721 = vst.msk [vmem:[%s717 + $0x18] sm:$0xff] %vm707, %v688
        %s722 = scalar_lea.vmem %s314, 96 [#allocation12]
        %723 = vst.msk [vmem:[%s722] sm:$0xff] %vm707, %v693
        %724 = vst.msk [vmem:[%s722 + $0x8] sm:$0xff] %vm707, %v696
        %725 = vst.msk [vmem:[%s722 + $0x10] sm:$0xff] %vm707, %v701
        %726 = vst.msk [vmem:[%s722 + $0x18] sm:$0xff] %vm707, %v704
        %s727 = sld [smem:[#allocation2]]
        %s728 = sld [smem:[#allocation2 + $0x1]]
        %s729 = sld [smem:[#allocation2 + $0x2]]
        %s730 = sld [smem:[#allocation2 + $0x3]]
        %s731 = sld [smem:[#allocation2 + $0x80]]
        %s732 = sld [smem:[#allocation2 + $0x81]]
        %s733 = sld [smem:[#allocation2 + $0x82]]
        %s734 = sld [smem:[#allocation2 + $0x83]]
        %s735 = sld [smem:[#allocation2 + $0x100]]
        %s736 = sld [smem:[#allocation2 + $0x101]]
        %s737 = sld [smem:[#allocation2 + $0x102]]
        %s738 = sld [smem:[#allocation2 + $0x103]]
        %s739 = sld [smem:[#allocation2 + $0x180]]
        %s740 = sld [smem:[#allocation2 + $0x181]]
        %s741 = sld [smem:[#allocation2 + $0x182]]
        %s742 = sld [smem:[#allocation2 + $0x183]]
        %s743 = sld [smem:[#allocation2 + $0x200]]
        %s744 = sld [smem:[#allocation2 + $0x201]]
        %s745 = sld [smem:[#allocation2 + $0x202]]
        %s746 = sld [smem:[#allocation2 + $0x203]]
        %s747 = sld [smem:[#allocation2 + $0x280]]
        %s748 = sld [smem:[#allocation2 + $0x281]]
        %s749 = sld [smem:[#allocation2 + $0x282]]
        %s750 = sld [smem:[#allocation2 + $0x283]]
        %s751 = sld [smem:[#allocation2 + $0x300]]
        %s752 = sld [smem:[#allocation2 + $0x301]]
        %s753 = sld [smem:[#allocation2 + $0x302]]
        %s754 = sld [smem:[#allocation2 + $0x303]]
        %s755 = sld [smem:[#allocation2 + $0x380]]
        %s756 = sld [smem:[#allocation2 + $0x381]]
        %s757 = sld [smem:[#allocation2 + $0x382]]
        %s758 = sld [smem:[#allocation2 + $0x383]]
        %s759 = sld [smem:[#allocation6]]
        %s760 = sld [smem:[#allocation6 + $0x1]]
        %s761 = sld [smem:[#allocation6 + $0x2]]
        %s762 = sld [smem:[#allocation6 + $0x3]]
        %s763 = sld [smem:[#allocation6 + $0x4]]
        %s764 = sld [smem:[#allocation6 + $0x5]]
        %s765 = sld [smem:[#allocation6 + $0x6]]
        %s766 = sld [smem:[#allocation6 + $0x7]]
        %s767 = sld [smem:[#allocation6 + $0x80]]
        %s768 = sld [smem:[#allocation6 + $0x81]]
        %s769 = sld [smem:[#allocation6 + $0x82]]
        %s770 = sld [smem:[#allocation6 + $0x83]]
        %s771 = sld [smem:[#allocation6 + $0x84]]
        %s772 = sld [smem:[#allocation6 + $0x85]]
        %s773 = sld [smem:[#allocation6 + $0x86]]
        %s774 = sld [smem:[#allocation6 + $0x87]]
        %s775 = sld [smem:[#allocation6 + $0x100]]
        %s776 = sld [smem:[#allocation6 + $0x101]]
        %s777 = sld [smem:[#allocation6 + $0x102]]
        %s778 = sld [smem:[#allocation6 + $0x103]]
        %s779 = sld [smem:[#allocation6 + $0x104]]
        %s780 = sld [smem:[#allocation6 + $0x105]]
        %s781 = sld [smem:[#allocation6 + $0x106]]
        %s782 = sld [smem:[#allocation6 + $0x107]]
        %s783 = sld [smem:[#allocation6 + $0x180]]
        %s784 = sld [smem:[#allocation6 + $0x181]]
        %s785 = sld [smem:[#allocation6 + $0x182]]
        %s786 = sld [smem:[#allocation6 + $0x183]]
        %s787 = sld [smem:[#allocation6 + $0x184]]
        %s788 = sld [smem:[#allocation6 + $0x185]]
        %s789 = sld [smem:[#allocation6 + $0x186]]
        %s790 = sld [smem:[#allocation6 + $0x187]]
        loop: start=0, step=1, limit=4
        $region61: #{tpu_custom_call.1} parent=39 // loop_pre_header
          _
        $region62: #{tpu_custom_call.1} parent=39 // loop_header
          %s792 = sphi 0, %s796
          %p793 = scmp.ge.s32.totalorder %s792, 4
        $region63: #{tpu_custom_call.1} parent=39 // loop_header_branch
          %795 = sbr.rel (%p793) target = $region67
        $region64: #{tpu_custom_call.1} parent=39 // loop_body
          %s797 = smul.u32 %s792, 8
          %s798 = scalar_lea.vmem %s314, %s797 [#allocation12]
          %v799 = vld [vmem:[%s798] sm:$0xff]
          %s800 = sadd.s32 %s797, 32
          %s801 = scalar_lea.vmem %s314, %s800 [#allocation12]
          %v802 = vld [vmem:[%s801] sm:$0xff]
          %s803 = sadd.s32 %s797, 64
          %s804 = scalar_lea.vmem %s314, %s803 [#allocation12]
          %v805 = vld [vmem:[%s804] sm:$0xff]
          %s806 = sadd.s32 %s797, 96
          %s807 = scalar_lea.vmem %s314, %s806 [#allocation12]
          %v808 = vld [vmem:[%s807] sm:$0xff]
          %v809 = vstv %s727
          %v810 = vmul.f32 %v809, %v799
          %v811 = vstv %s728
          %v812 = vmul.f32 %v811, %v802
          %v813 = vadd.f32 %v810, %v812
          %v814 = vstv %s729
          %v815 = vmul.f32 %v814, %v805
          %v816 = vadd.f32 %v813, %v815
          %v817 = vstv %s730
          %v818 = vmul.f32 %v817, %v808
          %v819 = vadd.f32 %v816, %v818
          %v820 = vtanh.pop %v819
          %v821 = vstv %s759
          %v822 = vmul.f32 %v821, %v820
          %v823 = vadd.f32 %v799, %v822
          %v824 = vstv %s767
          %v825 = vmul.f32 %v824, %v820
          %v826 = vadd.f32 %v802, %v825
          %v827 = vstv %s775
          %v828 = vmul.f32 %v827, %v820
          %v829 = vadd.f32 %v805, %v828
          %v830 = vstv %s783
          %v831 = vmul.f32 %v830, %v820
          %v832 = vadd.f32 %v808, %v831
          %v833 = vstv %s731
          %v834 = vmul.f32 %v833, %v799
          %v835 = vstv %s732
          %v836 = vmul.f32 %v835, %v802
          %v837 = vadd.f32 %v834, %v836
          %v838 = vstv %s733
          %v839 = vmul.f32 %v838, %v805
          %v840 = vadd.f32 %v837, %v839
          %v841 = vstv %s734
          %v842 = vmul.f32 %v841, %v808
          %v843 = vadd.f32 %v840, %v842
          %v844 = vtanh.pop %v843
          %v845 = vstv %s760
          %v846 = vmul.f32 %v845, %v844
          %v847 = vadd.f32 %v823, %v846
          %v848 = vstv %s768
          %v849 = vmul.f32 %v848, %v844
          %v850 = vadd.f32 %v826, %v849
          %v851 = vstv %s776
          %v852 = vmul.f32 %v851, %v844
          %v853 = vadd.f32 %v829, %v852
          %v854 = vstv %s784
          %v855 = vmul.f32 %v854, %v844
          %v856 = vadd.f32 %v832, %v855
          %v857 = vstv %s735
          %v858 = vmul.f32 %v857, %v799
          %v859 = vstv %s736
          %v860 = vmul.f32 %v859, %v802
          %v861 = vadd.f32 %v858, %v860
          %v862 = vstv %s737
          %v863 = vmul.f32 %v862, %v805
          %v864 = vadd.f32 %v861, %v863
          %v865 = vstv %s738
          %v866 = vmul.f32 %v865, %v808
          %v867 = vadd.f32 %v864, %v866
          %v868 = vtanh.pop %v867
          %v869 = vstv %s761
          %v870 = vmul.f32 %v869, %v868
          %v871 = vadd.f32 %v847, %v870
          %v872 = vstv %s769
          %v873 = vmul.f32 %v872, %v868
          %v874 = vadd.f32 %v850, %v873
          %v875 = vstv %s777
          %v876 = vmul.f32 %v875, %v868
          %v877 = vadd.f32 %v853, %v876
          %v878 = vstv %s785
          %v879 = vmul.f32 %v878, %v868
          %v880 = vadd.f32 %v856, %v879
          %v881 = vstv %s739
          %v882 = vmul.f32 %v881, %v799
          %v883 = vstv %s740
          %v884 = vmul.f32 %v883, %v802
          %v885 = vadd.f32 %v882, %v884
          %v886 = vstv %s741
          %v887 = vmul.f32 %v886, %v805
          %v888 = vadd.f32 %v885, %v887
          %v889 = vstv %s742
          %v890 = vmul.f32 %v889, %v808
          %v891 = vadd.f32 %v888, %v890
          %v892 = vtanh.pop %v891
          %v893 = vstv %s762
          %v894 = vmul.f32 %v893, %v892
          %v895 = vadd.f32 %v871, %v894
          %v896 = vstv %s770
          %v897 = vmul.f32 %v896, %v892
          %v898 = vadd.f32 %v874, %v897
          %v899 = vstv %s778
          %v900 = vmul.f32 %v899, %v892
          %v901 = vadd.f32 %v877, %v900
          %v902 = vstv %s786
          %v903 = vmul.f32 %v902, %v892
          %v904 = vadd.f32 %v880, %v903
          %v905 = vstv %s743
          %v906 = vmul.f32 %v905, %v799
          %v907 = vstv %s744
          %v908 = vmul.f32 %v907, %v802
          %v909 = vadd.f32 %v906, %v908
          %v910 = vstv %s745
          %v911 = vmul.f32 %v910, %v805
          %v912 = vadd.f32 %v909, %v911
          %v913 = vstv %s746
          %v914 = vmul.f32 %v913, %v808
          %v915 = vadd.f32 %v912, %v914
          %v916 = vtanh.pop %v915
          %v917 = vstv %s763
          %v918 = vmul.f32 %v917, %v916
          %v919 = vadd.f32 %v895, %v918
          %v920 = vstv %s771
          %v921 = vmul.f32 %v920, %v916
          %v922 = vadd.f32 %v898, %v921
          %v923 = vstv %s779
          %v924 = vmul.f32 %v923, %v916
          %v925 = vadd.f32 %v901, %v924
          %v926 = vstv %s787
          %v927 = vmul.f32 %v926, %v916
          %v928 = vadd.f32 %v904, %v927
          %v929 = vstv %s747
          %v930 = vmul.f32 %v929, %v799
          %v931 = vstv %s748
          %v932 = vmul.f32 %v931, %v802
          %v933 = vadd.f32 %v930, %v932
          %v934 = vstv %s749
          %v935 = vmul.f32 %v934, %v805
          %v936 = vadd.f32 %v933, %v935
          %v937 = vstv %s750
          %v938 = vmul.f32 %v937, %v808
          %v939 = vadd.f32 %v936, %v938
          %v940 = vtanh.pop %v939
          %v941 = vstv %s764
          %v942 = vmul.f32 %v941, %v940
          %v943 = vadd.f32 %v919, %v942
          %v944 = vstv %s772
          %v945 = vmul.f32 %v944, %v940
          %v946 = vadd.f32 %v922, %v945
          %v947 = vstv %s780
          %v948 = vmul.f32 %v947, %v940
          %v949 = vadd.f32 %v925, %v948
          %v950 = vstv %s788
          %v951 = vmul.f32 %v950, %v940
          %v952 = vadd.f32 %v928, %v951
          %v953 = vstv %s751
          %v954 = vmul.f32 %v953, %v799
          %v955 = vstv %s752
          %v956 = vmul.f32 %v955, %v802
          %v957 = vadd.f32 %v954, %v956
          %v958 = vstv %s753
          %v959 = vmul.f32 %v958, %v805
          %v960 = vadd.f32 %v957, %v959
          %v961 = vstv %s754
          %v962 = vmul.f32 %v961, %v808
          %v963 = vadd.f32 %v960, %v962
          %v964 = vtanh.pop %v963
          %v965 = vstv %s765
          %v966 = vmul.f32 %v965, %v964
          %v967 = vadd.f32 %v943, %v966
          %v968 = vstv %s773
          %v969 = vmul.f32 %v968, %v964
          %v970 = vadd.f32 %v946, %v969
          %v971 = vstv %s781
          %v972 = vmul.f32 %v971, %v964
          %v973 = vadd.f32 %v949, %v972
          %v974 = vstv %s789
          %v975 = vmul.f32 %v974, %v964
          %v976 = vadd.f32 %v952, %v975
          %v977 = vstv %s755
          %v978 = vmul.f32 %v977, %v799
          %v979 = vstv %s756
          %v980 = vmul.f32 %v979, %v802
          %v981 = vadd.f32 %v978, %v980
          %v982 = vstv %s757
          %v983 = vmul.f32 %v982, %v805
          %v984 = vadd.f32 %v981, %v983
          %v985 = vstv %s758
          %v986 = vmul.f32 %v985, %v808
          %v987 = vadd.f32 %v984, %v986
          %v988 = vtanh.pop %v987
          %v989 = vstv %s766
          %v990 = vmul.f32 %v989, %v988
          %v991 = vadd.f32 %v967, %v990
          %v992 = vstv %s774
          %v993 = vmul.f32 %v992, %v988
          %v994 = vadd.f32 %v970, %v993
          %v995 = vstv %s782
          %v996 = vmul.f32 %v995, %v988
          %v997 = vadd.f32 %v973, %v996
          %v998 = vstv %s790
          %v999 = vmul.f32 %v998, %v988
          %v1000 = vadd.f32 %v976, %v999
          %v1001 = vmul.f32 %v809, %v991
          %v1002 = vmul.f32 %v811, %v994
          %v1003 = vadd.f32 %v1001, %v1002
          %v1004 = vmul.f32 %v814, %v997
          %v1005 = vadd.f32 %v1003, %v1004
          %v1006 = vmul.f32 %v817, %v1000
          %v1007 = vadd.f32 %v1005, %v1006
          %v1008 = vtanh.pop %v1007
          %v1009 = vmul.f32 %v821, %v1008
          %v1010 = vadd.f32 %v991, %v1009
          %v1011 = vmul.f32 %v824, %v1008
          %v1012 = vadd.f32 %v994, %v1011
          %v1013 = vmul.f32 %v827, %v1008
          %v1014 = vadd.f32 %v997, %v1013
          %v1015 = vmul.f32 %v830, %v1008
          %v1016 = vadd.f32 %v1000, %v1015
          %v1017 = vmul.f32 %v833, %v991
          %v1018 = vmul.f32 %v835, %v994
          %v1019 = vadd.f32 %v1017, %v1018
          %v1020 = vmul.f32 %v838, %v997
          %v1021 = vadd.f32 %v1019, %v1020
          %v1022 = vmul.f32 %v841, %v1000
          %v1023 = vadd.f32 %v1021, %v1022
          %v1024 = vtanh.pop %v1023
          %v1025 = vmul.f32 %v845, %v1024
          %v1026 = vadd.f32 %v1010, %v1025
          %v1027 = vmul.f32 %v848, %v1024
          %v1028 = vadd.f32 %v1012, %v1027
          %v1029 = vmul.f32 %v851, %v1024
          %v1030 = vadd.f32 %v1014, %v1029
          %v1031 = vmul.f32 %v854, %v1024
          %v1032 = vadd.f32 %v1016, %v1031
          %v1033 = vmul.f32 %v857, %v991
          %v1034 = vmul.f32 %v859, %v994
          %v1035 = vadd.f32 %v1033, %v1034
          %v1036 = vmul.f32 %v862, %v997
          %v1037 = vadd.f32 %v1035, %v1036
          %v1038 = vmul.f32 %v865, %v1000
          %v1039 = vadd.f32 %v1037, %v1038
          %v1040 = vtanh.pop %v1039
          %v1041 = vmul.f32 %v869, %v1040
          %v1042 = vadd.f32 %v1026, %v1041
          %v1043 = vmul.f32 %v872, %v1040
          %v1044 = vadd.f32 %v1028, %v1043
          %v1045 = vmul.f32 %v875, %v1040
          %v1046 = vadd.f32 %v1030, %v1045
          %v1047 = vmul.f32 %v878, %v1040
          %v1048 = vadd.f32 %v1032, %v1047
          %v1049 = vmul.f32 %v881, %v991
          %v1050 = vmul.f32 %v883, %v994
          %v1051 = vadd.f32 %v1049, %v1050
          %v1052 = vmul.f32 %v886, %v997
          %v1053 = vadd.f32 %v1051, %v1052
          %v1054 = vmul.f32 %v889, %v1000
          %v1055 = vadd.f32 %v1053, %v1054
          %v1056 = vtanh.pop %v1055
          %v1057 = vmul.f32 %v893, %v1056
          %v1058 = vadd.f32 %v1042, %v1057
          %v1059 = vmul.f32 %v896, %v1056
          %v1060 = vadd.f32 %v1044, %v1059
          %v1061 = vmul.f32 %v899, %v1056
          %v1062 = vadd.f32 %v1046, %v1061
          %v1063 = vmul.f32 %v902, %v1056
          %v1064 = vadd.f32 %v1048, %v1063
          %v1065 = vmul.f32 %v905, %v991
          %v1066 = vmul.f32 %v907, %v994
          %v1067 = vadd.f32 %v1065, %v1066
          %v1068 = vmul.f32 %v910, %v997
          %v1069 = vadd.f32 %v1067, %v1068
          %v1070 = vmul.f32 %v913, %v1000
          %v1071 = vadd.f32 %v1069, %v1070
          %v1072 = vtanh.pop %v1071
          %v1073 = vmul.f32 %v917, %v1072
          %v1074 = vadd.f32 %v1058, %v1073
          %v1075 = vmul.f32 %v920, %v1072
          %v1076 = vadd.f32 %v1060, %v1075
          %v1077 = vmul.f32 %v923, %v1072
          %v1078 = vadd.f32 %v1062, %v1077
          %v1079 = vmul.f32 %v926, %v1072
          %v1080 = vadd.f32 %v1064, %v1079
          %v1081 = vmul.f32 %v929, %v991
          %v1082 = vmul.f32 %v931, %v994
          %v1083 = vadd.f32 %v1081, %v1082
          %v1084 = vmul.f32 %v934, %v997
          %v1085 = vadd.f32 %v1083, %v1084
          %v1086 = vmul.f32 %v937, %v1000
          %v1087 = vadd.f32 %v1085, %v1086
          %v1088 = vtanh.pop %v1087
          %v1089 = vmul.f32 %v941, %v1088
          %v1090 = vadd.f32 %v1074, %v1089
          %v1091 = vmul.f32 %v944, %v1088
          %v1092 = vadd.f32 %v1076, %v1091
          %v1093 = vmul.f32 %v947, %v1088
          %v1094 = vadd.f32 %v1078, %v1093
          %v1095 = vmul.f32 %v950, %v1088
          %v1096 = vadd.f32 %v1080, %v1095
          %v1097 = vmul.f32 %v953, %v991
          %v1098 = vmul.f32 %v955, %v994
          %v1099 = vadd.f32 %v1097, %v1098
          %v1100 = vmul.f32 %v958, %v997
          %v1101 = vadd.f32 %v1099, %v1100
          %v1102 = vmul.f32 %v961, %v1000
          %v1103 = vadd.f32 %v1101, %v1102
          %v1104 = vtanh.pop %v1103
          %v1105 = vmul.f32 %v965, %v1104
          %v1106 = vadd.f32 %v1090, %v1105
          %v1107 = vmul.f32 %v968, %v1104
          %v1108 = vadd.f32 %v1092, %v1107
          %v1109 = vmul.f32 %v971, %v1104
          %v1110 = vadd.f32 %v1094, %v1109
          %v1111 = vmul.f32 %v974, %v1104
          %v1112 = vadd.f32 %v1096, %v1111
          %v1113 = vmul.f32 %v977, %v991
          %v1114 = vmul.f32 %v979, %v994
          %v1115 = vadd.f32 %v1113, %v1114
          %v1116 = vmul.f32 %v982, %v997
          %v1117 = vadd.f32 %v1115, %v1116
          %v1118 = vmul.f32 %v985, %v1000
          %v1119 = vadd.f32 %v1117, %v1118
          %v1120 = vtanh.pop %v1119
          %v1121 = vmul.f32 %v989, %v1120
          %v1122 = vadd.f32 %v1106, %v1121
          %v1123 = vmul.f32 %v992, %v1120
          %v1124 = vadd.f32 %v1108, %v1123
          %v1125 = vmul.f32 %v995, %v1120
          %v1126 = vadd.f32 %v1110, %v1125
          %v1127 = vmul.f32 %v998, %v1120
          %v1128 = vadd.f32 %v1112, %v1127
          %v1129 = vmul.f32 %v809, %v1122
          %v1130 = vmul.f32 %v811, %v1124
          %v1131 = vadd.f32 %v1129, %v1130
          %v1132 = vmul.f32 %v814, %v1126
          %v1133 = vadd.f32 %v1131, %v1132
          %v1134 = vmul.f32 %v817, %v1128
          %v1135 = vadd.f32 %v1133, %v1134
          %v1136 = vtanh.pop %v1135
          %v1137 = vmul.f32 %v821, %v1136
          %v1138 = vadd.f32 %v1122, %v1137
          %v1139 = vmul.f32 %v824, %v1136
          %v1140 = vadd.f32 %v1124, %v1139
          %v1141 = vmul.f32 %v827, %v1136
          %v1142 = vadd.f32 %v1126, %v1141
          %v1143 = vmul.f32 %v830, %v1136
          %v1144 = vadd.f32 %v1128, %v1143
          %v1145 = vmul.f32 %v833, %v1122
          %v1146 = vmul.f32 %v835, %v1124
          %v1147 = vadd.f32 %v1145, %v1146
          %v1148 = vmul.f32 %v838, %v1126
          %v1149 = vadd.f32 %v1147, %v1148
          %v1150 = vmul.f32 %v841, %v1128
          %v1151 = vadd.f32 %v1149, %v1150
          %v1152 = vtanh.pop %v1151
          %v1153 = vmul.f32 %v845, %v1152
          %v1154 = vadd.f32 %v1138, %v1153
          %v1155 = vmul.f32 %v848, %v1152
          %v1156 = vadd.f32 %v1140, %v1155
          %v1157 = vmul.f32 %v851, %v1152
          %v1158 = vadd.f32 %v1142, %v1157
          %v1159 = vmul.f32 %v854, %v1152
          %v1160 = vadd.f32 %v1144, %v1159
          %v1161 = vmul.f32 %v857, %v1122
          %v1162 = vmul.f32 %v859, %v1124
          %v1163 = vadd.f32 %v1161, %v1162
          %v1164 = vmul.f32 %v862, %v1126
          %v1165 = vadd.f32 %v1163, %v1164
          %v1166 = vmul.f32 %v865, %v1128
          %v1167 = vadd.f32 %v1165, %v1166
          %v1168 = vtanh.pop %v1167
          %v1169 = vmul.f32 %v869, %v1168
          %v1170 = vadd.f32 %v1154, %v1169
          %v1171 = vmul.f32 %v872, %v1168
          %v1172 = vadd.f32 %v1156, %v1171
          %v1173 = vmul.f32 %v875, %v1168
          %v1174 = vadd.f32 %v1158, %v1173
          %v1175 = vmul.f32 %v878, %v1168
          %v1176 = vadd.f32 %v1160, %v1175
          %v1177 = vmul.f32 %v881, %v1122
          %v1178 = vmul.f32 %v883, %v1124
          %v1179 = vadd.f32 %v1177, %v1178
          %v1180 = vmul.f32 %v886, %v1126
          %v1181 = vadd.f32 %v1179, %v1180
          %v1182 = vmul.f32 %v889, %v1128
          %v1183 = vadd.f32 %v1181, %v1182
          %v1184 = vtanh.pop %v1183
          %v1185 = vmul.f32 %v893, %v1184
          %v1186 = vadd.f32 %v1170, %v1185
          %v1187 = vmul.f32 %v896, %v1184
          %v1188 = vadd.f32 %v1172, %v1187
          %v1189 = vmul.f32 %v899, %v1184
          %v1190 = vadd.f32 %v1174, %v1189
          %v1191 = vmul.f32 %v902, %v1184
          %v1192 = vadd.f32 %v1176, %v1191
          %v1193 = vmul.f32 %v905, %v1122
          %v1194 = vmul.f32 %v907, %v1124
          %v1195 = vadd.f32 %v1193, %v1194
          %v1196 = vmul.f32 %v910, %v1126
          %v1197 = vadd.f32 %v1195, %v1196
          %v1198 = vmul.f32 %v913, %v1128
          %v1199 = vadd.f32 %v1197, %v1198
          %v1200 = vtanh.pop %v1199
          %v1201 = vmul.f32 %v917, %v1200
          %v1202 = vadd.f32 %v1186, %v1201
          %v1203 = vmul.f32 %v920, %v1200
          %v1204 = vadd.f32 %v1188, %v1203
          %v1205 = vmul.f32 %v923, %v1200
          %v1206 = vadd.f32 %v1190, %v1205
          %v1207 = vmul.f32 %v926, %v1200
          %v1208 = vadd.f32 %v1192, %v1207
          %v1209 = vmul.f32 %v929, %v1122
          %v1210 = vmul.f32 %v931, %v1124
          %v1211 = vadd.f32 %v1209, %v1210
          %v1212 = vmul.f32 %v934, %v1126
          %v1213 = vadd.f32 %v1211, %v1212
          %v1214 = vmul.f32 %v937, %v1128
          %v1215 = vadd.f32 %v1213, %v1214
          %v1216 = vtanh.pop %v1215
          %v1217 = vmul.f32 %v941, %v1216
          %v1218 = vadd.f32 %v1202, %v1217
          %v1219 = vmul.f32 %v944, %v1216
          %v1220 = vadd.f32 %v1204, %v1219
          %v1221 = vmul.f32 %v947, %v1216
          %v1222 = vadd.f32 %v1206, %v1221
          %v1223 = vmul.f32 %v950, %v1216
          %v1224 = vadd.f32 %v1208, %v1223
          %v1225 = vmul.f32 %v953, %v1122
          %v1226 = vmul.f32 %v955, %v1124
          %v1227 = vadd.f32 %v1225, %v1226
          %v1228 = vmul.f32 %v958, %v1126
          %v1229 = vadd.f32 %v1227, %v1228
          %v1230 = vmul.f32 %v961, %v1128
          %v1231 = vadd.f32 %v1229, %v1230
          %v1232 = vtanh.pop %v1231
          %v1233 = vmul.f32 %v965, %v1232
          %v1234 = vadd.f32 %v1218, %v1233
          %v1235 = vmul.f32 %v968, %v1232
          %v1236 = vadd.f32 %v1220, %v1235
          %v1237 = vmul.f32 %v971, %v1232
          %v1238 = vadd.f32 %v1222, %v1237
          %v1239 = vmul.f32 %v974, %v1232
          %v1240 = vadd.f32 %v1224, %v1239
          %v1241 = vmul.f32 %v977, %v1122
          %v1242 = vmul.f32 %v979, %v1124
          %v1243 = vadd.f32 %v1241, %v1242
          %v1244 = vmul.f32 %v982, %v1126
          %v1245 = vadd.f32 %v1243, %v1244
          %v1246 = vmul.f32 %v985, %v1128
          %v1247 = vadd.f32 %v1245, %v1246
          %v1248 = vtanh.pop %v1247
          %v1249 = vmul.f32 %v989, %v1248
          %v1250 = vadd.f32 %v1234, %v1249
          %v1251 = vmul.f32 %v992, %v1248
          %v1252 = vadd.f32 %v1236, %v1251
          %v1253 = vmul.f32 %v995, %v1248
          %v1254 = vadd.f32 %v1238, %v1253
          %v1255 = vmul.f32 %v998, %v1248
          %v1256 = vadd.f32 %v1240, %v1255
          %v1257 = vmul.f32 %v809, %v1250
          %v1258 = vmul.f32 %v811, %v1252
          %v1259 = vadd.f32 %v1257, %v1258
          %v1260 = vmul.f32 %v814, %v1254
          %v1261 = vadd.f32 %v1259, %v1260
          %v1262 = vmul.f32 %v817, %v1256
          %v1263 = vadd.f32 %v1261, %v1262
          %v1264 = vtanh.pop %v1263
          %v1265 = vmul.f32 %v821, %v1264
          %v1266 = vadd.f32 %v1250, %v1265
          %v1267 = vmul.f32 %v824, %v1264
          %v1268 = vadd.f32 %v1252, %v1267
          %v1269 = vmul.f32 %v827, %v1264
          %v1270 = vadd.f32 %v1254, %v1269
          %v1271 = vmul.f32 %v830, %v1264
          %v1272 = vadd.f32 %v1256, %v1271
          %v1273 = vmul.f32 %v833, %v1250
          %v1274 = vmul.f32 %v835, %v1252
          %v1275 = vadd.f32 %v1273, %v1274
          %v1276 = vmul.f32 %v838, %v1254
          %v1277 = vadd.f32 %v1275, %v1276
          %v1278 = vmul.f32 %v841, %v1256
          %v1279 = vadd.f32 %v1277, %v1278
          %v1280 = vtanh.pop %v1279
          %v1281 = vmul.f32 %v845, %v1280
          %v1282 = vadd.f32 %v1266, %v1281
          %v1283 = vmul.f32 %v848, %v1280
          %v1284 = vadd.f32 %v1268, %v1283
          %v1285 = vmul.f32 %v851, %v1280
          %v1286 = vadd.f32 %v1270, %v1285
          %v1287 = vmul.f32 %v854, %v1280
          %v1288 = vadd.f32 %v1272, %v1287
          %v1289 = vmul.f32 %v857, %v1250
          %v1290 = vmul.f32 %v859, %v1252
          %v1291 = vadd.f32 %v1289, %v1290
          %v1292 = vmul.f32 %v862, %v1254
          %v1293 = vadd.f32 %v1291, %v1292
          %v1294 = vmul.f32 %v865, %v1256
          %v1295 = vadd.f32 %v1293, %v1294
          %v1296 = vtanh.pop %v1295
          %v1297 = vmul.f32 %v869, %v1296
          %v1298 = vadd.f32 %v1282, %v1297
          %v1299 = vmul.f32 %v872, %v1296
          %v1300 = vadd.f32 %v1284, %v1299
          %v1301 = vmul.f32 %v875, %v1296
          %v1302 = vadd.f32 %v1286, %v1301
          %v1303 = vmul.f32 %v878, %v1296
          %v1304 = vadd.f32 %v1288, %v1303
          %v1305 = vmul.f32 %v881, %v1250
          %v1306 = vmul.f32 %v883, %v1252
          %v1307 = vadd.f32 %v1305, %v1306
          %v1308 = vmul.f32 %v886, %v1254
          %v1309 = vadd.f32 %v1307, %v1308
          %v1310 = vmul.f32 %v889, %v1256
          %v1311 = vadd.f32 %v1309, %v1310
          %v1312 = vtanh.pop %v1311
          %v1313 = vmul.f32 %v893, %v1312
          %v1314 = vadd.f32 %v1298, %v1313
          %v1315 = vmul.f32 %v896, %v1312
          %v1316 = vadd.f32 %v1300, %v1315
          %v1317 = vmul.f32 %v899, %v1312
          %v1318 = vadd.f32 %v1302, %v1317
          %v1319 = vmul.f32 %v902, %v1312
          %v1320 = vadd.f32 %v1304, %v1319
          %v1321 = vmul.f32 %v905, %v1250
          %v1322 = vmul.f32 %v907, %v1252
          %v1323 = vadd.f32 %v1321, %v1322
          %v1324 = vmul.f32 %v910, %v1254
          %v1325 = vadd.f32 %v1323, %v1324
          %v1326 = vmul.f32 %v913, %v1256
          %v1327 = vadd.f32 %v1325, %v1326
          %v1328 = vtanh.pop %v1327
          %v1329 = vmul.f32 %v917, %v1328
          %v1330 = vadd.f32 %v1314, %v1329
          %v1331 = vmul.f32 %v920, %v1328
          %v1332 = vadd.f32 %v1316, %v1331
          %v1333 = vmul.f32 %v923, %v1328
          %v1334 = vadd.f32 %v1318, %v1333
          %v1335 = vmul.f32 %v926, %v1328
          %v1336 = vadd.f32 %v1320, %v1335
          %v1337 = vmul.f32 %v929, %v1250
          %v1338 = vmul.f32 %v931, %v1252
          %v1339 = vadd.f32 %v1337, %v1338
          %v1340 = vmul.f32 %v934, %v1254
          %v1341 = vadd.f32 %v1339, %v1340
          %v1342 = vmul.f32 %v937, %v1256
          %v1343 = vadd.f32 %v1341, %v1342
          %v1344 = vtanh.pop %v1343
          %v1345 = vmul.f32 %v941, %v1344
          %v1346 = vadd.f32 %v1330, %v1345
          %v1347 = vmul.f32 %v944, %v1344
          %v1348 = vadd.f32 %v1332, %v1347
          %v1349 = vmul.f32 %v947, %v1344
          %v1350 = vadd.f32 %v1334, %v1349
          %v1351 = vmul.f32 %v950, %v1344
          %v1352 = vadd.f32 %v1336, %v1351
          %v1353 = vmul.f32 %v953, %v1250
          %v1354 = vmul.f32 %v955, %v1252
          %v1355 = vadd.f32 %v1353, %v1354
          %v1356 = vmul.f32 %v958, %v1254
          %v1357 = vadd.f32 %v1355, %v1356
          %v1358 = vmul.f32 %v961, %v1256
          %v1359 = vadd.f32 %v1357, %v1358
          %v1360 = vtanh.pop %v1359
          %v1361 = vmul.f32 %v965, %v1360
          %v1362 = vadd.f32 %v1346, %v1361
          %v1363 = vmul.f32 %v968, %v1360
          %v1364 = vadd.f32 %v1348, %v1363
          %v1365 = vmul.f32 %v971, %v1360
          %v1366 = vadd.f32 %v1350, %v1365
          %v1367 = vmul.f32 %v974, %v1360
          %v1368 = vadd.f32 %v1352, %v1367
          %v1369 = vmul.f32 %v977, %v1250
          %v1370 = vmul.f32 %v979, %v1252
          %v1371 = vadd.f32 %v1369, %v1370
          %v1372 = vmul.f32 %v982, %v1254
          %v1373 = vadd.f32 %v1371, %v1372
          %v1374 = vmul.f32 %v985, %v1256
          %v1375 = vadd.f32 %v1373, %v1374
          %v1376 = vtanh.pop %v1375
          %v1377 = vmul.f32 %v989, %v1376
          %v1378 = vadd.f32 %v1362, %v1377
          %v1379 = vmul.f32 %v992, %v1376
          %v1380 = vadd.f32 %v1364, %v1379
          %v1381 = vmul.f32 %v995, %v1376
          %v1382 = vadd.f32 %v1366, %v1381
          %v1383 = vmul.f32 %v998, %v1376
          %v1384 = vadd.f32 %v1368, %v1383
          %v1385 = vmul.f32 %v809, %v1378
          %v1386 = vmul.f32 %v811, %v1380
          %v1387 = vadd.f32 %v1385, %v1386
          %v1388 = vmul.f32 %v814, %v1382
          %v1389 = vadd.f32 %v1387, %v1388
          %v1390 = vmul.f32 %v817, %v1384
          %v1391 = vadd.f32 %v1389, %v1390
          %v1392 = vtanh.pop %v1391
          %v1393 = vmul.f32 %v821, %v1392
          %v1394 = vadd.f32 %v1378, %v1393
          %v1395 = vmul.f32 %v824, %v1392
          %v1396 = vadd.f32 %v1380, %v1395
          %v1397 = vmul.f32 %v827, %v1392
          %v1398 = vadd.f32 %v1382, %v1397
          %v1399 = vmul.f32 %v830, %v1392
          %v1400 = vadd.f32 %v1384, %v1399
          %v1401 = vmul.f32 %v833, %v1378
          %v1402 = vmul.f32 %v835, %v1380
          %v1403 = vadd.f32 %v1401, %v1402
          %v1404 = vmul.f32 %v838, %v1382
          %v1405 = vadd.f32 %v1403, %v1404
          %v1406 = vmul.f32 %v841, %v1384
          %v1407 = vadd.f32 %v1405, %v1406
          %v1408 = vtanh.pop %v1407
          %v1409 = vmul.f32 %v845, %v1408
          %v1410 = vadd.f32 %v1394, %v1409
          %v1411 = vmul.f32 %v848, %v1408
          %v1412 = vadd.f32 %v1396, %v1411
          %v1413 = vmul.f32 %v851, %v1408
          %v1414 = vadd.f32 %v1398, %v1413
          %v1415 = vmul.f32 %v854, %v1408
          %v1416 = vadd.f32 %v1400, %v1415
          %v1417 = vmul.f32 %v857, %v1378
          %v1418 = vmul.f32 %v859, %v1380
          %v1419 = vadd.f32 %v1417, %v1418
          %v1420 = vmul.f32 %v862, %v1382
          %v1421 = vadd.f32 %v1419, %v1420
          %v1422 = vmul.f32 %v865, %v1384
          %v1423 = vadd.f32 %v1421, %v1422
          %v1424 = vtanh.pop %v1423
          %v1425 = vmul.f32 %v869, %v1424
          %v1426 = vadd.f32 %v1410, %v1425
          %v1427 = vmul.f32 %v872, %v1424
          %v1428 = vadd.f32 %v1412, %v1427
          %v1429 = vmul.f32 %v875, %v1424
          %v1430 = vadd.f32 %v1414, %v1429
          %v1431 = vmul.f32 %v878, %v1424
          %v1432 = vadd.f32 %v1416, %v1431
          %v1433 = vmul.f32 %v881, %v1378
          %v1434 = vmul.f32 %v883, %v1380
          %v1435 = vadd.f32 %v1433, %v1434
          %v1436 = vmul.f32 %v886, %v1382
          %v1437 = vadd.f32 %v1435, %v1436
          %v1438 = vmul.f32 %v889, %v1384
          %v1439 = vadd.f32 %v1437, %v1438
          %v1440 = vtanh.pop %v1439
          %v1441 = vmul.f32 %v893, %v1440
          %v1442 = vadd.f32 %v1426, %v1441
          %v1443 = vmul.f32 %v896, %v1440
          %v1444 = vadd.f32 %v1428, %v1443
          %v1445 = vmul.f32 %v899, %v1440
          %v1446 = vadd.f32 %v1430, %v1445
          %v1447 = vmul.f32 %v902, %v1440
          %v1448 = vadd.f32 %v1432, %v1447
          %v1449 = vmul.f32 %v905, %v1378
          %v1450 = vmul.f32 %v907, %v1380
          %v1451 = vadd.f32 %v1449, %v1450
          %v1452 = vmul.f32 %v910, %v1382
          %v1453 = vadd.f32 %v1451, %v1452
          %v1454 = vmul.f32 %v913, %v1384
          %v1455 = vadd.f32 %v1453, %v1454
          %v1456 = vtanh.pop %v1455
          %v1457 = vmul.f32 %v917, %v1456
          %v1458 = vadd.f32 %v1442, %v1457
          %v1459 = vmul.f32 %v920, %v1456
          %v1460 = vadd.f32 %v1444, %v1459
          %v1461 = vmul.f32 %v923, %v1456
          %v1462 = vadd.f32 %v1446, %v1461
          %v1463 = vmul.f32 %v926, %v1456
          %v1464 = vadd.f32 %v1448, %v1463
          %v1465 = vmul.f32 %v929, %v1378
          %v1466 = vmul.f32 %v931, %v1380
          %v1467 = vadd.f32 %v1465, %v1466
          %v1468 = vmul.f32 %v934, %v1382
          %v1469 = vadd.f32 %v1467, %v1468
          %v1470 = vmul.f32 %v937, %v1384
          %v1471 = vadd.f32 %v1469, %v1470
          %v1472 = vtanh.pop %v1471
          %v1473 = vmul.f32 %v941, %v1472
          %v1474 = vadd.f32 %v1458, %v1473
          %v1475 = vmul.f32 %v944, %v1472
          %v1476 = vadd.f32 %v1460, %v1475
          %v1477 = vmul.f32 %v947, %v1472
          %v1478 = vadd.f32 %v1462, %v1477
          %v1479 = vmul.f32 %v950, %v1472
          %v1480 = vadd.f32 %v1464, %v1479
          %v1481 = vmul.f32 %v953, %v1378
          %v1482 = vmul.f32 %v955, %v1380
          %v1483 = vadd.f32 %v1481, %v1482
          %v1484 = vmul.f32 %v958, %v1382
          %v1485 = vadd.f32 %v1483, %v1484
          %v1486 = vmul.f32 %v961, %v1384
          %v1487 = vadd.f32 %v1485, %v1486
          %v1488 = vtanh.pop %v1487
          %v1489 = vmul.f32 %v965, %v1488
          %v1490 = vadd.f32 %v1474, %v1489
          %v1491 = vmul.f32 %v968, %v1488
          %v1492 = vadd.f32 %v1476, %v1491
          %v1493 = vmul.f32 %v971, %v1488
          %v1494 = vadd.f32 %v1478, %v1493
          %v1495 = vmul.f32 %v974, %v1488
          %v1496 = vadd.f32 %v1480, %v1495
          %v1497 = vmul.f32 %v977, %v1378
          %v1498 = vmul.f32 %v979, %v1380
          %v1499 = vadd.f32 %v1497, %v1498
          %v1500 = vmul.f32 %v982, %v1382
          %v1501 = vadd.f32 %v1499, %v1500
          %v1502 = vmul.f32 %v985, %v1384
          %v1503 = vadd.f32 %v1501, %v1502
          %v1504 = vtanh.pop %v1503
          %v1505 = vmul.f32 %v989, %v1504
          %v1506 = vadd.f32 %v1490, %v1505
          %v1507 = vmul.f32 %v992, %v1504
          %v1508 = vadd.f32 %v1492, %v1507
          %v1509 = vmul.f32 %v995, %v1504
          %v1510 = vadd.f32 %v1494, %v1509
          %v1511 = vmul.f32 %v998, %v1504
          %v1512 = vadd.f32 %v1496, %v1511
          %v1513 = vmul.f32 %v809, %v1506
          %v1514 = vmul.f32 %v811, %v1508
          %v1515 = vadd.f32 %v1513, %v1514
          %v1516 = vmul.f32 %v814, %v1510
          %v1517 = vadd.f32 %v1515, %v1516
          %v1518 = vmul.f32 %v817, %v1512
          %v1519 = vadd.f32 %v1517, %v1518
          %v1520 = vtanh.pop %v1519
          %v1521 = vmul.f32 %v821, %v1520
          %v1522 = vadd.f32 %v1506, %v1521
          %v1523 = vmul.f32 %v824, %v1520
          %v1524 = vadd.f32 %v1508, %v1523
          %v1525 = vmul.f32 %v827, %v1520
          %v1526 = vadd.f32 %v1510, %v1525
          %v1527 = vmul.f32 %v830, %v1520
          %v1528 = vadd.f32 %v1512, %v1527
          %v1529 = vmul.f32 %v833, %v1506
          %v1530 = vmul.f32 %v835, %v1508
          %v1531 = vadd.f32 %v1529, %v1530
          %v1532 = vmul.f32 %v838, %v1510
          %v1533 = vadd.f32 %v1531, %v1532
          %v1534 = vmul.f32 %v841, %v1512
          %v1535 = vadd.f32 %v1533, %v1534
          %v1536 = vtanh.pop %v1535
          %v1537 = vmul.f32 %v845, %v1536
          %v1538 = vadd.f32 %v1522, %v1537
          %v1539 = vmul.f32 %v848, %v1536
          %v1540 = vadd.f32 %v1524, %v1539
          %v1541 = vmul.f32 %v851, %v1536
          %v1542 = vadd.f32 %v1526, %v1541
          %v1543 = vmul.f32 %v854, %v1536
          %v1544 = vadd.f32 %v1528, %v1543
          %v1545 = vmul.f32 %v857, %v1506
          %v1546 = vmul.f32 %v859, %v1508
          %v1547 = vadd.f32 %v1545, %v1546
          %v1548 = vmul.f32 %v862, %v1510
          %v1549 = vadd.f32 %v1547, %v1548
          %v1550 = vmul.f32 %v865, %v1512
          %v1551 = vadd.f32 %v1549, %v1550
          %v1552 = vtanh.pop %v1551
          %v1553 = vmul.f32 %v869, %v1552
          %v1554 = vadd.f32 %v1538, %v1553
          %v1555 = vmul.f32 %v872, %v1552
          %v1556 = vadd.f32 %v1540, %v1555
          %v1557 = vmul.f32 %v875, %v1552
          %v1558 = vadd.f32 %v1542, %v1557
          %v1559 = vmul.f32 %v878, %v1552
          %v1560 = vadd.f32 %v1544, %v1559
          %v1561 = vmul.f32 %v881, %v1506
          %v1562 = vmul.f32 %v883, %v1508
          %v1563 = vadd.f32 %v1561, %v1562
          %v1564 = vmul.f32 %v886, %v1510
          %v1565 = vadd.f32 %v1563, %v1564
          %v1566 = vmul.f32 %v889, %v1512
          %v1567 = vadd.f32 %v1565, %v1566
          %v1568 = vtanh.pop %v1567
          %v1569 = vmul.f32 %v893, %v1568
          %v1570 = vadd.f32 %v1554, %v1569
          %v1571 = vmul.f32 %v896, %v1568
          %v1572 = vadd.f32 %v1556, %v1571
          %v1573 = vmul.f32 %v899, %v1568
          %v1574 = vadd.f32 %v1558, %v1573
          %v1575 = vmul.f32 %v902, %v1568
          %v1576 = vadd.f32 %v1560, %v1575
          %v1577 = vmul.f32 %v905, %v1506
          %v1578 = vmul.f32 %v907, %v1508
          %v1579 = vadd.f32 %v1577, %v1578
          %v1580 = vmul.f32 %v910, %v1510
          %v1581 = vadd.f32 %v1579, %v1580
          %v1582 = vmul.f32 %v913, %v1512
          %v1583 = vadd.f32 %v1581, %v1582
          %v1584 = vtanh.pop %v1583
          %v1585 = vmul.f32 %v917, %v1584
          %v1586 = vadd.f32 %v1570, %v1585
          %v1587 = vmul.f32 %v920, %v1584
          %v1588 = vadd.f32 %v1572, %v1587
          %v1589 = vmul.f32 %v923, %v1584
          %v1590 = vadd.f32 %v1574, %v1589
          %v1591 = vmul.f32 %v926, %v1584
          %v1592 = vadd.f32 %v1576, %v1591
          %v1593 = vmul.f32 %v929, %v1506
          %v1594 = vmul.f32 %v931, %v1508
          %v1595 = vadd.f32 %v1593, %v1594
          %v1596 = vmul.f32 %v934, %v1510
          %v1597 = vadd.f32 %v1595, %v1596
          %v1598 = vmul.f32 %v937, %v1512
          %v1599 = vadd.f32 %v1597, %v1598
          %v1600 = vtanh.pop %v1599
          %v1601 = vmul.f32 %v941, %v1600
          %v1602 = vadd.f32 %v1586, %v1601
          %v1603 = vmul.f32 %v944, %v1600
          %v1604 = vadd.f32 %v1588, %v1603
          %v1605 = vmul.f32 %v947, %v1600
          %v1606 = vadd.f32 %v1590, %v1605
          %v1607 = vmul.f32 %v950, %v1600
          %v1608 = vadd.f32 %v1592, %v1607
          %v1609 = vmul.f32 %v953, %v1506
          %v1610 = vmul.f32 %v955, %v1508
          %v1611 = vadd.f32 %v1609, %v1610
          %v1612 = vmul.f32 %v958, %v1510
          %v1613 = vadd.f32 %v1611, %v1612
          %v1614 = vmul.f32 %v961, %v1512
          %v1615 = vadd.f32 %v1613, %v1614
          %v1616 = vtanh.pop %v1615
          %v1617 = vmul.f32 %v965, %v1616
          %v1618 = vadd.f32 %v1602, %v1617
          %v1619 = vmul.f32 %v968, %v1616
          %v1620 = vadd.f32 %v1604, %v1619
          %v1621 = vmul.f32 %v971, %v1616
          %v1622 = vadd.f32 %v1606, %v1621
          %v1623 = vmul.f32 %v974, %v1616
          %v1624 = vadd.f32 %v1608, %v1623
          %v1625 = vmul.f32 %v977, %v1506
          %v1626 = vmul.f32 %v979, %v1508
          %v1627 = vadd.f32 %v1625, %v1626
          %v1628 = vmul.f32 %v982, %v1510
          %v1629 = vadd.f32 %v1627, %v1628
          %v1630 = vmul.f32 %v985, %v1512
          %v1631 = vadd.f32 %v1629, %v1630
          %v1632 = vtanh.pop %v1631
          %v1633 = vmul.f32 %v989, %v1632
          %v1634 = vadd.f32 %v1618, %v1633
          %v1635 = vmul.f32 %v992, %v1632
          %v1636 = vadd.f32 %v1620, %v1635
          %v1637 = vmul.f32 %v995, %v1632
          %v1638 = vadd.f32 %v1622, %v1637
          %v1639 = vmul.f32 %v998, %v1632
          %v1640 = vadd.f32 %v1624, %v1639
          %v1641 = vmul.f32 %v809, %v1634
          %v1642 = vmul.f32 %v811, %v1636
          %v1643 = vadd.f32 %v1641, %v1642
          %v1644 = vmul.f32 %v814, %v1638
          %v1645 = vadd.f32 %v1643, %v1644
          %v1646 = vmul.f32 %v817, %v1640
          %v1647 = vadd.f32 %v1645, %v1646
          %v1648 = vtanh.pop %v1647
          %v1649 = vmul.f32 %v821, %v1648
          %v1650 = vadd.f32 %v1634, %v1649
          %v1651 = vmul.f32 %v824, %v1648
          %v1652 = vadd.f32 %v1636, %v1651
          %v1653 = vmul.f32 %v827, %v1648
          %v1654 = vadd.f32 %v1638, %v1653
          %v1655 = vmul.f32 %v830, %v1648
          %v1656 = vadd.f32 %v1640, %v1655
          %v1657 = vmul.f32 %v833, %v1634
          %v1658 = vmul.f32 %v835, %v1636
          %v1659 = vadd.f32 %v1657, %v1658
          %v1660 = vmul.f32 %v838, %v1638
          %v1661 = vadd.f32 %v1659, %v1660
          %v1662 = vmul.f32 %v841, %v1640
          %v1663 = vadd.f32 %v1661, %v1662
          %v1664 = vtanh.pop %v1663
          %v1665 = vmul.f32 %v845, %v1664
          %v1666 = vadd.f32 %v1650, %v1665
          %v1667 = vmul.f32 %v848, %v1664
          %v1668 = vadd.f32 %v1652, %v1667
          %v1669 = vmul.f32 %v851, %v1664
          %v1670 = vadd.f32 %v1654, %v1669
          %v1671 = vmul.f32 %v854, %v1664
          %v1672 = vadd.f32 %v1656, %v1671
          %v1673 = vmul.f32 %v857, %v1634
          %v1674 = vmul.f32 %v859, %v1636
          %v1675 = vadd.f32 %v1673, %v1674
          %v1676 = vmul.f32 %v862, %v1638
          %v1677 = vadd.f32 %v1675, %v1676
          %v1678 = vmul.f32 %v865, %v1640
          %v1679 = vadd.f32 %v1677, %v1678
          %v1680 = vtanh.pop %v1679
          %v1681 = vmul.f32 %v869, %v1680
          %v1682 = vadd.f32 %v1666, %v1681
          %v1683 = vmul.f32 %v872, %v1680
          %v1684 = vadd.f32 %v1668, %v1683
          %v1685 = vmul.f32 %v875, %v1680
          %v1686 = vadd.f32 %v1670, %v1685
          %v1687 = vmul.f32 %v878, %v1680
          %v1688 = vadd.f32 %v1672, %v1687
          %v1689 = vmul.f32 %v881, %v1634
          %v1690 = vmul.f32 %v883, %v1636
          %v1691 = vadd.f32 %v1689, %v1690
          %v1692 = vmul.f32 %v886, %v1638
          %v1693 = vadd.f32 %v1691, %v1692
          %v1694 = vmul.f32 %v889, %v1640
          %v1695 = vadd.f32 %v1693, %v1694
          %v1696 = vtanh.pop %v1695
          %v1697 = vmul.f32 %v893, %v1696
          %v1698 = vadd.f32 %v1682, %v1697
          %v1699 = vmul.f32 %v896, %v1696
          %v1700 = vadd.f32 %v1684, %v1699
          %v1701 = vmul.f32 %v899, %v1696
          %v1702 = vadd.f32 %v1686, %v1701
          %v1703 = vmul.f32 %v902, %v1696
          %v1704 = vadd.f32 %v1688, %v1703
          %v1705 = vmul.f32 %v905, %v1634
          %v1706 = vmul.f32 %v907, %v1636
          %v1707 = vadd.f32 %v1705, %v1706
          %v1708 = vmul.f32 %v910, %v1638
          %v1709 = vadd.f32 %v1707, %v1708
          %v1710 = vmul.f32 %v913, %v1640
          %v1711 = vadd.f32 %v1709, %v1710
          %v1712 = vtanh.pop %v1711
          %v1713 = vmul.f32 %v917, %v1712
          %v1714 = vadd.f32 %v1698, %v1713
          %v1715 = vmul.f32 %v920, %v1712
          %v1716 = vadd.f32 %v1700, %v1715
          %v1717 = vmul.f32 %v923, %v1712
          %v1718 = vadd.f32 %v1702, %v1717
          %v1719 = vmul.f32 %v926, %v1712
          %v1720 = vadd.f32 %v1704, %v1719
          %v1721 = vmul.f32 %v929, %v1634
          %v1722 = vmul.f32 %v931, %v1636
          %v1723 = vadd.f32 %v1721, %v1722
          %v1724 = vmul.f32 %v934, %v1638
          %v1725 = vadd.f32 %v1723, %v1724
          %v1726 = vmul.f32 %v937, %v1640
          %v1727 = vadd.f32 %v1725, %v1726
          %v1728 = vtanh.pop %v1727
          %v1729 = vmul.f32 %v941, %v1728
          %v1730 = vadd.f32 %v1714, %v1729
          %v1731 = vmul.f32 %v944, %v1728
          %v1732 = vadd.f32 %v1716, %v1731
          %v1733 = vmul.f32 %v947, %v1728
          %v1734 = vadd.f32 %v1718, %v1733
          %v1735 = vmul.f32 %v950, %v1728
          %v1736 = vadd.f32 %v1720, %v1735
          %v1737 = vmul.f32 %v953, %v1634
          %v1738 = vmul.f32 %v955, %v1636
          %v1739 = vadd.f32 %v1737, %v1738
          %v1740 = vmul.f32 %v958, %v1638
          %v1741 = vadd.f32 %v1739, %v1740
          %v1742 = vmul.f32 %v961, %v1640
          %v1743 = vadd.f32 %v1741, %v1742
          %v1744 = vtanh.pop %v1743
          %v1745 = vmul.f32 %v965, %v1744
          %v1746 = vadd.f32 %v1730, %v1745
          %v1747 = vmul.f32 %v968, %v1744
          %v1748 = vadd.f32 %v1732, %v1747
          %v1749 = vmul.f32 %v971, %v1744
          %v1750 = vadd.f32 %v1734, %v1749
          %v1751 = vmul.f32 %v974, %v1744
          %v1752 = vadd.f32 %v1736, %v1751
          %v1753 = vmul.f32 %v977, %v1634
          %v1754 = vmul.f32 %v979, %v1636
          %v1755 = vadd.f32 %v1753, %v1754
          %v1756 = vmul.f32 %v982, %v1638
          %v1757 = vadd.f32 %v1755, %v1756
          %v1758 = vmul.f32 %v985, %v1640
          %v1759 = vadd.f32 %v1757, %v1758
          %v1760 = vtanh.pop %v1759
          %v1761 = vmul.f32 %v989, %v1760
          %v1762 = vadd.f32 %v1746, %v1761
          %v1763 = vmul.f32 %v992, %v1760
          %v1764 = vadd.f32 %v1748, %v1763
          %v1765 = vmul.f32 %v995, %v1760
          %v1766 = vadd.f32 %v1750, %v1765
          %v1767 = vmul.f32 %v998, %v1760
          %v1768 = vadd.f32 %v1752, %v1767
          %v1769 = vmul.f32 %v809, %v1762
          %v1770 = vmul.f32 %v811, %v1764
          %v1771 = vadd.f32 %v1769, %v1770
          %v1772 = vmul.f32 %v814, %v1766
          %v1773 = vadd.f32 %v1771, %v1772
          %v1774 = vmul.f32 %v817, %v1768
          %v1775 = vadd.f32 %v1773, %v1774
          %v1776 = vtanh.pop %v1775
          %v1777 = vmul.f32 %v821, %v1776
          %v1778 = vadd.f32 %v1762, %v1777
          %v1779 = vmul.f32 %v824, %v1776
          %v1780 = vadd.f32 %v1764, %v1779
          %v1781 = vmul.f32 %v827, %v1776
          %v1782 = vadd.f32 %v1766, %v1781
          %v1783 = vmul.f32 %v830, %v1776
          %v1784 = vadd.f32 %v1768, %v1783
          %v1785 = vmul.f32 %v833, %v1762
          %v1786 = vmul.f32 %v835, %v1764
          %v1787 = vadd.f32 %v1785, %v1786
          %v1788 = vmul.f32 %v838, %v1766
          %v1789 = vadd.f32 %v1787, %v1788
          %v1790 = vmul.f32 %v841, %v1768
          %v1791 = vadd.f32 %v1789, %v1790
          %v1792 = vtanh.pop %v1791
          %v1793 = vmul.f32 %v845, %v1792
          %v1794 = vadd.f32 %v1778, %v1793
          %v1795 = vmul.f32 %v848, %v1792
          %v1796 = vadd.f32 %v1780, %v1795
          %v1797 = vmul.f32 %v851, %v1792
          %v1798 = vadd.f32 %v1782, %v1797
          %v1799 = vmul.f32 %v854, %v1792
          %v1800 = vadd.f32 %v1784, %v1799
          %v1801 = vmul.f32 %v857, %v1762
          %v1802 = vmul.f32 %v859, %v1764
          %v1803 = vadd.f32 %v1801, %v1802
          %v1804 = vmul.f32 %v862, %v1766
          %v1805 = vadd.f32 %v1803, %v1804
          %v1806 = vmul.f32 %v865, %v1768
          %v1807 = vadd.f32 %v1805, %v1806
          %v1808 = vtanh.pop %v1807
          %v1809 = vmul.f32 %v869, %v1808
          %v1810 = vadd.f32 %v1794, %v1809
          %v1811 = vmul.f32 %v872, %v1808
          %v1812 = vadd.f32 %v1796, %v1811
          %v1813 = vmul.f32 %v875, %v1808
          %v1814 = vadd.f32 %v1798, %v1813
          %v1815 = vmul.f32 %v878, %v1808
          %v1816 = vadd.f32 %v1800, %v1815
          %v1817 = vmul.f32 %v881, %v1762
          %v1818 = vmul.f32 %v883, %v1764
          %v1819 = vadd.f32 %v1817, %v1818
          %v1820 = vmul.f32 %v886, %v1766
          %v1821 = vadd.f32 %v1819, %v1820
          %v1822 = vmul.f32 %v889, %v1768
          %v1823 = vadd.f32 %v1821, %v1822
          %v1824 = vtanh.pop %v1823
          %v1825 = vmul.f32 %v893, %v1824
          %v1826 = vadd.f32 %v1810, %v1825
          %v1827 = vmul.f32 %v896, %v1824
          %v1828 = vadd.f32 %v1812, %v1827
          %v1829 = vmul.f32 %v899, %v1824
          %v1830 = vadd.f32 %v1814, %v1829
          %v1831 = vmul.f32 %v902, %v1824
          %v1832 = vadd.f32 %v1816, %v1831
          %v1833 = vmul.f32 %v905, %v1762
          %v1834 = vmul.f32 %v907, %v1764
          %v1835 = vadd.f32 %v1833, %v1834
          %v1836 = vmul.f32 %v910, %v1766
          %v1837 = vadd.f32 %v1835, %v1836
          %v1838 = vmul.f32 %v913, %v1768
          %v1839 = vadd.f32 %v1837, %v1838
          %v1840 = vtanh.pop %v1839
          %v1841 = vmul.f32 %v917, %v1840
          %v1842 = vadd.f32 %v1826, %v1841
          %v1843 = vmul.f32 %v920, %v1840
          %v1844 = vadd.f32 %v1828, %v1843
          %v1845 = vmul.f32 %v923, %v1840
          %v1846 = vadd.f32 %v1830, %v1845
          %v1847 = vmul.f32 %v926, %v1840
          %v1848 = vadd.f32 %v1832, %v1847
          %v1849 = vmul.f32 %v929, %v1762
          %v1850 = vmul.f32 %v931, %v1764
          %v1851 = vadd.f32 %v1849, %v1850
          %v1852 = vmul.f32 %v934, %v1766
          %v1853 = vadd.f32 %v1851, %v1852
          %v1854 = vmul.f32 %v937, %v1768
          %v1855 = vadd.f32 %v1853, %v1854
          %v1856 = vtanh.pop %v1855
          %v1857 = vmul.f32 %v941, %v1856
          %v1858 = vadd.f32 %v1842, %v1857
          %v1859 = vmul.f32 %v944, %v1856
          %v1860 = vadd.f32 %v1844, %v1859
          %v1861 = vmul.f32 %v947, %v1856
          %v1862 = vadd.f32 %v1846, %v1861
          %v1863 = vmul.f32 %v950, %v1856
          %v1864 = vadd.f32 %v1848, %v1863
          %v1865 = vmul.f32 %v953, %v1762
          %v1866 = vmul.f32 %v955, %v1764
          %v1867 = vadd.f32 %v1865, %v1866
          %v1868 = vmul.f32 %v958, %v1766
          %v1869 = vadd.f32 %v1867, %v1868
          %v1870 = vmul.f32 %v961, %v1768
          %v1871 = vadd.f32 %v1869, %v1870
          %v1872 = vtanh.pop %v1871
          %v1873 = vmul.f32 %v965, %v1872
          %v1874 = vadd.f32 %v1858, %v1873
          %v1875 = vmul.f32 %v968, %v1872
          %v1876 = vadd.f32 %v1860, %v1875
          %v1877 = vmul.f32 %v971, %v1872
          %v1878 = vadd.f32 %v1862, %v1877
          %v1879 = vmul.f32 %v974, %v1872
          %v1880 = vadd.f32 %v1864, %v1879
          %v1881 = vmul.f32 %v977, %v1762
          %v1882 = vmul.f32 %v979, %v1764
          %v1883 = vadd.f32 %v1881, %v1882
          %v1884 = vmul.f32 %v982, %v1766
          %v1885 = vadd.f32 %v1883, %v1884
          %v1886 = vmul.f32 %v985, %v1768
          %v1887 = vadd.f32 %v1885, %v1886
          %v1888 = vtanh.pop %v1887
          %v1889 = vmul.f32 %v989, %v1888
          %v1890 = vadd.f32 %v1874, %v1889
          %v1891 = vmul.f32 %v992, %v1888
          %v1892 = vadd.f32 %v1876, %v1891
          %v1893 = vmul.f32 %v995, %v1888
          %v1894 = vadd.f32 %v1878, %v1893
          %v1895 = vmul.f32 %v998, %v1888
          %v1896 = vadd.f32 %v1880, %v1895
          %v1897 = vmul.f32 %v809, %v1890
          %v1898 = vmul.f32 %v811, %v1892
          %v1899 = vadd.f32 %v1897, %v1898
          %v1900 = vmul.f32 %v814, %v1894
          %v1901 = vadd.f32 %v1899, %v1900
          %v1902 = vmul.f32 %v817, %v1896
          %v1903 = vadd.f32 %v1901, %v1902
          %v1904 = vtanh.pop %v1903
          %v1905 = vmul.f32 %v821, %v1904
          %v1906 = vadd.f32 %v1890, %v1905
          %v1907 = vmul.f32 %v824, %v1904
          %v1908 = vadd.f32 %v1892, %v1907
          %v1909 = vmul.f32 %v827, %v1904
          %v1910 = vadd.f32 %v1894, %v1909
          %v1911 = vmul.f32 %v830, %v1904
          %v1912 = vadd.f32 %v1896, %v1911
          %v1913 = vmul.f32 %v833, %v1890
          %v1914 = vmul.f32 %v835, %v1892
          %v1915 = vadd.f32 %v1913, %v1914
          %v1916 = vmul.f32 %v838, %v1894
          %v1917 = vadd.f32 %v1915, %v1916
          %v1918 = vmul.f32 %v841, %v1896
          %v1919 = vadd.f32 %v1917, %v1918
          %v1920 = vtanh.pop %v1919
          %v1921 = vmul.f32 %v845, %v1920
          %v1922 = vadd.f32 %v1906, %v1921
          %v1923 = vmul.f32 %v848, %v1920
          %v1924 = vadd.f32 %v1908, %v1923
          %v1925 = vmul.f32 %v851, %v1920
          %v1926 = vadd.f32 %v1910, %v1925
          %v1927 = vmul.f32 %v854, %v1920
          %v1928 = vadd.f32 %v1912, %v1927
          %v1929 = vmul.f32 %v857, %v1890
          %v1930 = vmul.f32 %v859, %v1892
          %v1931 = vadd.f32 %v1929, %v1930
          %v1932 = vmul.f32 %v862, %v1894
          %v1933 = vadd.f32 %v1931, %v1932
          %v1934 = vmul.f32 %v865, %v1896
          %v1935 = vadd.f32 %v1933, %v1934
          %v1936 = vtanh.pop %v1935
          %v1937 = vmul.f32 %v869, %v1936
          %v1938 = vadd.f32 %v1922, %v1937
          %v1939 = vmul.f32 %v872, %v1936
          %v1940 = vadd.f32 %v1924, %v1939
          %v1941 = vmul.f32 %v875, %v1936
          %v1942 = vadd.f32 %v1926, %v1941
          %v1943 = vmul.f32 %v878, %v1936
          %v1944 = vadd.f32 %v1928, %v1943
          %v1945 = vmul.f32 %v881, %v1890
          %v1946 = vmul.f32 %v883, %v1892
          %v1947 = vadd.f32 %v1945, %v1946
          %v1948 = vmul.f32 %v886, %v1894
          %v1949 = vadd.f32 %v1947, %v1948
          %v1950 = vmul.f32 %v889, %v1896
          %v1951 = vadd.f32 %v1949, %v1950
          %v1952 = vtanh.pop %v1951
          %v1953 = vmul.f32 %v893, %v1952
          %v1954 = vadd.f32 %v1938, %v1953
          %v1955 = vmul.f32 %v896, %v1952
          %v1956 = vadd.f32 %v1940, %v1955
          %v1957 = vmul.f32 %v899, %v1952
          %v1958 = vadd.f32 %v1942, %v1957
          %v1959 = vmul.f32 %v902, %v1952
          %v1960 = vadd.f32 %v1944, %v1959
          %v1961 = vmul.f32 %v905, %v1890
          %v1962 = vmul.f32 %v907, %v1892
          %v1963 = vadd.f32 %v1961, %v1962
          %v1964 = vmul.f32 %v910, %v1894
          %v1965 = vadd.f32 %v1963, %v1964
          %v1966 = vmul.f32 %v913, %v1896
          %v1967 = vadd.f32 %v1965, %v1966
          %v1968 = vtanh.pop %v1967
          %v1969 = vmul.f32 %v917, %v1968
          %v1970 = vadd.f32 %v1954, %v1969
          %v1971 = vmul.f32 %v920, %v1968
          %v1972 = vadd.f32 %v1956, %v1971
          %v1973 = vmul.f32 %v923, %v1968
          %v1974 = vadd.f32 %v1958, %v1973
          %v1975 = vmul.f32 %v926, %v1968
          %v1976 = vadd.f32 %v1960, %v1975
          %v1977 = vmul.f32 %v929, %v1890
          %v1978 = vmul.f32 %v931, %v1892
          %v1979 = vadd.f32 %v1977, %v1978
          %v1980 = vmul.f32 %v934, %v1894
          %v1981 = vadd.f32 %v1979, %v1980
          %v1982 = vmul.f32 %v937, %v1896
          %v1983 = vadd.f32 %v1981, %v1982
          %v1984 = vtanh.pop %v1983
          %v1985 = vmul.f32 %v941, %v1984
          %v1986 = vadd.f32 %v1970, %v1985
          %v1987 = vmul.f32 %v944, %v1984
          %v1988 = vadd.f32 %v1972, %v1987
          %v1989 = vmul.f32 %v947, %v1984
          %v1990 = vadd.f32 %v1974, %v1989
          %v1991 = vmul.f32 %v950, %v1984
          %v1992 = vadd.f32 %v1976, %v1991
          %v1993 = vmul.f32 %v953, %v1890
          %v1994 = vmul.f32 %v955, %v1892
          %v1995 = vadd.f32 %v1993, %v1994
          %v1996 = vmul.f32 %v958, %v1894
          %v1997 = vadd.f32 %v1995, %v1996
          %v1998 = vmul.f32 %v961, %v1896
          %v1999 = vadd.f32 %v1997, %v1998
          %v2000 = vtanh.pop %v1999
          %v2001 = vmul.f32 %v965, %v2000
          %v2002 = vadd.f32 %v1986, %v2001
          %v2003 = vmul.f32 %v968, %v2000
          %v2004 = vadd.f32 %v1988, %v2003
          %v2005 = vmul.f32 %v971, %v2000
          %v2006 = vadd.f32 %v1990, %v2005
          %v2007 = vmul.f32 %v974, %v2000
          %v2008 = vadd.f32 %v1992, %v2007
          %v2009 = vmul.f32 %v977, %v1890
          %v2010 = vmul.f32 %v979, %v1892
          %v2011 = vadd.f32 %v2009, %v2010
          %v2012 = vmul.f32 %v982, %v1894
          %v2013 = vadd.f32 %v2011, %v2012
          %v2014 = vmul.f32 %v985, %v1896
          %v2015 = vadd.f32 %v2013, %v2014
          %v2016 = vtanh.pop %v2015
          %v2017 = vmul.f32 %v989, %v2016
          %v2018 = vadd.f32 %v2002, %v2017
          %v2019 = vmul.f32 %v992, %v2016
          %v2020 = vadd.f32 %v2004, %v2019
          %v2021 = vmul.f32 %v995, %v2016
          %v2022 = vadd.f32 %v2006, %v2021
          %v2023 = vmul.f32 %v998, %v2016
          %v2024 = vadd.f32 %v2008, %v2023
          %v2025 = vmul.f32 %v809, %v2018
          %v2026 = vmul.f32 %v811, %v2020
          %v2027 = vadd.f32 %v2025, %v2026
          %v2028 = vmul.f32 %v814, %v2022
          %v2029 = vadd.f32 %v2027, %v2028
          %v2030 = vmul.f32 %v817, %v2024
          %v2031 = vadd.f32 %v2029, %v2030
          %v2032 = vtanh.pop %v2031
          %v2033 = vmul.f32 %v821, %v2032
          %v2034 = vadd.f32 %v2018, %v2033
          %v2035 = vmul.f32 %v824, %v2032
          %v2036 = vadd.f32 %v2020, %v2035
          %v2037 = vmul.f32 %v827, %v2032
          %v2038 = vadd.f32 %v2022, %v2037
          %v2039 = vmul.f32 %v830, %v2032
          %v2040 = vadd.f32 %v2024, %v2039
          %v2041 = vmul.f32 %v833, %v2018
          %v2042 = vmul.f32 %v835, %v2020
          %v2043 = vadd.f32 %v2041, %v2042
          %v2044 = vmul.f32 %v838, %v2022
          %v2045 = vadd.f32 %v2043, %v2044
          %v2046 = vmul.f32 %v841, %v2024
          %v2047 = vadd.f32 %v2045, %v2046
          %v2048 = vtanh.pop %v2047
          %v2049 = vmul.f32 %v845, %v2048
          %v2050 = vadd.f32 %v2034, %v2049
          %v2051 = vmul.f32 %v848, %v2048
          %v2052 = vadd.f32 %v2036, %v2051
          %v2053 = vmul.f32 %v851, %v2048
          %v2054 = vadd.f32 %v2038, %v2053
          %v2055 = vmul.f32 %v854, %v2048
          %v2056 = vadd.f32 %v2040, %v2055
          %v2057 = vmul.f32 %v857, %v2018
          %v2058 = vmul.f32 %v859, %v2020
          %v2059 = vadd.f32 %v2057, %v2058
          %v2060 = vmul.f32 %v862, %v2022
          %v2061 = vadd.f32 %v2059, %v2060
          %v2062 = vmul.f32 %v865, %v2024
          %v2063 = vadd.f32 %v2061, %v2062
          %v2064 = vtanh.pop %v2063
          %v2065 = vmul.f32 %v869, %v2064
          %v2066 = vadd.f32 %v2050, %v2065
          %v2067 = vmul.f32 %v872, %v2064
          %v2068 = vadd.f32 %v2052, %v2067
          %v2069 = vmul.f32 %v875, %v2064
          %v2070 = vadd.f32 %v2054, %v2069
          %v2071 = vmul.f32 %v878, %v2064
          %v2072 = vadd.f32 %v2056, %v2071
          %v2073 = vmul.f32 %v881, %v2018
          %v2074 = vmul.f32 %v883, %v2020
          %v2075 = vadd.f32 %v2073, %v2074
          %v2076 = vmul.f32 %v886, %v2022
          %v2077 = vadd.f32 %v2075, %v2076
          %v2078 = vmul.f32 %v889, %v2024
          %v2079 = vadd.f32 %v2077, %v2078
          %v2080 = vtanh.pop %v2079
          %v2081 = vmul.f32 %v893, %v2080
          %v2082 = vadd.f32 %v2066, %v2081
          %v2083 = vmul.f32 %v896, %v2080
          %v2084 = vadd.f32 %v2068, %v2083
          %v2085 = vmul.f32 %v899, %v2080
          %v2086 = vadd.f32 %v2070, %v2085
          %v2087 = vmul.f32 %v902, %v2080
          %v2088 = vadd.f32 %v2072, %v2087
          %v2089 = vmul.f32 %v905, %v2018
          %v2090 = vmul.f32 %v907, %v2020
          %v2091 = vadd.f32 %v2089, %v2090
          %v2092 = vmul.f32 %v910, %v2022
          %v2093 = vadd.f32 %v2091, %v2092
          %v2094 = vmul.f32 %v913, %v2024
          %v2095 = vadd.f32 %v2093, %v2094
          %v2096 = vtanh.pop %v2095
          %v2097 = vmul.f32 %v917, %v2096
          %v2098 = vadd.f32 %v2082, %v2097
          %v2099 = vmul.f32 %v920, %v2096
          %v2100 = vadd.f32 %v2084, %v2099
          %v2101 = vmul.f32 %v923, %v2096
          %v2102 = vadd.f32 %v2086, %v2101
          %v2103 = vmul.f32 %v926, %v2096
          %v2104 = vadd.f32 %v2088, %v2103
          %v2105 = vmul.f32 %v929, %v2018
          %v2106 = vmul.f32 %v931, %v2020
          %v2107 = vadd.f32 %v2105, %v2106
          %v2108 = vmul.f32 %v934, %v2022
          %v2109 = vadd.f32 %v2107, %v2108
          %v2110 = vmul.f32 %v937, %v2024
          %v2111 = vadd.f32 %v2109, %v2110
          %v2112 = vtanh.pop %v2111
          %v2113 = vmul.f32 %v941, %v2112
          %v2114 = vadd.f32 %v2098, %v2113
          %v2115 = vmul.f32 %v944, %v2112
          %v2116 = vadd.f32 %v2100, %v2115
          %v2117 = vmul.f32 %v947, %v2112
          %v2118 = vadd.f32 %v2102, %v2117
          %v2119 = vmul.f32 %v950, %v2112
          %v2120 = vadd.f32 %v2104, %v2119
          %v2121 = vmul.f32 %v953, %v2018
          %v2122 = vmul.f32 %v955, %v2020
          %v2123 = vadd.f32 %v2121, %v2122
          %v2124 = vmul.f32 %v958, %v2022
          %v2125 = vadd.f32 %v2123, %v2124
          %v2126 = vmul.f32 %v961, %v2024
          %v2127 = vadd.f32 %v2125, %v2126
          %v2128 = vtanh.pop %v2127
          %v2129 = vmul.f32 %v965, %v2128
          %v2130 = vadd.f32 %v2114, %v2129
          %v2131 = vmul.f32 %v968, %v2128
          %v2132 = vadd.f32 %v2116, %v2131
          %v2133 = vmul.f32 %v971, %v2128
          %v2134 = vadd.f32 %v2118, %v2133
          %v2135 = vmul.f32 %v974, %v2128
          %v2136 = vadd.f32 %v2120, %v2135
          %v2137 = vmul.f32 %v977, %v2018
          %v2138 = vmul.f32 %v979, %v2020
          %v2139 = vadd.f32 %v2137, %v2138
          %v2140 = vmul.f32 %v982, %v2022
          %v2141 = vadd.f32 %v2139, %v2140
          %v2142 = vmul.f32 %v985, %v2024
          %v2143 = vadd.f32 %v2141, %v2142
          %v2144 = vtanh.pop %v2143
          %v2145 = vmul.f32 %v989, %v2144
          %v2146 = vadd.f32 %v2130, %v2145
          %v2147 = vmul.f32 %v992, %v2144
          %v2148 = vadd.f32 %v2132, %v2147
          %v2149 = vmul.f32 %v995, %v2144
          %v2150 = vadd.f32 %v2134, %v2149
          %v2151 = vmul.f32 %v998, %v2144
          %v2152 = vadd.f32 %v2136, %v2151
          %2153 = vst.msk [vmem:[%s798] sm:$0xff] %vm707, %v2146
          %2154 = vst.msk [vmem:[%s801] sm:$0xff] %vm707, %v2148
          %2155 = vst.msk [vmem:[%s804] sm:$0xff] %vm707, %v2150
          %2156 = vst.msk [vmem:[%s807] sm:$0xff] %vm707, %v2152
        $region65: #{tpu_custom_call.1} parent=39 // loop_footer
          %s796 = sadd.s32 1, %s792
        $region66: #{tpu_custom_call.1} parent=39 // loop_footer_branch
          %791 = sbr.rel target = $region62
        $region67: #{tpu_custom_call.1} parent=39 // loop_exit
          _
        %s2157 = sand.u32 %s160, 1
        %s2158 = scalar_lea.sflag [#allocation4], %s2157
        %s2159 = sand.u32 %s160, 1
        %s2160 = smul.addr %s2159, 128
        %s2161 = scalar_lea.vmem [#allocation12], %s2160
        // Predicated region
        $region68: #{tpu_custom_call.1} parent=39 // pred_check
          %p2162 = pneg %p170
        $region69: #{tpu_custom_call.1} parent=39 // pred_check_branch
          %2164 = sbr.rel (%p2162) target = $region71
        $region70: #{tpu_custom_call.1} parent=39 // pred_region
          %s2165 = smul.u32 4, %s28
          %s2167 = ssub.s32 2048, 2048
          %2168 = vsyncadd %s2158, %s2167
          %s2169 = smul.addr %s27, 16
          %s2170 = sadd.s32 %s2165, %s2169
          %s2171 = smul.addr %s2170, 128
          %s2172 = scalar_lea.hbm %s5, %s2171
          %s2173 = sshll.u32 %s2161, 4
          %s2174 = int_to_ptr.vmem [resolvable:$true] %s2173
          %2179 = dma.vmem_to_hbm [thread:$0]  %s2174, 2048, %s2172, %s2158, 128, 128, 8
        $region71: #{tpu_custom_call.1} parent=39 // pred_fallthru
          _
      $region40: #{tpu_custom_call.1} parent=5 // pred_fallthru
        _
      %p2180 = scmp.le.s32.totalorder 2, %s18
      // Predicated region
      $region72: #{tpu_custom_call.1} parent=5 // pred_check
        %p2181 = pneg %p2180
      $region73: #{tpu_custom_call.1} parent=5 // pred_check_branch
        %2183 = sbr.rel (%p2181) target = $region75
      $region74: #{tpu_custom_call.1} parent=5 // pred_region
        %s2184 = ssub.s32 %s18, 2
        // Predicated region
        $region76: #{tpu_custom_call.1} parent=74 // pred_check
          %p2185 = pneg %p176
        $region77: #{tpu_custom_call.1} parent=74 // pred_check_branch
          %2187 = sbr.rel (%p2185) target = $region79
        $region78: #{tpu_custom_call.1} parent=74 // pred_region
          %s2188 = sand.u32 %s161, 1
          %s2189 = scalar_lea.sflag [#allocation4], %s2188
          %s2190 = sand.u32 %s161, 1
          %s2191 = smul.addr %s2190, 128
          %s2192 = scalar_lea.vmem [#allocation12], %s2191
          %2193 = dma.done %s2189, 2048
        $region79: #{tpu_custom_call.1} parent=74 // pred_fallthru
          _
      $region75: #{tpu_custom_call.1} parent=5 // pred_fallthru
        _
    $region6: #{tpu_custom_call.1} parent=1 // loop_footer
      %s22 = sadd.s32 1, %s18
    $region7: #{tpu_custom_call.1} parent=1 // loop_footer_branch
      %17 = sbr.rel target = $region3
    $region8: #{tpu_custom_call.1} parent=1 // loop_exit
      _
    %2194 = vsyncpa [#allocation3], 1
    %s2195 = scalar_lea.sflag [#allocation3], 1
    %2196 = vsyncpa %s2195, 1
    %2197 = vsyncpa [#allocation10], 1
    %2198 = vsyncpa [#allocation4], 1
    %s2199 = scalar_lea.sflag [#allocation4], 1
    %2200 = vsyncpa %s2199, 1
    %2201 = vsyncpa [#allocation5], 1
    %s2202 = scalar_lea.sflag [#allocation5], 1
    %2203 = vsyncpa %s2202, 1
    %2204 = vsyncpa [#allocation7], 1

</llo_original>
